<compile_context>
chip_gen: v5e
topology: v5e:2x2
jax: 0.10.0
libtpu: 0.0.40
codegen_flags: <defaults>
</compile_context>

<pallas_src>
import functools

import jax
import jax.numpy as jnp
from jax import lax
from jax.experimental import pallas as pl
from jax.experimental.pallas import tpu as pltpu

_EPS = 1e-5


# ---------------------------------------------------------------------------
# Hardware / feature probing (cached; primed once outside jit in __main__)
# ---------------------------------------------------------------------------
@functools.cache
def _hw_config():
    cap = 0
    try:
        cap = int(getattr(pltpu.get_tpu_info(), "vmem_capacity_bytes", 0))
    except Exception:
        cap = 0
    if cap >= (128 << 20):
        # v5e / v6e: 128 MiB physical VMEM, single TensorCore.
        return dict(vmem_limit=100 << 20, max_rows=16, max_m=2048, min_steps=1)
    # v7x (64 MiB VMEM, 2 TensorCores) or unknown generation: conservative
    # VMEM budget, and make sure the parallel grid has enough steps to feed
    # both TensorCores.
    return dict(vmem_limit=48 << 20, max_rows=8, max_m=1024, min_steps=8)


@functools.cache
def _roll_supported():
    """Probe pltpu.roll on a sublane axis with a tiny pallas_call."""
    def k(x_ref, o_ref):
        o_ref[...] = pltpu.roll(x_ref[...], 3, axis=0)
    try:
        x = jnp.zeros((96, 128), jnp.float32)
        jax.block_until_ready(
            pl.pallas_call(
                k, out_shape=jax.ShapeDtypeStruct((96, 128), jnp.float32))(x))
        return True
    except Exception:
        return False


@functools.cache
def _buffered_supported():
    """Probe pl.BlockSpec(..., pipeline_mode=pl.Buffered(1))."""
    try:
        spec = pl.BlockSpec((8, 128), lambda i: (0, 0),
                            pipeline_mode=pl.Buffered(1))
    except Exception:
        return False

    def k(x_ref, o_ref):
        o_ref[...] = x_ref[...]
    try:
        x = jnp.zeros((8, 128), jnp.float32)
        jax.block_until_ready(
            pl.pallas_call(
                k,
                out_shape=jax.ShapeDtypeStruct((8, 128), jnp.float32),
                grid=(1,),
                in_specs=[spec],
                out_specs=pl.BlockSpec((8, 128), lambda i: (0, 0)),
            )(x))
        return True
    except Exception:
        return False


def _const_spec(shape, index_map):
    """BlockSpec for grid-constant data (weights/bias): single-buffered."""
    if _buffered_supported():
        return pl.BlockSpec(shape, index_map, pipeline_mode=pl.Buffered(1))
    return pl.BlockSpec(shape, index_map)


def _pick_rows(n, h, w, *, max_rows=8, max_m=1024, min_steps=1):
    """Largest divisor of h that is <= max_rows and keeps th*w <= max_m, then
    shrunk (if possible) until the (n, h//th) grid has >= min_steps steps."""
    th = max(1, min(h, max_rows, max(1, max_m // max(w, 1))))
    while h % th:
        th -= 1
    while th > 1 and n * (h // th) < min_steps:
        th -= 1
        while h % th:
            th -= 1
    return th


def _roll_rows(x, shift, use_pltpu_roll):
    """result[i] = x[(i - shift) mod M] along axis 0 (static shift)."""
    m = x.shape[0]
    shift = shift % m
    if shift == 0:
        return x
    if use_pltpu_roll:
        return pltpu.roll(x, shift, axis=0)
    return jnp.concatenate([x[m - shift:], x[:m - shift]], axis=0)


# ---------------------------------------------------------------------------
# ConvTranspose2d(k=2, s=2) — one matmul per (dy, dx) parity, in-kernel 2x2
# pixel interleave, output written as lane-dense NHWC.
# ---------------------------------------------------------------------------
def _upsample_kernel(x_ref, w_ref, b_ref, o_ref, *, th, w, cout):
    # x_ref: (1, th, w, cin) bf16   w_ref: (4, cin, cout) bf16  (index dy*2+dx)
    # b_ref: (1, cout) f32          o_ref: (1, 2*th, 2*w, cout) bf16
    cin = x_ref.shape[3]
    x2 = x_ref[0].reshape(th * w, cin)
    bias = b_ref[...]
    rows = []
    for dy in range(2):
        cols = []
        for dx in range(2):
            r = jnp.dot(x2, w_ref[dy * 2 + dx],
                        preferred_element_type=jnp.float32) + bias
            cols.append(r.reshape(th, w, cout))
        # interleave the two dx results along the width axis
        rows.append(jnp.stack(cols, axis=2).reshape(th, 2 * w, cout))
    # interleave the two dy results along the height axis
    out = jnp.stack(rows, axis=1).reshape(2 * th, 2 * w, cout)
    o_ref[0] = out.astype(o_ref.dtype)


def conv_transpose_2x2(x, w_packed, b_packed):
    """x: (N, H, W, Cin) bf16; w_packed: (4, Cin, Cout) bf16; b: (1, Cout) f32."""
    n, h, w, cin = x.shape
    cout = w_packed.shape[2]
    cfg = _hw_config()
    th = _pick_rows(n, h, w, max_rows=cfg["max_rows"],
                    max_m=max(cfg["max_m"] // 4, 1),
                    min_steps=cfg["min_steps"])
    kernel = functools.partial(_upsample_kernel, th=th, w=w, cout=cout)
    return pl.pallas_call(
        kernel,
        out_shape=jax.ShapeDtypeStruct((n, 2 * h, 2 * w, cout), jnp.bfloat16),
        grid_spec=pltpu.PrefetchScalarGridSpec(
            num_scalar_prefetch=0,
            grid=(n, h // th),
            in_specs=[
                pl.BlockSpec((1, th, w, cin), lambda ni, hb: (ni, hb, 0, 0)),
                _const_spec((4, cin, cout), lambda ni, hb: (0, 0, 0)),
                _const_spec((1, cout), lambda ni, hb: (0, 0)),
            ],
            out_specs=pl.BlockSpec((1, 2 * th, 2 * w, cout),
                                   lambda ni, hb: (ni, hb, 0, 0)),
        ),
        compiler_params=pltpu.CompilerParams(
            dimension_semantics=("parallel", "parallel"),
            vmem_limit_bytes=cfg["vmem_limit"]),
    )(x, w_packed, b_packed)


# ---------------------------------------------------------------------------
# Conv2d 3x3 'same' (+ folded BN) + ReLU, multiple channel-concat sources
# fused.  Halo handled in-kernel: 3 specs/source (top row, body, bottom row),
# horizontal halo via flat roll + edge-column masking.  Every tap is a pure
# MXU matmul; the result is sliced/reshaped once in the epilogue.
# ---------------------------------------------------------------------------
def _conv3x3_kernel(*refs, ns, th, w, relu, cblk, use_roll):
    src_refs = refs[:3 * ns]                 # (top, body, bot) per source
    w_refs = refs[3 * ns:4 * ns]             # (9, Cs, Cout) per source
    b_ref = refs[4 * ns]                     # (1, Cout)
    o_ref = refs[4 * ns + 1]                 # (1, th, w, Cout)
    cout = o_ref.shape[-1]
    hb = pl.program_id(1)
    last = pl.num_programs(1) - 1
    mb = (th + 2) * w                        # flattened band length
    mo = th * w                              # flattened output length

    # Width-position masks over the flattened band (built once, reused).
    col = lax.broadcasted_iota(jnp.int32, (th + 2, w, 1), 1).reshape(mb, 1)
    not_last_col = col != (w - 1)            # lhs mask for kx == 0
    not_first_col = col != 0                 # lhs mask for kx == 2

    # Assemble one flattened (mb, Cs) halo band per source + kx-masked copies.
    bands = []
    for s in range(ns):
        top_ref, body_ref, bot_ref = src_refs[3 * s:3 * s + 3]
        cs = body_ref.shape[-1]
        top = top_ref[0, 0]                                  # (w, cs)
        bot = bot_ref[0, 0]
        top = top * (hb != 0).astype(top.dtype)              # zero at image top
        bot = bot * (hb != last).astype(bot.dtype)           # zero at image bot
        band = jnp.concatenate(
            [top, body_ref[0].reshape(th * w, cs), bot], axis=0)   # (mb, cs)
        bands.append((jnp.where(not_last_col, band, 0),      # lhs for kx = 0
                      band,                                   # lhs for kx = 1
                      jnp.where(not_first_col, band, 0)))     # lhs for kx = 2

    bias = b_ref[...]                                         # (1, cout)
    for c0 in range(0, cout, cblk):
        cc = min(cblk, cout - c0)
        acc = jnp.zeros((mb, cc), jnp.float32)
        for s in range(ns):
            w_ref = w_refs[s]
            for ky in range(3):
                for kx in range(3):
                    p = jnp.dot(bands[s][kx],
                                w_ref[ky * 3 + kx, :, c0:c0 + cc],
                                preferred_element_type=jnp.float32)
                    off = ky * w + kx - 1      # flat band offset of this tap
                    acc = acc + _roll_rows(p, -off, use_roll)
        out = acc[:mo] + bias[:, c0:c0 + cc]
        if relu:
            out = jnp.maximum(out, 0.0)
        out = out.reshape(th, w, cc).astype(o_ref.dtype)
        if cc == cout:
            o_ref[0] = out
        else:
            o_ref[0, :, :, c0:c0 + cc] = out


def conv3x3_bn_relu(sources, weights, bias, *, relu=True):
    """sources: list of un-padded NHWC bf16 (N, H, W, Cs);
    weights: list of (9, Cs, Cout) bf16 (BN pre-folded); bias: (1, Cout) f32."""
    n, h, w, _ = sources[0].shape
    cout = weights[0].shape[-1]
    cfg = _hw_config()
    th = _pick_rows(n, h, w, max_rows=cfg["max_rows"], max_m=cfg["max_m"],
                    min_steps=cfg["min_steps"])
    ns = len(sources)

    in_specs, args = [], []
    for src in sources:
        cs = src.shape[-1]
        # Top halo row (clamped; zero-masked in-kernel on the first block).
        in_specs.append(pl.BlockSpec(
            (1, 1, w, cs),
            lambda ni, hb: (ni, jnp.maximum(hb * th - 1, 0), 0, 0)))
        # Body rows.
        in_specs.append(pl.BlockSpec((1, th, w, cs),
                                     lambda ni, hb: (ni, hb, 0, 0)))
        # Bottom halo row (clamped; zero-masked in-kernel on the last block).
        in_specs.append(pl.BlockSpec(
            (1, 1, w, cs),
            lambda ni, hb: (ni, jnp.minimum(hb * th + th, h - 1), 0, 0)))
        args += [src, src, src]
    for wgt in weights:
        in_specs.append(_const_spec(wgt.shape, lambda ni, hb: (0, 0, 0)))
        args.append(wgt)
    in_specs.append(_const_spec((1, cout), lambda ni, hb: (0, 0)))
    args.append(bias)

    kernel = functools.partial(
        _conv3x3_kernel, ns=ns, th=th, w=w, relu=relu,
        cblk=min(cout, 256), use_roll=_roll_supported())
    return pl.pallas_call(
        kernel,
        out_shape=jax.ShapeDtypeStruct((n, h, w, cout), jnp.bfloat16),
        grid_spec=pltpu.PrefetchScalarGridSpec(
            num_scalar_prefetch=0,
            grid=(n, h // th),
            in_specs=in_specs,
            out_specs=pl.BlockSpec((1, th, w, cout),
                                   lambda ni, hb: (ni, hb, 0, 0)),
        ),
        compiler_params=pltpu.CompilerParams(
            dimension_semantics=("parallel", "parallel"),
            vmem_limit_bytes=cfg["vmem_limit"]),
    )(*args)


# ---------------------------------------------------------------------------
# One-time parameter packing (BN fold, layout, bf16 cast)
# ---------------------------------------------------------------------------
def _fold_bn(w_oikk, b, gamma, beta, mean, var):
    scale = gamma / jnp.sqrt(var + _EPS)
    return w_oikk * scale[:, None, None, None], (b - mean) * scale + beta


def _pack_conv_w(w_oikk):
    cout, cs = w_oikk.shape[0], w_oikk.shape[1]
    # (Cout, Cs, 3, 3) -> (9, Cs, Cout), tap-major (ky*3 + kx)
    return (jnp.transpose(w_oikk, (2, 3, 1, 0))
            .reshape(9, cs, cout).astype(jnp.bfloat16))


def pack_decoder_params(params):
    cout = params["up_w"].shape[1]
    cin = params["up_w"].shape[0]
    # ConvTranspose weight (Cin, Cout, 2, 2) -> (dy*2+dx, Cin, Cout)
    up_w = (jnp.transpose(params["up_w"], (2, 3, 0, 1))
            .reshape(4, cin, cout).astype(jnp.bfloat16))
    up_b = params["up_b"].reshape(1, cout).astype(jnp.float32)

    w1, b1 = _fold_bn(params["conv1_w"], params["conv1_b"],
                      params["bn1_gamma"], params["bn1_beta"],
                      params["bn1_mean"], params["bn1_var"])
    w2, b2 = _fold_bn(params["conv2_w"], params["conv2_b"],
                      params["bn2_gamma"], params["bn2_beta"],
                      params["bn2_mean"], params["bn2_var"])
    return {
        "up_w": up_w, "up_b": up_b,
        "w1y": _pack_conv_w(w1[:, :cout]),     # taps over upsampled channels
        "w1s": _pack_conv_w(w1[:, cout:]),     # taps over skip channels
        "b1": b1.reshape(1, cout).astype(jnp.float32),
        "w2": _pack_conv_w(w2),
        "b2": b2.reshape(1, cout).astype(jnp.float32),
    }


# ---------------------------------------------------------------------------
# DecoderBlock forward
# ---------------------------------------------------------------------------
def decoder_block_forward(packed, x_nhwc, skip_nhwc):
    """NHWC bf16 in / NHWC bf16 out — activations stay NHWC bf16 throughout."""
    y = conv_transpose_2x2(x_nhwc, packed["up_w"], packed["up_b"])  # (N,2H,2W,Co)
    # Channel concat fused into conv1 (two sources, two weight slabs); the
    # 1-px halo of both convs is handled in-kernel (no host-side padding).
    h1 = conv3x3_bn_relu([y, skip_nhwc],
                         [packed["w1y"], packed["w1s"]], packed["b1"])
    h2 = conv3x3_bn_relu([h1], [packed["w2"]], packed["b2"])
    return h2


def decoder_block_forward_nchw(packed, x_nchw, skip_nchw):
    """NCHW f32 adapter for parity with the PyTorch module / reference."""
    x = jnp.transpose(x_nchw, (0, 2, 3, 1)).astype(jnp.bfloat16)
    skip = jnp.transpose(skip_nchw, (0, 2, 3, 1)).astype(jnp.bfloat16)
    out = decoder_block_forward(packed, x, skip)
    return jnp.transpose(out.astype(jnp.float32), (0, 3, 1, 2))


# ---------------------------------------------------------------------------
# Pure-JAX f32 reference (independent path)
# ---------------------------------------------------------------------------
def decoder_block_reference(params, x_nchw, skip_nchw):
    x = jnp.transpose(x_nchw, (0, 2, 3, 1))
    skip = jnp.transpose(skip_nchw, (0, 2, 3, 1))
    n, h, w, cin = x.shape
    cout = params["up_w"].shape[1]

    y = jnp.einsum("nhwc,coyx->nhywxo", x, params["up_w"])
    y = y.reshape(n, 2 * h, 2 * w, cout) + params["up_b"]
    cat = jnp.concatenate([y, skip], axis=-1)

    def conv_bn_relu(xin, w_oikk, b, gamma, beta, mean, var):
        w_hwio = jnp.transpose(w_oikk, (2, 3, 1, 0))
        z = lax.conv_general_dilated(
            xin, w_hwio, (1, 1), "SAME",
            dimension_numbers=("NHWC", "HWIO", "NHWC")) + b
        z = (z - mean) / jnp.sqrt(var + _EPS) * gamma + beta
        return jnp.maximum(z, 0.0)

    h1 = conv_bn_relu(cat, params["conv1_w"], params["conv1_b"],
                      params["bn1_gamma"], params["bn1_beta"],
                      params["bn1_mean"], params["bn1_var"])
    h2 = conv_bn_relu(h1, params["conv2_w"], params["conv2_b"],
                      params["bn2_gamma"], params["bn2_beta"],
                      params["bn2_mean"], params["bn2_var"])
    return jnp.transpose(h2, (0, 3, 1, 2))


# ---------------------------------------------------------------------------
def make_params(key, in_channels, out_channels):
    ks = jax.random.split(key, 16)
    f32 = jnp.float32

    def rnd(k, shape, s=0.1):
        return s * jax.random.normal(k, shape, f32)

    c2 = out_channels * 2
    return {
        # ConvTranspose2d(in, out, k=2, s=2): weight (Cin, Cout, 2, 2)
        "up_w": rnd(ks[0], (in_channels, out_channels, 2, 2)),
        "up_b": rnd(ks[1], (out_channels,)),
        # ConvBlock.conv1: (Cout, 2*Cout, 3, 3)
        "conv1_w": rnd(ks[2], (out_channels, c2, 3, 3)),
        "conv1_b": rnd(ks[3], (out_channels,)),
        "bn1_gamma": 1.0 + rnd(ks[4], (out_channels,)),
        "bn1_beta": rnd(ks[5], (out_channels,)),
        "bn1_mean": rnd(ks[6], (out_channels,)),
        "bn1_var": 0.5 + jnp.abs(rnd(ks[7], (out_channels,), 0.2)),
        # ConvBlock.conv2: (Cout, Cout, 3, 3)
        "conv2_w": rnd(ks[8], (out_channels, out_channels, 3, 3)),
        "conv2_b": rnd(ks[9], (out_channels,)),
        "bn2_gamma": 1.0 + rnd(ks[10], (out_channels,)),
        "bn2_beta": rnd(ks[11], (out_channels,)),
        "bn2_mean": rnd(ks[12], (out_channels,)),
        "bn2_var": 0.5 + jnp.abs(rnd(ks[13], (out_channels,), 0.2)),
    }


if __name__ == "__main__":
    key = jax.random.PRNGKey(0)
    kp, kx, ks = jax.random.split(key, 3)

    in_channels, out_channels = 8, 4
    N, H, W = 2, 8, 8                        # x is the low-res decoder input
    params = make_params(kp, in_channels, out_channels)
    packed = pack_decoder_params(params)     # one-time pack (BN fold, bf16)

    x = jax.random.normal(kx, (N, in_channels, H, W), jnp.float32)       # NCHW
    skip = jax.random.normal(ks, (N, out_channels, 2 * H, 2 * W), jnp.float32)

    # Prime the hardware/feature probes outside of jit tracing.
    _hw_config()
    _roll_supported()
    _buffered_supported()

    fwd = jax.jit(decoder_block_forward_nchw)
    out = jax.block_until_ready(fwd(packed, x, skip))
    ref = jax.block_until_ready(decoder_block_reference(params, x, skip))

    assert out.shape == (N, out_channels, 2 * H, 2 * W), out.shape
    err = float(jnp.max(jnp.abs(out - ref)))
    assert jnp.allclose(out, ref, atol=5e-2, rtol=5e-2), f"max abs err = {err}"
    print("KERNEL_OK")
</pallas_src>

<mosaic_0001>
module attributes {stable_mosaic.version = 11 : i64} {
  func.func @k(%arg0: memref<96x128xf32, #tpu.memory_space<vmem>>, %arg1: memref<96x128xf32, #tpu.memory_space<vmem>>) attributes {dimension_semantics = [], scalar_prefetch = 0 : i64, scratch_operands = 0 : i64, tpu.core_type = #tpu.core_type<tc>} {
    %c0 = arith.constant 0 : index
    %c0_0 = arith.constant 0 : index
    %0 = vector.load %arg0[%c0, %c0_0] : memref<96x128xf32, #tpu.memory_space<vmem>>, vector<96x128xf32>
    %c3_i32 = arith.constant 3 : i32
    %1 = tpu.dynamic_rotate %0 by %c3_i32 dim 0 : vector<96x128xf32>, i32 -> vector<96x128xf32>
    %c0_1 = arith.constant 0 : index
    %c0_2 = arith.constant 0 : index
    %2 = vector.load %arg1[%c0_1, %c0_2] : memref<96x128xf32, #tpu.memory_space<vmem>>, vector<96x128xf32>
    tpu.vector_store %arg1[%c0_1, %c0_2], %1 {strides = array<i32>} : memref<96x128xf32, #tpu.memory_space<vmem>>, vector<96x128xf32>,
    return
  }
}

module attributes {stable_mosaic.version = 11 : i64} {
  func.func @k(%arg0: i32, %arg1: memref<8x128xf32, #tpu.memory_space<vmem>>, %arg2: memref<8x128xf32, #tpu.memory_space<vmem>>) attributes {dimension_semantics = [#tpu.dimension_semantics<arbitrary>], iteration_bounds = array<i64: 1>, scalar_prefetch = 0 : i64, scratch_operands = 0 : i64, tpu.core_type = #tpu.core_type<tc>, window_params = [{pipeline_mode = #tpu.pipeline_mode<synchronous>, transform_indices = @transform_0, window_bounds = array<i64: 8, 128>}, {pipeline_mode = #tpu.pipeline_mode<synchronous>, transform_indices = @transform_1, window_bounds = array<i64: 8, 128>}]} {
    %c0 = arith.constant 0 : index
    %c0_0 = arith.constant 0 : index
    %0 = vector.load %arg1[%c0, %c0_0] : memref<8x128xf32, #tpu.memory_space<vmem>>, vector<8x128xf32>
    %c0_1 = arith.constant 0 : index
    %c0_2 = arith.constant 0 : index
    %1 = vector.load %arg2[%c0_1, %c0_2] : memref<8x128xf32, #tpu.memory_space<vmem>>, vector<8x128xf32>
    tpu.vector_store %arg2[%c0_1, %c0_2], %0 {strides = array<i32>} : memref<8x128xf32, #tpu.memory_space<vmem>>, vector<8x128xf32>,
    return
  }
  func.func @transform_0(%arg0: i32) -> (i32, i32) {
    %c0_i32 = arith.constant 0 : i32
    %c0_i32_0 = arith.constant 0 : i32
    %c0_i32_1 = arith.constant 0 : i32
    return %c0_i32, %c0_i32_0 : i32, i32
  }
  func.func @transform_1(%arg0: i32) -> (i32, i32) {
    %c0_i32 = arith.constant 0 : i32
    %c0_i32_0 = arith.constant 0 : i32
    %c0_i32_1 = arith.constant 0 : i32
    return %c0_i32, %c0_i32_0 : i32, i32
  }
}

module attributes {stable_mosaic.version = 11 : i64} {
  func.func @_upsample_kernel(%arg0: i32, %arg1: i32, %arg2: memref<1x2x8x8xbf16, #tpu.memory_space<vmem>>, %arg3: memref<4x8x4xbf16, #tpu.memory_space<vmem>>, %arg4: memref<1x4xf32, #tpu.memory_space<vmem>>, %arg5: memref<1x4x16x4xbf16, #tpu.memory_space<vmem>>) attributes {dimension_semantics = [#tpu.dimension_semantics<parallel>, #tpu.dimension_semantics<parallel>], iteration_bounds = array<i64: 2, 4>, scalar_prefetch = 0 : i64, scratch_operands = 0 : i64, tpu.core_type = #tpu.core_type<tc>, window_params = [{transform_indices = @transform_0, window_bounds = array<i64: 1, 2, 8, 8>}, {pipeline_mode = #tpu.pipeline_mode<synchronous>, transform_indices = @transform_1, window_bounds = array<i64: 4, 8, 4>}, {pipeline_mode = #tpu.pipeline_mode<synchronous>, transform_indices = @transform_2, window_bounds = array<i64: 1, 4>}, {transform_indices = @transform_3, window_bounds = array<i64: 1, 4, 16, 4>}]} {
    %c0 = arith.constant 0 : index
    %c0_0 = arith.constant 0 : index
    %c0_1 = arith.constant 0 : index
    %c0_2 = arith.constant 0 : index
    %0 = vector.load %arg2[%c0, %c0_0, %c0_1, %c0_2] : memref<1x2x8x8xbf16, #tpu.memory_space<vmem>>, vector<1x2x8x8xbf16>
    %1 = vector.shape_cast %0 : vector<1x2x8x8xbf16> to vector<2x8x8xbf16>
    %2 = vector.shape_cast %1 : vector<2x8x8xbf16> to vector<16x8xbf16>
    %c0_3 = arith.constant 0 : index
    %c0_4 = arith.constant 0 : index
    %3 = vector.load %arg4[%c0_3, %c0_4] : memref<1x4xf32, #tpu.memory_space<vmem>>, vector<1x4xf32>
    %c0_5 = arith.constant 0 : index
    %c0_6 = arith.constant 0 : index
    %c0_7 = arith.constant 0 : index
    %4 = vector.load %arg3[%c0_5, %c0_6, %c0_7] : memref<4x8x4xbf16, #tpu.memory_space<vmem>>, vector<1x8x4xbf16>
    %5 = vector.shape_cast %4 : vector<1x8x4xbf16> to vector<8x4xbf16>
    %cst = arith.constant dense<0.000000e+00> : vector<16x4xf32>
    %6 = tpu.matmul %2, %5, %cst {dimension_numbers = #tpu.dot_dimension_numbers<[1], [0], [0], [1], [0, 0, 1, 1], [], []>} : vector<16x8xbf16>, vector<8x4xbf16>, vector<16x4xf32> -> vector<16x4xf32>
    %7 = vector.broadcast %3 : vector<1x4xf32> to vector<16x4xf32>
    %8 = arith.addf %6, %7 : vector<16x4xf32>
    %9 = vector.shape_cast %8 : vector<16x4xf32> to vector<2x8x4xf32>
    %c1 = arith.constant 1 : index
    %c0_8 = arith.constant 0 : index
    %c0_9 = arith.constant 0 : index
    %10 = vector.load %arg3[%c1, %c0_8, %c0_9] : memref<4x8x4xbf16, #tpu.memory_space<vmem>>, vector<1x8x4xbf16>
    %11 = vector.shape_cast %10 : vector<1x8x4xbf16> to vector<8x4xbf16>
    %cst_10 = arith.constant dense<0.000000e+00> : vector<16x4xf32>
    %12 = tpu.matmul %2, %11, %cst_10 {dimension_numbers = #tpu.dot_dimension_numbers<[1], [0], [0], [1], [0, 0, 1, 1], [], []>} : vector<16x8xbf16>, vector<8x4xbf16>, vector<16x4xf32> -> vector<16x4xf32>
    %13 = vector.broadcast %3 : vector<1x4xf32> to vector<16x4xf32>
    %14 = arith.addf %12, %13 : vector<16x4xf32>
    %15 = vector.shape_cast %14 : vector<16x4xf32> to vector<2x8x4xf32>
    %16 = vector.shape_cast %9 : vector<2x8x4xf32> to vector<2x8x1x4xf32>
    %17 = vector.shape_cast %15 : vector<2x8x4xf32> to vector<2x8x1x4xf32>
    %18 = tpu.concatenate %16, %17 in 2 : vector<2x8x1x4xf32>, vector<2x8x1x4xf32> -> vector<2x8x2x4xf32>
    %19 = vector.shape_cast %18 : vector<2x8x2x4xf32> to vector<2x16x4xf32>
    %c2 = arith.constant 2 : index
    %c0_11 = arith.constant 0 : index
    %c0_12 = arith.constant 0 : index
    %20 = vector.load %arg3[%c2, %c0_11, %c0_12] : memref<4x8x4xbf16, #tpu.memory_space<vmem>>, vector<1x8x4xbf16>
    %21 = vector.shape_cast %20 : vector<1x8x4xbf16> to vector<8x4xbf16>
    %cst_13 = arith.constant dense<0.000000e+00> : vector<16x4xf32>
    %22 = tpu.matmul %2, %21, %cst_13 {dimension_numbers = #tpu.dot_dimension_numbers<[1], [0], [0], [1], [0, 0, 1, 1], [], []>} : vector<16x8xbf16>, vector<8x4xbf16>, vector<16x4xf32> -> vector<16x4xf32>
    %23 = vector.broadcast %3 : vector<1x4xf32> to vector<16x4xf32>
    %24 = arith.addf %22, %23 : vector<16x4xf32>
    %25 = vector.shape_cast %24 : vector<16x4xf32> to vector<2x8x4xf32>
    %c3 = arith.constant 3 : index
    %c0_14 = arith.constant 0 : index
    %c0_15 = arith.constant 0 : index
    %26 = vector.load %arg3[%c3, %c0_14, %c0_15] : memref<4x8x4xbf16, #tpu.memory_space<vmem>>, vector<1x8x4xbf16>
    %27 = vector.shape_cast %26 : vector<1x8x4xbf16> to vector<8x4xbf16>
    %cst_16 = arith.constant dense<0.000000e+00> : vector<16x4xf32>
    %28 = tpu.matmul %2, %27, %cst_16 {dimension_numbers = #tpu.dot_dimension_numbers<[1], [0], [0], [1], [0, 0, 1, 1], [], []>} : vector<16x8xbf16>, vector<8x4xbf16>, vector<16x4xf32> -> vector<16x4xf32>
    %29 = vector.broadcast %3 : vector<1x4xf32> to vector<16x4xf32>
    %30 = arith.addf %28, %29 : vector<16x4xf32>
    %31 = vector.shape_cast %30 : vector<16x4xf32> to vector<2x8x4xf32>
    %32 = vector.shape_cast %25 : vector<2x8x4xf32> to vector<2x8x1x4xf32>
    %33 = vector.shape_cast %31 : vector<2x8x4xf32> to vector<2x8x1x4xf32>
    %34 = tpu.concatenate %32, %33 in 2 : vector<2x8x1x4xf32>, vector<2x8x1x4xf32> -> vector<2x8x2x4xf32>
    %35 = vector.shape_cast %34 : vector<2x8x2x4xf32> to vector<2x16x4xf32>
    %36 = vector.shape_cast %19 : vector<2x16x4xf32> to vector<2x1x16x4xf32>
    %37 = vector.shape_cast %35 : vector<2x16x4xf32> to vector<2x1x16x4xf32>
    %38 = tpu.concatenate %36, %37 in 1 : vector<2x1x16x4xf32>, vector<2x1x16x4xf32> -> vector<2x2x16x4xf32>
    %39 = vector.shape_cast %38 : vector<2x2x16x4xf32> to vector<4x16x4xf32>
    %40 = arith.truncf %39 : vector<4x16x4xf32> to vector<4x16x4xbf16>
    %c0_17 = arith.constant 0 : index
    %c0_18 = arith.constant 0 : index
    %c0_19 = arith.constant 0 : index
    %c0_20 = arith.constant 0 : index
    %41 = vector.load %arg5[%c0_17, %c0_18, %c0_19, %c0_20] : memref<1x4x16x4xbf16, #tpu.memory_space<vmem>>, vector<1x4x16x4xbf16>
    %42 = vector.shape_cast %41 : vector<1x4x16x4xbf16> to vector<4x16x4xbf16>
    %43 = vector.shape_cast %40 : vector<4x16x4xbf16> to vector<1x4x16x4xbf16>
    tpu.vector_store %arg5[%c0_17, %c0_18, %c0_19, %c0_20], %43 {strides = array<i32>} : memref<1x4x16x4xbf16, #tpu.memory_space<vmem>>, vector<1x4x16x4xbf16>,
    return
  }
  func.func @transform_0(%arg0: i32, %arg1: i32) -> (i32, i32, i32, i32) {
    %c0_i32 = arith.constant 0 : i32
    %c0_i32_0 = arith.constant 0 : i32
    %c0_i32_1 = arith.constant 0 : i32
    return %arg0, %arg1, %c0_i32, %c0_i32_0 : i32, i32, i32, i32
  }
  func.func @transform_1(%arg0: i32, %arg1: i32) -> (i32, i32, i32) {
    %c0_i32 = arith.constant 0 : i32
    %c0_i32_0 = arith.constant 0 : i32
    %c0_i32_1 = arith.constant 0 : i32
    %c0_i32_2 = arith.constant 0 : i32
    return %c0_i32, %c0_i32_0, %c0_i32_1 : i32, i32, i32
  }
  func.func @transform_2(%arg0: i32, %arg1: i32) -> (i32, i32) {
    %c0_i32 = arith.constant 0 : i32
    %c0_i32_0 = arith.constant 0 : i32
    %c0_i32_1 = arith.constant 0 : i32
    return %c0_i32, %c0_i32_0 : i32, i32
  }
  func.func @transform_3(%arg0: i32, %arg1: i32) -> (i32, i32, i32, i32) {
    %c0_i32 = arith.constant 0 : i32
    %c0_i32_0 = arith.constant 0 : i32
    %c0_i32_1 = arith.constant 0 : i32
    return %arg0, %arg1, %c0_i32, %c0_i32_0 : i32, i32, i32, i32
  }
}

module attributes {stable_mosaic.version = 11 : i64} {
  func.func @_conv3x3_kernel(%arg0: i32, %arg1: i32, %arg2: memref<1x1x16x4xbf16, #tpu.memory_space<vmem>>, %arg3: memref<1x4x16x4xbf16, #tpu.memory_space<vmem>>, %arg4: memref<1x1x16x4xbf16, #tpu.memory_space<vmem>>, %arg5: memref<1x1x16x4xbf16, #tpu.memory_space<vmem>>, %arg6: memref<1x4x16x4xbf16, #tpu.memory_space<vmem>>, %arg7: memref<1x1x16x4xbf16, #tpu.memory_space<vmem>>, %arg8: memref<9x4x4xbf16, #tpu.memory_space<vmem>>, %arg9: memref<9x4x4xbf16, #tpu.memory_space<vmem>>, %arg10: memref<1x4xf32, #tpu.memory_space<vmem>>, %arg11: memref<1x4x16x4xbf16, #tpu.memory_space<vmem>>) attributes {dimension_semantics = [#tpu.dimension_semantics<parallel>, #tpu.dimension_semantics<parallel>], iteration_bounds = array<i64: 2, 4>, scalar_prefetch = 0 : i64, scratch_operands = 0 : i64, tpu.core_type = #tpu.core_type<tc>, window_params = [{transform_indices = @transform_0, window_bounds = array<i64: 1, 1, 16, 4>}, {transform_indices = @transform_1, window_bounds = array<i64: 1, 4, 16, 4>}, {transform_indices = @transform_2, window_bounds = array<i64: 1, 1, 16, 4>}, {transform_indices = @transform_3, window_bounds = array<i64: 1, 1, 16, 4>}, {transform_indices = @transform_4, window_bounds = array<i64: 1, 4, 16, 4>}, {transform_indices = @transform_5, window_bounds = array<i64: 1, 1, 16, 4>}, {pipeline_mode = #tpu.pipeline_mode<synchronous>, transform_indices = @transform_6, window_bounds = array<i64: 9, 4, 4>}, {pipeline_mode = #tpu.pipeline_mode<synchronous>, transform_indices = @transform_7, window_bounds = array<i64: 9, 4, 4>}, {pipeline_mode = #tpu.pipeline_mode<synchronous>, transform_indices = @transform_8, window_bounds = array<i64: 1, 4>}, {transform_indices = @transform_9, window_bounds = array<i64: 1, 4, 16, 4>}]} {
    %0 = tpu.iota {dimensions = array<i32: 1>} : vector<6x16x1xi32>
    %1 = vector.shape_cast %0 : vector<6x16x1xi32> to vector<96x1xi32>
    %c15_i32 = arith.constant 15 : i32
    %2 = vector.broadcast %c15_i32 : i32 to vector<96x1xi32>
    %3 = arith.cmpi ne, %1, %2 : vector<96x1xi32>
    %c0_i32 = arith.constant 0 : i32
    %4 = vector.broadcast %c0_i32 : i32 to vector<96x1xi32>
    %5 = arith.cmpi ne, %1, %4 : vector<96x1xi32>
    %c0 = arith.constant 0 : index
    %c0_0 = arith.constant 0 : index
    %c0_1 = arith.constant 0 : index
    %c0_2 = arith.constant 0 : index
    %6 = vector.load %arg2[%c0, %c0_0, %c0_1, %c0_2] : memref<1x1x16x4xbf16, #tpu.memory_space<vmem>>, vector<1x1x16x4xbf16>
    %7 = vector.shape_cast %6 : vector<1x1x16x4xbf16> to vector<16x4xbf16>
    %c0_3 = arith.constant 0 : index
    %c0_4 = arith.constant 0 : index
    %c0_5 = arith.constant 0 : index
    %c0_6 = arith.constant 0 : index
    %8 = vector.load %arg4[%c0_3, %c0_4, %c0_5, %c0_6] : memref<1x1x16x4xbf16, #tpu.memory_space<vmem>>, vector<1x1x16x4xbf16>
    %9 = vector.shape_cast %8 : vector<1x1x16x4xbf16> to vector<16x4xbf16>
    %c0_i32_7 = arith.constant 0 : i32
    %10 = arith.cmpi ne, %arg1, %c0_i32_7 : i32
    %11 = arith.extui %10 : i1 to i32
    %12 = arith.sitofp %11 : i32 to f32
    %13 = arith.truncf %12 : f32 to bf16
    %14 = vector.broadcast %13 : bf16 to vector<16x4xbf16>
    %15 = arith.mulf %7, %14 : vector<16x4xbf16>
    %c3_i32 = arith.constant 3 : i32
    %16 = arith.cmpi ne, %arg1, %c3_i32 : i32
    %17 = arith.extui %16 : i1 to i32
    %18 = arith.sitofp %17 : i32 to f32
    %19 = arith.truncf %18 : f32 to bf16
    %20 = vector.broadcast %19 : bf16 to vector<16x4xbf16>
    %21 = arith.mulf %9, %20 : vector<16x4xbf16>
    %c0_8 = arith.constant 0 : index
    %c0_9 = arith.constant 0 : index
    %c0_10 = arith.constant 0 : index
    %c0_11 = arith.constant 0 : index
    %22 = vector.load %arg3[%c0_8, %c0_9, %c0_10, %c0_11] : memref<1x4x16x4xbf16, #tpu.memory_space<vmem>>, vector<1x4x16x4xbf16>
    %23 = vector.shape_cast %22 : vector<1x4x16x4xbf16> to vector<4x16x4xbf16>
    %24 = vector.shape_cast %23 : vector<4x16x4xbf16> to vector<64x4xbf16>
    %25 = tpu.concatenate %15, %24, %21 in 0 : vector<16x4xbf16>, vector<64x4xbf16>, vector<16x4xbf16> -> vector<96x4xbf16>
    %c0_i32_12 = arith.constant 0 : i32
    %26 = arith.sitofp %c0_i32_12 : i32 to bf16
    %27 = vector.shape_cast %3 : vector<96x1xi1> to vector<96x1xi1>
    %28 = vector.broadcast %27 : vector<96x1xi1> to vector<96x4xi1>
    %29 = vector.broadcast %26 : bf16 to vector<96x4xbf16>
    %30 = arith.select %28, %25, %29 : vector<96x4xi1>, vector<96x4xbf16>
    %c0_i32_13 = arith.constant 0 : i32
    %31 = arith.sitofp %c0_i32_13 : i32 to bf16
    %32 = vector.shape_cast %5 : vector<96x1xi1> to vector<96x1xi1>
    %33 = vector.broadcast %32 : vector<96x1xi1> to vector<96x4xi1>
    %34 = vector.broadcast %31 : bf16 to vector<96x4xbf16>
    %35 = arith.select %33, %25, %34 : vector<96x4xi1>, vector<96x4xbf16>
    %c0_14 = arith.constant 0 : index
    %c0_15 = arith.constant 0 : index
    %c0_16 = arith.constant 0 : index
    %c0_17 = arith.constant 0 : index
    %36 = vector.load %arg5[%c0_14, %c0_15, %c0_16, %c0_17] : memref<1x1x16x4xbf16, #tpu.memory_space<vmem>>, vector<1x1x16x4xbf16>
    %37 = vector.shape_cast %36 : vector<1x1x16x4xbf16> to vector<16x4xbf16>
    %c0_18 = arith.constant 0 : index
    %c0_19 = arith.constant 0 : index
    %c0_20 = arith.constant 0 : index
    %c0_21 = arith.constant 0 : index
    %38 = vector.load %arg7[%c0_18, %c0_19, %c0_20, %c0_21] : memref<1x1x16x4xbf16, #tpu.memory_space<vmem>>, vector<1x1x16x4xbf16>
    %39 = vector.shape_cast %38 : vector<1x1x16x4xbf16> to vector<16x4xbf16>
    %c0_i32_22 = arith.constant 0 : i32
    %40 = arith.cmpi ne, %arg1, %c0_i32_22 : i32
    %41 = arith.extui %40 : i1 to i32
    %42 = arith.sitofp %41 : i32 to f32
    %43 = arith.truncf %42 : f32 to bf16
    %44 = vector.broadcast %43 : bf16 to vector<16x4xbf16>
    %45 = arith.mulf %37, %44 : vector<16x4xbf16>
    %c3_i32_23 = arith.constant 3 : i32
    %46 = arith.cmpi ne, %arg1, %c3_i32_23 : i32
    %47 = arith.extui %46 : i1 to i32
    %48 = arith.sitofp %47 : i32 to f32
    %49 = arith.truncf %48 : f32 to bf16
    %50 = vector.broadcast %49 : bf16 to vector<16x4xbf16>
    %51 = arith.mulf %39, %50 : vector<16x4xbf16>
    %c0_24 = arith.constant 0 : index
    %c0_25 = arith.constant 0 : index
    %c0_26 = arith.constant 0 : index
    %c0_27 = arith.constant 0 : index
    %52 = vector.load %arg6[%c0_24, %c0_25, %c0_26, %c0_27] : memref<1x4x16x4xbf16, #tpu.memory_space<vmem>>, vector<1x4x16x4xbf16>
    %53 = vector.shape_cast %52 : vector<1x4x16x4xbf16> to vector<4x16x4xbf16>
    %54 = vector.shape_cast %53 : vector<4x16x4xbf16> to vector<64x4xbf16>
    %55 = tpu.concatenate %45, %54, %51 in 0 : vector<16x4xbf16>, vector<64x4xbf16>, vector<16x4xbf16> -> vector<96x4xbf16>
    %c0_i32_28 = arith.constant 0 : i32
    %56 = arith.sitofp %c0_i32_28 : i32 to bf16
    %57 = vector.shape_cast %3 : vector<96x1xi1> to vector<96x1xi1>
    %58 = vector.broadcast %57 : vector<96x1xi1> to vector<96x4xi1>
    %59 = vector.broadcast %56 : bf16 to vector<96x4xbf16>
    %60 = arith.select %58, %55, %59 : vector<96x4xi1>, vector<96x4xbf16>
    %c0_i32_29 = arith.constant 0 : i32
    %61 = arith.sitofp %c0_i32_29 : i32 to bf16
    %62 = vector.shape_cast %5 : vector<96x1xi1> to vector<96x1xi1>
    %63 = vector.broadcast %62 : vector<96x1xi1> to vector<96x4xi1>
    %64 = vector.broadcast %61 : bf16 to vector<96x4xbf16>
    %65 = arith.select %63, %55, %64 : vector<96x4xi1>, vector<96x4xbf16>
    %c0_30 = arith.constant 0 : index
    %c0_31 = arith.constant 0 : index
    %66 = vector.load %arg10[%c0_30, %c0_31] : memref<1x4xf32, #tpu.memory_space<vmem>>, vector<1x4xf32>
    %cst = arith.constant 0.000000e+00 : f32
    %67 = vector.broadcast %cst : f32 to vector<96x4xf32>
    %c0_32 = arith.constant 0 : index
    %c0_33 = arith.constant 0 : index
    %c0_34 = arith.constant 0 : index
    %68 = vector.load %arg8[%c0_32, %c0_33, %c0_34] : memref<9x4x4xbf16, #tpu.memory_space<vmem>>, vector<1x4x4xbf16>
    %69 = vector.shape_cast %68 : vector<1x4x4xbf16> to vector<4x4xbf16>
    %cst_35 = arith.constant dense<0.000000e+00> : vector<96x4xf32>
    %70 = tpu.matmul %30, %69, %cst_35 {dimension_numbers = #tpu.dot_dimension_numbers<[1], [0], [0], [1], [0, 0, 1, 1], [], []>} : vector<96x4xbf16>, vector<4x4xbf16>, vector<96x4xf32> -> vector<96x4xf32>
    %71 = vector.extract_strided_slice %70 {offsets = [95, 0], sizes = [1, 4], strides = [1, 1]} : vector<96x4xf32> to vector<1x4xf32>
    %72 = vector.extract_strided_slice %70 {offsets = [0, 0], sizes = [95, 4], strides = [1, 1]} : vector<96x4xf32> to vector<95x4xf32>
    %73 = tpu.concatenate %71, %72 in 0 : vector<1x4xf32>, vector<95x4xf32> -> vector<96x4xf32>
    %74 = arith.addf %67, %73 : vector<96x4xf32>
    %c1 = arith.constant 1 : index
    %c0_36 = arith.constant 0 : index
    %c0_37 = arith.constant 0 : index
    %75 = vector.load %arg8[%c1, %c0_36, %c0_37] : memref<9x4x4xbf16, #tpu.memory_space<vmem>>, vector<1x4x4xbf16>
    %76 = vector.shape_cast %75 : vector<1x4x4xbf16> to vector<4x4xbf16>
    %cst_38 = arith.constant dense<0.000000e+00> : vector<96x4xf32>
    %77 = tpu.matmul %25, %76, %cst_38 {dimension_numbers = #tpu.dot_dimension_numbers<[1], [0], [0], [1], [0, 0, 1, 1], [], []>} : vector<96x4xbf16>, vector<4x4xbf16>, vector<96x4xf32> -> vector<96x4xf32>
    %78 = arith.addf %74, %77 : vector<96x4xf32>
    %c2 = arith.constant 2 : index
    %c0_39 = arith.constant 0 : index
    %c0_40 = arith.constant 0 : index
    %79 = vector.load %arg8[%c2, %c0_39, %c0_40] : memref<9x4x4xbf16, #tpu.memory_space<vmem>>, vector<1x4x4xbf16>
    %80 = vector.shape_cast %79 : vector<1x4x4xbf16> to vector<4x4xbf16>
    %cst_41 = arith.constant dense<0.000000e+00> : vector<96x4xf32>
    %81 = tpu.matmul %35, %80, %cst_41 {dimension_numbers = #tpu.dot_dimension_numbers<[1], [0], [0], [1], [0, 0, 1, 1], [], []>} : vector<96x4xbf16>, vector<4x4xbf16>, vector<96x4xf32> -> vector<96x4xf32>
    %82 = vector.extract_strided_slice %81 {offsets = [1, 0], sizes = [95, 4], strides = [1, 1]} : vector<96x4xf32> to vector<95x4xf32>
    %83 = vector.extract_strided_slice %81 {offsets = [0, 0], sizes = [1, 4], strides = [1, 1]} : vector<96x4xf32> to vector<1x4xf32>
    %84 = tpu.concatenate %82, %83 in 0 : vector<95x4xf32>, vector<1x4xf32> -> vector<96x4xf32>
    %85 = arith.addf %78, %84 : vector<96x4xf32>
    %c3 = arith.constant 3 : index
    %c0_42 = arith.constant 0 : index
    %c0_43 = arith.constant 0 : index
    %86 = vector.load %arg8[%c3, %c0_42, %c0_43] : memref<9x4x4xbf16, #tpu.memory_space<vmem>>, vector<1x4x4xbf16>
    %87 = vector.shape_cast %86 : vector<1x4x4xbf16> to vector<4x4xbf16>
    %cst_44 = arith.constant dense<0.000000e+00> : vector<96x4xf32>
    %88 = tpu.matmul %30, %87, %cst_44 {dimension_numbers = #tpu.dot_dimension_numbers<[1], [0], [0], [1], [0, 0, 1, 1], [], []>} : vector<96x4xbf16>, vector<4x4xbf16>, vector<96x4xf32> -> vector<96x4xf32>
    %89 = vector.extract_strided_slice %88 {offsets = [15, 0], sizes = [81, 4], strides = [1, 1]} : vector<96x4xf32> to vector<81x4xf32>
    %90 = vector.extract_strided_slice %88 {offsets = [0, 0], sizes = [15, 4], strides = [1, 1]} : vector<96x4xf32> to vector<15x4xf32>
    %91 = tpu.concatenate %89, %90 in 0 : vector<81x4xf32>, vector<15x4xf32> -> vector<96x4xf32>
    %92 = arith.addf %85, %91 : vector<96x4xf32>
    %c4 = arith.constant 4 : index
    %c0_45 = arith.constant 0 : index
    %c0_46 = arith.constant 0 : index
    %93 = vector.load %arg8[%c4, %c0_45, %c0_46] : memref<9x4x4xbf16, #tpu.memory_space<vmem>>, vector<1x4x4xbf16>
    %94 = vector.shape_cast %93 : vector<1x4x4xbf16> to vector<4x4xbf16>
    %cst_47 = arith.constant dense<0.000000e+00> : vector<96x4xf32>
    %95 = tpu.matmul %25, %94, %cst_47 {dimension_numbers = #tpu.dot_dimension_numbers<[1], [0], [0], [1], [0, 0, 1, 1], [], []>} : vector<96x4xbf16>, vector<4x4xbf16>, vector<96x4xf32> -> vector<96x4xf32>
    %96 = vector.extract_strided_slice %95 {offsets = [16, 0], sizes = [80, 4], strides = [1, 1]} : vector<96x4xf32> to vector<80x4xf32>
    %97 = vector.extract_strided_slice %95 {offsets = [0, 0], sizes = [16, 4], strides = [1, 1]} : vector<96x4xf32> to vector<16x4xf32>
    %98 = tpu.concatenate %96, %97 in 0 : vector<80x4xf32>, vector<16x4xf32> -> vector<96x4xf32>
    %99 = arith.addf %92, %98 : vector<96x4xf32>
    %c5 = arith.constant 5 : index
    %c0_48 = arith.constant 0 : index
    %c0_49 = arith.constant 0 : index
    %100 = vector.load %arg8[%c5, %c0_48, %c0_49] : memref<9x4x4xbf16, #tpu.memory_space<vmem>>, vector<1x4x4xbf16>
    %101 = vector.shape_cast %100 : vector<1x4x4xbf16> to vector<4x4xbf16>
    %cst_50 = arith.constant dense<0.000000e+00> : vector<96x4xf32>
    %102 = tpu.matmul %35, %101, %cst_50 {dimension_numbers = #tpu.dot_dimension_numbers<[1], [0], [0], [1], [0, 0, 1, 1], [], []>} : vector<96x4xbf16>, vector<4x4xbf16>, vector<96x4xf32> -> vector<96x4xf32>
    %103 = vector.extract_strided_slice %102 {offsets = [17, 0], sizes = [79, 4], strides = [1, 1]} : vector<96x4xf32> to vector<79x4xf32>
    %104 = vector.extract_strided_slice %102 {offsets = [0, 0], sizes = [17, 4], strides = [1, 1]} : vector<96x4xf32> to vector<17x4xf32>
    %105 = tpu.concatenate %103, %104 in 0 : vector<79x4xf32>, vector<17x4xf32> -> vector<96x4xf32>
    %106 = arith.addf %99, %105 : vector<96x4xf32>
    %c6 = arith.constant 6 : index
    %c0_51 = arith.constant 0 : index
    %c0_52 = arith.constant 0 : index
    %107 = vector.load %arg8[%c6, %c0_51, %c0_52] : memref<9x4x4xbf16, #tpu.memory_space<vmem>>, vector<1x4x4xbf16>
    %108 = vector.shape_cast %107 : vector<1x4x4xbf16> to vector<4x4xbf16>
    %cst_53 = arith.constant dense<0.000000e+00> : vector<96x4xf32>
    %109 = tpu.matmul %30, %108, %cst_53 {dimension_numbers = #tpu.dot_dimension_numbers<[1], [0], [0], [1], [0, 0, 1, 1], [], []>} : vector<96x4xbf16>, vector<4x4xbf16>, vector<96x4xf32> -> vector<96x4xf32>
    %110 = vector.extract_strided_slice %109 {offsets = [31, 0], sizes = [65, 4], strides = [1, 1]} : vector<96x4xf32> to vector<65x4xf32>
    %111 = vector.extract_strided_slice %109 {offsets = [0, 0], sizes = [31, 4], strides = [1, 1]} : vector<96x4xf32> to vector<31x4xf32>
    %112 = tpu.concatenate %110, %111 in 0 : vector<65x4xf32>, vector<31x4xf32> -> vector<96x4xf32>
    %113 = arith.addf %106, %112 : vector<96x4xf32>
    %c7 = arith.constant 7 : index
    %c0_54 = arith.constant 0 : index
    %c0_55 = arith.constant 0 : index
    %114 = vector.load %arg8[%c7, %c0_54, %c0_55] : memref<9x4x4xbf16, #tpu.memory_space<vmem>>, vector<1x4x4xbf16>
    %115 = vector.shape_cast %114 : vector<1x4x4xbf16> to vector<4x4xbf16>
    %cst_56 = arith.constant dense<0.000000e+00> : vector<96x4xf32>
    %116 = tpu.matmul %25, %115, %cst_56 {dimension_numbers = #tpu.dot_dimension_numbers<[1], [0], [0], [1], [0, 0, 1, 1], [], []>} : vector<96x4xbf16>, vector<4x4xbf16>, vector<96x4xf32> -> vector<96x4xf32>
    %117 = vector.extract_strided_slice %116 {offsets = [32, 0], sizes = [64, 4], strides = [1, 1]} : vector<96x4xf32> to vector<64x4xf32>
    %118 = vector.extract_strided_slice %116 {offsets = [0, 0], sizes = [32, 4], strides = [1, 1]} : vector<96x4xf32> to vector<32x4xf32>
    %119 = tpu.concatenate %117, %118 in 0 : vector<64x4xf32>, vector<32x4xf32> -> vector<96x4xf32>
    %120 = arith.addf %113, %119 : vector<96x4xf32>
    %c8 = arith.constant 8 : index
    %c0_57 = arith.constant 0 : index
    %c0_58 = arith.constant 0 : index
    %121 = vector.load %arg8[%c8, %c0_57, %c0_58] : memref<9x4x4xbf16, #tpu.memory_space<vmem>>, vector<1x4x4xbf16>
    %122 = vector.shape_cast %121 : vector<1x4x4xbf16> to vector<4x4xbf16>
    %cst_59 = arith.constant dense<0.000000e+00> : vector<96x4xf32>
    %123 = tpu.matmul %35, %122, %cst_59 {dimension_numbers = #tpu.dot_dimension_numbers<[1], [0], [0], [1], [0, 0, 1, 1], [], []>} : vector<96x4xbf16>, vector<4x4xbf16>, vector<96x4xf32> -> vector<96x4xf32>
    %124 = vector.extract_strided_slice %123 {offsets = [33, 0], sizes = [63, 4], strides = [1, 1]} : vector<96x4xf32> to vector<63x4xf32>
    %125 = vector.extract_strided_slice %123 {offsets = [0, 0], sizes = [33, 4], strides = [1, 1]} : vector<96x4xf32> to vector<33x4xf32>
    %126 = tpu.concatenate %124, %125 in 0 : vector<63x4xf32>, vector<33x4xf32> -> vector<96x4xf32>
    %127 = arith.addf %120, %126 : vector<96x4xf32>
    %c0_60 = arith.constant 0 : index
    %c0_61 = arith.constant 0 : index
    %c0_62 = arith.constant 0 : index
    %128 = vector.load %arg9[%c0_60, %c0_61, %c0_62] : memref<9x4x4xbf16, #tpu.memory_space<vmem>>, vector<1x4x4xbf16>
    %129 = vector.shape_cast %128 : vector<1x4x4xbf16> to vector<4x4xbf16>
    %cst_63 = arith.constant dense<0.000000e+00> : vector<96x4xf32>
    %130 = tpu.matmul %60, %129, %cst_63 {dimension_numbers = #tpu.dot_dimension_numbers<[1], [0], [0], [1], [0, 0, 1, 1], [], []>} : vector<96x4xbf16>, vector<4x4xbf16>, vector<96x4xf32> -> vector<96x4xf32>
    %131 = vector.extract_strided_slice %130 {offsets = [95, 0], sizes = [1, 4], strides = [1, 1]} : vector<96x4xf32> to vector<1x4xf32>
    %132 = vector.extract_strided_slice %130 {offsets = [0, 0], sizes = [95, 4], strides = [1, 1]} : vector<96x4xf32> to vector<95x4xf32>
    %133 = tpu.concatenate %131, %132 in 0 : vector<1x4xf32>, vector<95x4xf32> -> vector<96x4xf32>
    %134 = arith.addf %127, %133 : vector<96x4xf32>
    %c1_64 = arith.constant 1 : index
    %c0_65 = arith.constant 0 : index
    %c0_66 = arith.constant 0 : index
    %135 = vector.load %arg9[%c1_64, %c0_65, %c0_66] : memref<9x4x4xbf16, #tpu.memory_space<vmem>>, vector<1x4x4xbf16>
    %136 = vector.shape_cast %135 : vector<1x4x4xbf16> to vector<4x4xbf16>
    %cst_67 = arith.constant dense<0.000000e+00> : vector<96x4xf32>
    %137 = tpu.matmul %55, %136, %cst_67 {dimension_numbers = #tpu.dot_dimension_numbers<[1], [0], [0], [1], [0, 0, 1, 1], [], []>} : vector<96x4xbf16>, vector<4x4xbf16>, vector<96x4xf32> -> vector<96x4xf32>
    %138 = arith.addf %134, %137 : vector<96x4xf32>
    %c2_68 = arith.constant 2 : index
    %c0_69 = arith.constant 0 : index
    %c0_70 = arith.constant 0 : index
    %139 = vector.load %arg9[%c2_68, %c0_69, %c0_70] : memref<9x4x4xbf16, #tpu.memory_space<vmem>>, vector<1x4x4xbf16>
    %140 = vector.shape_cast %139 : vector<1x4x4xbf16> to vector<4x4xbf16>
    %cst_71 = arith.constant dense<0.000000e+00> : vector<96x4xf32>
    %141 = tpu.matmul %65, %140, %cst_71 {dimension_numbers = #tpu.dot_dimension_numbers<[1], [0], [0], [1], [0, 0, 1, 1], [], []>} : vector<96x4xbf16>, vector<4x4xbf16>, vector<96x4xf32> -> vector<96x4xf32>
    %142 = vector.extract_strided_slice %141 {offsets = [1, 0], sizes = [95, 4], strides = [1, 1]} : vector<96x4xf32> to vector<95x4xf32>
    %143 = vector.extract_strided_slice %141 {offsets = [0, 0], sizes = [1, 4], strides = [1, 1]} : vector<96x4xf32> to vector<1x4xf32>
    %144 = tpu.concatenate %142, %143 in 0 : vector<95x4xf32>, vector<1x4xf32> -> vector<96x4xf32>
    %145 = arith.addf %138, %144 : vector<96x4xf32>
    %c3_72 = arith.constant 3 : index
    %c0_73 = arith.constant 0 : index
    %c0_74 = arith.constant 0 : index
    %146 = vector.load %arg9[%c3_72, %c0_73, %c0_74] : memref<9x4x4xbf16, #tpu.memory_space<vmem>>, vector<1x4x4xbf16>
    %147 = vector.shape_cast %146 : vector<1x4x4xbf16> to vector<4x4xbf16>
    %cst_75 = arith.constant dense<0.000000e+00> : vector<96x4xf32>
    %148 = tpu.matmul %60, %147, %cst_75 {dimension_numbers = #tpu.dot_dimension_numbers<[1], [0], [0], [1], [0, 0, 1, 1], [], []>} : vector<96x4xbf16>, vector<4x4xbf16>, vector<96x4xf32> -> vector<96x4xf32>
    %149 = vector.extract_strided_slice %148 {offsets = [15, 0], sizes = [81, 4], strides = [1, 1]} : vector<96x4xf32> to vector<81x4xf32>
    %150 = vector.extract_strided_slice %148 {offsets = [0, 0], sizes = [15, 4], strides = [1, 1]} : vector<96x4xf32> to vector<15x4xf32>
    %151 = tpu.concatenate %149, %150 in 0 : vector<81x4xf32>, vector<15x4xf32> -> vector<96x4xf32>
    %152 = arith.addf %145, %151 : vector<96x4xf32>
    %c4_76 = arith.constant 4 : index
    %c0_77 = arith.constant 0 : index
    %c0_78 = arith.constant 0 : index
    %153 = vector.load %arg9[%c4_76, %c0_77, %c0_78] : memref<9x4x4xbf16, #tpu.memory_space<vmem>>, vector<1x4x4xbf16>
    %154 = vector.shape_cast %153 : vector<1x4x4xbf16> to vector<4x4xbf16>
    %cst_79 = arith.constant dense<0.000000e+00> : vector<96x4xf32>
    %155 = tpu.matmul %55, %154, %cst_79 {dimension_numbers = #tpu.dot_dimension_numbers<[1], [0], [0], [1], [0, 0, 1, 1], [], []>} : vector<96x4xbf16>, vector<4x4xbf16>, vector<96x4xf32> -> vector<96x4xf32>
    %156 = vector.extract_strided_slice %155 {offsets = [16, 0], sizes = [80, 4], strides = [1, 1]} : vector<96x4xf32> to vector<80x4xf32>
    %157 = vector.extract_strided_slice %155 {offsets = [0, 0], sizes = [16, 4], strides = [1, 1]} : vector<96x4xf32> to vector<16x4xf32>
    %158 = tpu.concatenate %156, %157 in 0 : vector<80x4xf32>, vector<16x4xf32> -> vector<96x4xf32>
    %159 = arith.addf %152, %158 : vector<96x4xf32>
    %c5_80 = arith.constant 5 : index
    %c0_81 = arith.constant 0 : index
    %c0_82 = arith.constant 0 : index
    %160 = vector.load %arg9[%c5_80, %c0_81, %c0_82] : memref<9x4x4xbf16, #tpu.memory_space<vmem>>, vector<1x4x4xbf16>
    %161 = vector.shape_cast %160 : vector<1x4x4xbf16> to vector<4x4xbf16>
    %cst_83 = arith.constant dense<0.000000e+00> : vector<96x4xf32>
    %162 = tpu.matmul %65, %161, %cst_83 {dimension_numbers = #tpu.dot_dimension_numbers<[1], [0], [0], [1], [0, 0, 1, 1], [], []>} : vector<96x4xbf16>, vector<4x4xbf16>, vector<96x4xf32> -> vector<96x4xf32>
    %163 = vector.extract_strided_slice %162 {offsets = [17, 0], sizes = [79, 4], strides = [1, 1]} : vector<96x4xf32> to vector<79x4xf32>
    %164 = vector.extract_strided_slice %162 {offsets = [0, 0], sizes = [17, 4], strides = [1, 1]} : vector<96x4xf32> to vector<17x4xf32>
    %165 = tpu.concatenate %163, %164 in 0 : vector<79x4xf32>, vector<17x4xf32> -> vector<96x4xf32>
    %166 = arith.addf %159, %165 : vector<96x4xf32>
    %c6_84 = arith.constant 6 : index
    %c0_85 = arith.constant 0 : index
    %c0_86 = arith.constant 0 : index
    %167 = vector.load %arg9[%c6_84, %c0_85, %c0_86] : memref<9x4x4xbf16, #tpu.memory_space<vmem>>, vector<1x4x4xbf16>
    %168 = vector.shape_cast %167 : vector<1x4x4xbf16> to vector<4x4xbf16>
    %cst_87 = arith.constant dense<0.000000e+00> : vector<96x4xf32>
    %169 = tpu.matmul %60, %168, %cst_87 {dimension_numbers = #tpu.dot_dimension_numbers<[1], [0], [0], [1], [0, 0, 1, 1], [], []>} : vector<96x4xbf16>, vector<4x4xbf16>, vector<96x4xf32> -> vector<96x4xf32>
    %170 = vector.extract_strided_slice %169 {offsets = [31, 0], sizes = [65, 4], strides = [1, 1]} : vector<96x4xf32> to vector<65x4xf32>
    %171 = vector.extract_strided_slice %169 {offsets = [0, 0], sizes = [31, 4], strides = [1, 1]} : vector<96x4xf32> to vector<31x4xf32>
    %172 = tpu.concatenate %170, %171 in 0 : vector<65x4xf32>, vector<31x4xf32> -> vector<96x4xf32>
    %173 = arith.addf %166, %172 : vector<96x4xf32>
    %c7_88 = arith.constant 7 : index
    %c0_89 = arith.constant 0 : index
    %c0_90 = arith.constant 0 : index
    %174 = vector.load %arg9[%c7_88, %c0_89, %c0_90] : memref<9x4x4xbf16, #tpu.memory_space<vmem>>, vector<1x4x4xbf16>
    %175 = vector.shape_cast %174 : vector<1x4x4xbf16> to vector<4x4xbf16>
    %cst_91 = arith.constant dense<0.000000e+00> : vector<96x4xf32>
    %176 = tpu.matmul %55, %175, %cst_91 {dimension_numbers = #tpu.dot_dimension_numbers<[1], [0], [0], [1], [0, 0, 1, 1], [], []>} : vector<96x4xbf16>, vector<4x4xbf16>, vector<96x4xf32> -> vector<96x4xf32>
    %177 = vector.extract_strided_slice %176 {offsets = [32, 0], sizes = [64, 4], strides = [1, 1]} : vector<96x4xf32> to vector<64x4xf32>
    %178 = vector.extract_strided_slice %176 {offsets = [0, 0], sizes = [32, 4], strides = [1, 1]} : vector<96x4xf32> to vector<32x4xf32>
    %179 = tpu.concatenate %177, %178 in 0 : vector<64x4xf32>, vector<32x4xf32> -> vector<96x4xf32>
    %180 = arith.addf %173, %179 : vector<96x4xf32>
    %c8_92 = arith.constant 8 : index
    %c0_93 = arith.constant 0 : index
    %c0_94 = arith.constant 0 : index
    %181 = vector.load %arg9[%c8_92, %c0_93, %c0_94] : memref<9x4x4xbf16, #tpu.memory_space<vmem>>, vector<1x4x4xbf16>
    %182 = vector.shape_cast %181 : vector<1x4x4xbf16> to vector<4x4xbf16>
    %cst_95 = arith.constant dense<0.000000e+00> : vector<96x4xf32>
    %183 = tpu.matmul %65, %182, %cst_95 {dimension_numbers = #tpu.dot_dimension_numbers<[1], [0], [0], [1], [0, 0, 1, 1], [], []>} : vector<96x4xbf16>, vector<4x4xbf16>, vector<96x4xf32> -> vector<96x4xf32>
    %184 = vector.extract_strided_slice %183 {offsets = [33, 0], sizes = [63, 4], strides = [1, 1]} : vector<96x4xf32> to vector<63x4xf32>
    %185 = vector.extract_strided_slice %183 {offsets = [0, 0], sizes = [33, 4], strides = [1, 1]} : vector<96x4xf32> to vector<33x4xf32>
    %186 = tpu.concatenate %184, %185 in 0 : vector<63x4xf32>, vector<33x4xf32> -> vector<96x4xf32>
    %187 = arith.addf %180, %186 : vector<96x4xf32>
    %188 = vector.extract_strided_slice %187 {offsets = [0, 0], sizes = [64, 4], strides = [1, 1]} : vector<96x4xf32> to vector<64x4xf32>
    %189 = vector.broadcast %66 : vector<1x4xf32> to vector<64x4xf32>
    %190 = arith.addf %188, %189 : vector<64x4xf32>
    %cst_96 = arith.constant 0.000000e+00 : f32
    %191 = vector.broadcast %cst_96 : f32 to vector<64x4xf32>
    %192 = arith.maximumf %190, %191 : vector<64x4xf32>
    %193 = vector.shape_cast %192 : vector<64x4xf32> to vector<4x16x4xf32>
    %194 = arith.truncf %193 : vector<4x16x4xf32> to vector<4x16x4xbf16>
    %c0_97 = arith.constant 0 : index
    %c0_98 = arith.constant 0 : index
    %c0_99 = arith.constant 0 : index
    %c0_100 = arith.constant 0 : index
    %195 = vector.load %arg11[%c0_97, %c0_98, %c0_99, %c0_100] : memref<1x4x16x4xbf16, #tpu.memory_space<vmem>>, vector<1x4x16x4xbf16>
    %196 = vector.shape_cast %195 : vector<1x4x16x4xbf16> to vector<4x16x4xbf16>
    %197 = vector.shape_cast %194 : vector<4x16x4xbf16> to vector<1x4x16x4xbf16>
    tpu.vector_store %arg11[%c0_97, %c0_98, %c0_99, %c0_100], %197 {strides = array<i32>} : memref<1x4x16x4xbf16, #tpu.memory_space<vmem>>, vector<1x4x16x4xbf16>,
    return
  }
  func.func @transform_0(%arg0: i32, %arg1: i32) -> (i32, i32, i32, i32) {
    %c4_i32 = arith.constant 4 : i32
    %0 = arith.muli %arg1, %c4_i32 : i32
    %c1_i32 = arith.constant 1 : i32
    %1 = arith.subi %0, %c1_i32 : i32
    %c0_i32 = arith.constant 0 : i32
    %2 = arith.maxsi %1, %c0_i32 : i32
    %c0_i32_0 = arith.constant 0 : i32
    %c0_i32_1 = arith.constant 0 : i32
    %c0_i32_2 = arith.constant 0 : i32
    return %arg0, %2, %c0_i32_0, %c0_i32_1 : i32, i32, i32, i32
  }
  func.func @transform_1(%arg0: i32, %arg1: i32) -> (i32, i32, i32, i32) {
    %c0_i32 = arith.constant 0 : i32
    %c0_i32_0 = arith.constant 0 : i32
    %c0_i32_1 = arith.constant 0 : i32
    return %arg0, %arg1, %c0_i32, %c0_i32_0 : i32, i32, i32, i32
  }
  func.func @transform_2(%arg0: i32, %arg1: i32) -> (i32, i32, i32, i32) {
    %c4_i32 = arith.constant 4 : i32
    %0 = arith.muli %arg1, %c4_i32 : i32
    %c4_i32_0 = arith.constant 4 : i32
    %1 = arith.addi %0, %c4_i32_0 : i32
    %c15_i32 = arith.constant 15 : i32
    %2 = arith.minsi %1, %c15_i32 : i32
    %c0_i32 = arith.constant 0 : i32
    %c0_i32_1 = arith.constant 0 : i32
    %c0_i32_2 = arith.constant 0 : i32
    return %arg0, %2, %c0_i32, %c0_i32_1 : i32, i32, i32, i32
  }
  func.func @transform_3(%arg0: i32, %arg1: i32) -> (i32, i32, i32, i32) {
    %c4_i32 = arith.constant 4 : i32
    %0 = arith.muli %arg1, %c4_i32 : i32
    %c1_i32 = arith.constant 1 : i32
    %1 = arith.subi %0, %c1_i32 : i32
    %c0_i32 = arith.constant 0 : i32
    %2 = arith.maxsi %1, %c0_i32 : i32
    %c0_i32_0 = arith.constant 0 : i32
    %c0_i32_1 = arith.constant 0 : i32
    %c0_i32_2 = arith.constant 0 : i32
    return %arg0, %2, %c0_i32_0, %c0_i32_1 : i32, i32, i32, i32
  }
  func.func @transform_4(%arg0: i32, %arg1: i32) -> (i32, i32, i32, i32) {
    %c0_i32 = arith.constant 0 : i32
    %c0_i32_0 = arith.constant 0 : i32
    %c0_i32_1 = arith.constant 0 : i32
    return %arg0, %arg1, %c0_i32, %c0_i32_0 : i32, i32, i32, i32
  }
  func.func @transform_5(%arg0: i32, %arg1: i32) -> (i32, i32, i32, i32) {
    %c4_i32 = arith.constant 4 : i32
    %0 = arith.muli %arg1, %c4_i32 : i32
    %c4_i32_0 = arith.constant 4 : i32
    %1 = arith.addi %0, %c4_i32_0 : i32
    %c15_i32 = arith.constant 15 : i32
    %2 = arith.minsi %1, %c15_i32 : i32
    %c0_i32 = arith.constant 0 : i32
    %c0_i32_1 = arith.constant 0 : i32
    %c0_i32_2 = arith.constant 0 : i32
    return %arg0, %2, %c0_i32, %c0_i32_1 : i32, i32, i32, i32
  }
  func.func @transform_6(%arg0: i32, %arg1: i32) -> (i32, i32, i32) {
    %c0_i32 = arith.constant 0 : i32
    %c0_i32_0 = arith.constant 0 : i32
    %c0_i32_1 = arith.constant 0 : i32
    %c0_i32_2 = arith.constant 0 : i32
    return %c0_i32, %c0_i32_0, %c0_i32_1 : i32, i32, i32
  }
  func.func @transform_7(%arg0: i32, %arg1: i32) -> (i32, i32, i32) {
    %c0_i32 = arith.constant 0 : i32
    %c0_i32_0 = arith.constant 0 : i32
    %c0_i32_1 = arith.constant 0 : i32
    %c0_i32_2 = arith.constant 0 : i32
    return %c0_i32, %c0_i32_0, %c0_i32_1 : i32, i32, i32
  }
  func.func @transform_8(%arg0: i32, %arg1: i32) -> (i32, i32) {
    %c0_i32 = arith.constant 0 : i32
    %c0_i32_0 = arith.constant 0 : i32
    %c0_i32_1 = arith.constant 0 : i32
    return %c0_i32, %c0_i32_0 : i32, i32
  }
  func.func @transform_9(%arg0: i32, %arg1: i32) -> (i32, i32, i32, i32) {
    %c0_i32 = arith.constant 0 : i32
    %c0_i32_0 = arith.constant 0 : i32
    %c0_i32_1 = arith.constant 0 : i32
    return %arg0, %arg1, %c0_i32, %c0_i32_0 : i32, i32, i32, i32
  }
}

module attributes {stable_mosaic.version = 11 : i64} {
  func.func @_conv3x3_kernel(%arg0: i32, %arg1: i32, %arg2: memref<1x1x16x4xbf16, #tpu.memory_space<vmem>>, %arg3: memref<1x4x16x4xbf16, #tpu.memory_space<vmem>>, %arg4: memref<1x1x16x4xbf16, #tpu.memory_space<vmem>>, %arg5: memref<9x4x4xbf16, #tpu.memory_space<vmem>>, %arg6: memref<1x4xf32, #tpu.memory_space<vmem>>, %arg7: memref<1x4x16x4xbf16, #tpu.memory_space<vmem>>) attributes {dimension_semantics = [#tpu.dimension_semantics<parallel>, #tpu.dimension_semantics<parallel>], iteration_bounds = array<i64: 2, 4>, scalar_prefetch = 0 : i64, scratch_operands = 0 : i64, tpu.core_type = #tpu.core_type<tc>, window_params = [{transform_indices = @transform_0, window_bounds = array<i64: 1, 1, 16, 4>}, {transform_indices = @transform_1, window_bounds = array<i64: 1, 4, 16, 4>}, {transform_indices = @transform_2, window_bounds = array<i64: 1, 1, 16, 4>}, {pipeline_mode = #tpu.pipeline_mode<synchronous>, transform_indices = @transform_3, window_bounds = array<i64: 9, 4, 4>}, {pipeline_mode = #tpu.pipeline_mode<synchronous>, transform_indices = @transform_4, window_bounds = array<i64: 1, 4>}, {transform_indices = @transform_5, window_bounds = array<i64: 1, 4, 16, 4>}]} {
    %0 = tpu.iota {dimensions = array<i32: 1>} : vector<6x16x1xi32>
    %1 = vector.shape_cast %0 : vector<6x16x1xi32> to vector<96x1xi32>
    %c15_i32 = arith.constant 15 : i32
    %2 = vector.broadcast %c15_i32 : i32 to vector<96x1xi32>
    %3 = arith.cmpi ne, %1, %2 : vector<96x1xi32>
    %c0_i32 = arith.constant 0 : i32
    %4 = vector.broadcast %c0_i32 : i32 to vector<96x1xi32>
    %5 = arith.cmpi ne, %1, %4 : vector<96x1xi32>
    %c0 = arith.constant 0 : index
    %c0_0 = arith.constant 0 : index
    %c0_1 = arith.constant 0 : index
    %c0_2 = arith.constant 0 : index
    %6 = vector.load %arg2[%c0, %c0_0, %c0_1, %c0_2] : memref<1x1x16x4xbf16, #tpu.memory_space<vmem>>, vector<1x1x16x4xbf16>
    %7 = vector.shape_cast %6 : vector<1x1x16x4xbf16> to vector<16x4xbf16>
    %c0_3 = arith.constant 0 : index
    %c0_4 = arith.constant 0 : index
    %c0_5 = arith.constant 0 : index
    %c0_6 = arith.constant 0 : index
    %8 = vector.load %arg4[%c0_3, %c0_4, %c0_5, %c0_6] : memref<1x1x16x4xbf16, #tpu.memory_space<vmem>>, vector<1x1x16x4xbf16>
    %9 = vector.shape_cast %8 : vector<1x1x16x4xbf16> to vector<16x4xbf16>
    %c0_i32_7 = arith.constant 0 : i32
    %10 = arith.cmpi ne, %arg1, %c0_i32_7 : i32
    %11 = arith.extui %10 : i1 to i32
    %12 = arith.sitofp %11 : i32 to f32
    %13 = arith.truncf %12 : f32 to bf16
    %14 = vector.broadcast %13 : bf16 to vector<16x4xbf16>
    %15 = arith.mulf %7, %14 : vector<16x4xbf16>
    %c3_i32 = arith.constant 3 : i32
    %16 = arith.cmpi ne, %arg1, %c3_i32 : i32
    %17 = arith.extui %16 : i1 to i32
    %18 = arith.sitofp %17 : i32 to f32
    %19 = arith.truncf %18 : f32 to bf16
    %20 = vector.broadcast %19 : bf16 to vector<16x4xbf16>
    %21 = arith.mulf %9, %20 : vector<16x4xbf16>
    %c0_8 = arith.constant 0 : index
    %c0_9 = arith.constant 0 : index
    %c0_10 = arith.constant 0 : index
    %c0_11 = arith.constant 0 : index
    %22 = vector.load %arg3[%c0_8, %c0_9, %c0_10, %c0_11] : memref<1x4x16x4xbf16, #tpu.memory_space<vmem>>, vector<1x4x16x4xbf16>
    %23 = vector.shape_cast %22 : vector<1x4x16x4xbf16> to vector<4x16x4xbf16>
    %24 = vector.shape_cast %23 : vector<4x16x4xbf16> to vector<64x4xbf16>
    %25 = tpu.concatenate %15, %24, %21 in 0 : vector<16x4xbf16>, vector<64x4xbf16>, vector<16x4xbf16> -> vector<96x4xbf16>
    %c0_i32_12 = arith.constant 0 : i32
    %26 = arith.sitofp %c0_i32_12 : i32 to bf16
    %27 = vector.shape_cast %3 : vector<96x1xi1> to vector<96x1xi1>
    %28 = vector.broadcast %27 : vector<96x1xi1> to vector<96x4xi1>
    %29 = vector.broadcast %26 : bf16 to vector<96x4xbf16>
    %30 = arith.select %28, %25, %29 : vector<96x4xi1>, vector<96x4xbf16>
    %c0_i32_13 = arith.constant 0 : i32
    %31 = arith.sitofp %c0_i32_13 : i32 to bf16
    %32 = vector.shape_cast %5 : vector<96x1xi1> to vector<96x1xi1>
    %33 = vector.broadcast %32 : vector<96x1xi1> to vector<96x4xi1>
    %34 = vector.broadcast %31 : bf16 to vector<96x4xbf16>
    %35 = arith.select %33, %25, %34 : vector<96x4xi1>, vector<96x4xbf16>
    %c0_14 = arith.constant 0 : index
    %c0_15 = arith.constant 0 : index
    %36 = vector.load %arg6[%c0_14, %c0_15] : memref<1x4xf32, #tpu.memory_space<vmem>>, vector<1x4xf32>
    %cst = arith.constant 0.000000e+00 : f32
    %37 = vector.broadcast %cst : f32 to vector<96x4xf32>
    %c0_16 = arith.constant 0 : index
    %c0_17 = arith.constant 0 : index
    %c0_18 = arith.constant 0 : index
    %38 = vector.load %arg5[%c0_16, %c0_17, %c0_18] : memref<9x4x4xbf16, #tpu.memory_space<vmem>>, vector<1x4x4xbf16>
    %39 = vector.shape_cast %38 : vector<1x4x4xbf16> to vector<4x4xbf16>
    %cst_19 = arith.constant dense<0.000000e+00> : vector<96x4xf32>
    %40 = tpu.matmul %30, %39, %cst_19 {dimension_numbers = #tpu.dot_dimension_numbers<[1], [0], [0], [1], [0, 0, 1, 1], [], []>} : vector<96x4xbf16>, vector<4x4xbf16>, vector<96x4xf32> -> vector<96x4xf32>
    %41 = vector.extract_strided_slice %40 {offsets = [95, 0], sizes = [1, 4], strides = [1, 1]} : vector<96x4xf32> to vector<1x4xf32>
    %42 = vector.extract_strided_slice %40 {offsets = [0, 0], sizes = [95, 4], strides = [1, 1]} : vector<96x4xf32> to vector<95x4xf32>
    %43 = tpu.concatenate %41, %42 in 0 : vector<1x4xf32>, vector<95x4xf32> -> vector<96x4xf32>
    %44 = arith.addf %37, %43 : vector<96x4xf32>
    %c1 = arith.constant 1 : index
    %c0_20 = arith.constant 0 : index
    %c0_21 = arith.constant 0 : index
    %45 = vector.load %arg5[%c1, %c0_20, %c0_21] : memref<9x4x4xbf16, #tpu.memory_space<vmem>>, vector<1x4x4xbf16>
    %46 = vector.shape_cast %45 : vector<1x4x4xbf16> to vector<4x4xbf16>
    %cst_22 = arith.constant dense<0.000000e+00> : vector<96x4xf32>
    %47 = tpu.matmul %25, %46, %cst_22 {dimension_numbers = #tpu.dot_dimension_numbers<[1], [0], [0], [1], [0, 0, 1, 1], [], []>} : vector<96x4xbf16>, vector<4x4xbf16>, vector<96x4xf32> -> vector<96x4xf32>
    %48 = arith.addf %44, %47 : vector<96x4xf32>
    %c2 = arith.constant 2 : index
    %c0_23 = arith.constant 0 : index
    %c0_24 = arith.constant 0 : index
    %49 = vector.load %arg5[%c2, %c0_23, %c0_24] : memref<9x4x4xbf16, #tpu.memory_space<vmem>>, vector<1x4x4xbf16>
    %50 = vector.shape_cast %49 : vector<1x4x4xbf16> to vector<4x4xbf16>
    %cst_25 = arith.constant dense<0.000000e+00> : vector<96x4xf32>
    %51 = tpu.matmul %35, %50, %cst_25 {dimension_numbers = #tpu.dot_dimension_numbers<[1], [0], [0], [1], [0, 0, 1, 1], [], []>} : vector<96x4xbf16>, vector<4x4xbf16>, vector<96x4xf32> -> vector<96x4xf32>
    %52 = vector.extract_strided_slice %51 {offsets = [1, 0], sizes = [95, 4], strides = [1, 1]} : vector<96x4xf32> to vector<95x4xf32>
    %53 = vector.extract_strided_slice %51 {offsets = [0, 0], sizes = [1, 4], strides = [1, 1]} : vector<96x4xf32> to vector<1x4xf32>
    %54 = tpu.concatenate %52, %53 in 0 : vector<95x4xf32>, vector<1x4xf32> -> vector<96x4xf32>
    %55 = arith.addf %48, %54 : vector<96x4xf32>
    %c3 = arith.constant 3 : index
    %c0_26 = arith.constant 0 : index
    %c0_27 = arith.constant 0 : index
    %56 = vector.load %arg5[%c3, %c0_26, %c0_27] : memref<9x4x4xbf16, #tpu.memory_space<vmem>>, vector<1x4x4xbf16>
    %57 = vector.shape_cast %56 : vector<1x4x4xbf16> to vector<4x4xbf16>
    %cst_28 = arith.constant dense<0.000000e+00> : vector<96x4xf32>
    %58 = tpu.matmul %30, %57, %cst_28 {dimension_numbers = #tpu.dot_dimension_numbers<[1], [0], [0], [1], [0, 0, 1, 1], [], []>} : vector<96x4xbf16>, vector<4x4xbf16>, vector<96x4xf32> -> vector<96x4xf32>
    %59 = vector.extract_strided_slice %58 {offsets = [15, 0], sizes = [81, 4], strides = [1, 1]} : vector<96x4xf32> to vector<81x4xf32>
    %60 = vector.extract_strided_slice %58 {offsets = [0, 0], sizes = [15, 4], strides = [1, 1]} : vector<96x4xf32> to vector<15x4xf32>
    %61 = tpu.concatenate %59, %60 in 0 : vector<81x4xf32>, vector<15x4xf32> -> vector<96x4xf32>
    %62 = arith.addf %55, %61 : vector<96x4xf32>
    %c4 = arith.constant 4 : index
    %c0_29 = arith.constant 0 : index
    %c0_30 = arith.constant 0 : index
    %63 = vector.load %arg5[%c4, %c0_29, %c0_30] : memref<9x4x4xbf16, #tpu.memory_space<vmem>>, vector<1x4x4xbf16>
    %64 = vector.shape_cast %63 : vector<1x4x4xbf16> to vector<4x4xbf16>
    %cst_31 = arith.constant dense<0.000000e+00> : vector<96x4xf32>
    %65 = tpu.matmul %25, %64, %cst_31 {dimension_numbers = #tpu.dot_dimension_numbers<[1], [0], [0], [1], [0, 0, 1, 1], [], []>} : vector<96x4xbf16>, vector<4x4xbf16>, vector<96x4xf32> -> vector<96x4xf32>
    %66 = vector.extract_strided_slice %65 {offsets = [16, 0], sizes = [80, 4], strides = [1, 1]} : vector<96x4xf32> to vector<80x4xf32>
    %67 = vector.extract_strided_slice %65 {offsets = [0, 0], sizes = [16, 4], strides = [1, 1]} : vector<96x4xf32> to vector<16x4xf32>
    %68 = tpu.concatenate %66, %67 in 0 : vector<80x4xf32>, vector<16x4xf32> -> vector<96x4xf32>
    %69 = arith.addf %62, %68 : vector<96x4xf32>
    %c5 = arith.constant 5 : index
    %c0_32 = arith.constant 0 : index
    %c0_33 = arith.constant 0 : index
    %70 = vector.load %arg5[%c5, %c0_32, %c0_33] : memref<9x4x4xbf16, #tpu.memory_space<vmem>>, vector<1x4x4xbf16>
    %71 = vector.shape_cast %70 : vector<1x4x4xbf16> to vector<4x4xbf16>
    %cst_34 = arith.constant dense<0.000000e+00> : vector<96x4xf32>
    %72 = tpu.matmul %35, %71, %cst_34 {dimension_numbers = #tpu.dot_dimension_numbers<[1], [0], [0], [1], [0, 0, 1, 1], [], []>} : vector<96x4xbf16>, vector<4x4xbf16>, vector<96x4xf32> -> vector<96x4xf32>
    %73 = vector.extract_strided_slice %72 {offsets = [17, 0], sizes = [79, 4], strides = [1, 1]} : vector<96x4xf32> to vector<79x4xf32>
    %74 = vector.extract_strided_slice %72 {offsets = [0, 0], sizes = [17, 4], strides = [1, 1]} : vector<96x4xf32> to vector<17x4xf32>
    %75 = tpu.concatenate %73, %74 in 0 : vector<79x4xf32>, vector<17x4xf32> -> vector<96x4xf32>
    %76 = arith.addf %69, %75 : vector<96x4xf32>
    %c6 = arith.constant 6 : index
    %c0_35 = arith.constant 0 : index
    %c0_36 = arith.constant 0 : index
    %77 = vector.load %arg5[%c6, %c0_35, %c0_36] : memref<9x4x4xbf16, #tpu.memory_space<vmem>>, vector<1x4x4xbf16>
    %78 = vector.shape_cast %77 : vector<1x4x4xbf16> to vector<4x4xbf16>
    %cst_37 = arith.constant dense<0.000000e+00> : vector<96x4xf32>
    %79 = tpu.matmul %30, %78, %cst_37 {dimension_numbers = #tpu.dot_dimension_numbers<[1], [0], [0], [1], [0, 0, 1, 1], [], []>} : vector<96x4xbf16>, vector<4x4xbf16>, vector<96x4xf32> -> vector<96x4xf32>
    %80 = vector.extract_strided_slice %79 {offsets = [31, 0], sizes = [65, 4], strides = [1, 1]} : vector<96x4xf32> to vector<65x4xf32>
    %81 = vector.extract_strided_slice %79 {offsets = [0, 0], sizes = [31, 4], strides = [1, 1]} : vector<96x4xf32> to vector<31x4xf32>
    %82 = tpu.concatenate %80, %81 in 0 : vector<65x4xf32>, vector<31x4xf32> -> vector<96x4xf32>
    %83 = arith.addf %76, %82 : vector<96x4xf32>
    %c7 = arith.constant 7 : index
    %c0_38 = arith.constant 0 : index
    %c0_39 = arith.constant 0 : index
    %84 = vector.load %arg5[%c7, %c0_38, %c0_39] : memref<9x4x4xbf16, #tpu.memory_space<vmem>>, vector<1x4x4xbf16>
    %85 = vector.shape_cast %84 : vector<1x4x4xbf16> to vector<4x4xbf16>
    %cst_40 = arith.constant dense<0.000000e+00> : vector<96x4xf32>
    %86 = tpu.matmul %25, %85, %cst_40 {dimension_numbers = #tpu.dot_dimension_numbers<[1], [0], [0], [1], [0, 0, 1, 1], [], []>} : vector<96x4xbf16>, vector<4x4xbf16>, vector<96x4xf32> -> vector<96x4xf32>
    %87 = vector.extract_strided_slice %86 {offsets = [32, 0], sizes = [64, 4], strides = [1, 1]} : vector<96x4xf32> to vector<64x4xf32>
    %88 = vector.extract_strided_slice %86 {offsets = [0, 0], sizes = [32, 4], strides = [1, 1]} : vector<96x4xf32> to vector<32x4xf32>
    %89 = tpu.concatenate %87, %88 in 0 : vector<64x4xf32>, vector<32x4xf32> -> vector<96x4xf32>
    %90 = arith.addf %83, %89 : vector<96x4xf32>
    %c8 = arith.constant 8 : index
    %c0_41 = arith.constant 0 : index
    %c0_42 = arith.constant 0 : index
    %91 = vector.load %arg5[%c8, %c0_41, %c0_42] : memref<9x4x4xbf16, #tpu.memory_space<vmem>>, vector<1x4x4xbf16>
    %92 = vector.shape_cast %91 : vector<1x4x4xbf16> to vector<4x4xbf16>
    %cst_43 = arith.constant dense<0.000000e+00> : vector<96x4xf32>
    %93 = tpu.matmul %35, %92, %cst_43 {dimension_numbers = #tpu.dot_dimension_numbers<[1], [0], [0], [1], [0, 0, 1, 1], [], []>} : vector<96x4xbf16>, vector<4x4xbf16>, vector<96x4xf32> -> vector<96x4xf32>
    %94 = vector.extract_strided_slice %93 {offsets = [33, 0], sizes = [63, 4], strides = [1, 1]} : vector<96x4xf32> to vector<63x4xf32>
    %95 = vector.extract_strided_slice %93 {offsets = [0, 0], sizes = [33, 4], strides = [1, 1]} : vector<96x4xf32> to vector<33x4xf32>
    %96 = tpu.concatenate %94, %95 in 0 : vector<63x4xf32>, vector<33x4xf32> -> vector<96x4xf32>
    %97 = arith.addf %90, %96 : vector<96x4xf32>
    %98 = vector.extract_strided_slice %97 {offsets = [0, 0], sizes = [64, 4], strides = [1, 1]} : vector<96x4xf32> to vector<64x4xf32>
    %99 = vector.broadcast %36 : vector<1x4xf32> to vector<64x4xf32>
    %100 = arith.addf %98, %99 : vector<64x4xf32>
    %cst_44 = arith.constant 0.000000e+00 : f32
    %101 = vector.broadcast %cst_44 : f32 to vector<64x4xf32>
    %102 = arith.maximumf %100, %101 : vector<64x4xf32>
    %103 = vector.shape_cast %102 : vector<64x4xf32> to vector<4x16x4xf32>
    %104 = arith.truncf %103 : vector<4x16x4xf32> to vector<4x16x4xbf16>
    %c0_45 = arith.constant 0 : index
    %c0_46 = arith.constant 0 : index
    %c0_47 = arith.constant 0 : index
    %c0_48 = arith.constant 0 : index
    %105 = vector.load %arg7[%c0_45, %c0_46, %c0_47, %c0_48] : memref<1x4x16x4xbf16, #tpu.memory_space<vmem>>, vector<1x4x16x4xbf16>
    %106 = vector.shape_cast %105 : vector<1x4x16x4xbf16> to vector<4x16x4xbf16>
    %107 = vector.shape_cast %104 : vector<4x16x4xbf16> to vector<1x4x16x4xbf16>
    tpu.vector_store %arg7[%c0_45, %c0_46, %c0_47, %c0_48], %107 {strides = array<i32>} : memref<1x4x16x4xbf16, #tpu.memory_space<vmem>>, vector<1x4x16x4xbf16>,
    return
  }
  func.func @transform_0(%arg0: i32, %arg1: i32) -> (i32, i32, i32, i32) {
    %c4_i32 = arith.constant 4 : i32
    %0 = arith.muli %arg1, %c4_i32 : i32
    %c1_i32 = arith.constant 1 : i32
    %1 = arith.subi %0, %c1_i32 : i32
    %c0_i32 = arith.constant 0 : i32
    %2 = arith.maxsi %1, %c0_i32 : i32
    %c0_i32_0 = arith.constant 0 : i32
    %c0_i32_1 = arith.constant 0 : i32
    %c0_i32_2 = arith.constant 0 : i32
    return %arg0, %2, %c0_i32_0, %c0_i32_1 : i32, i32, i32, i32
  }
  func.func @transform_1(%arg0: i32, %arg1: i32) -> (i32, i32, i32, i32) {
    %c0_i32 = arith.constant 0 : i32
    %c0_i32_0 = arith.constant 0 : i32
    %c0_i32_1 = arith.constant 0 : i32
    return %arg0, %arg1, %c0_i32, %c0_i32_0 : i32, i32, i32, i32
  }
  func.func @transform_2(%arg0: i32, %arg1: i32) -> (i32, i32, i32, i32) {
    %c4_i32 = arith.constant 4 : i32
    %0 = arith.muli %arg1, %c4_i32 : i32
    %c4_i32_0 = arith.constant 4 : i32
    %1 = arith.addi %0, %c4_i32_0 : i32
    %c15_i32 = arith.constant 15 : i32
    %2 = arith.minsi %1, %c15_i32 : i32
    %c0_i32 = arith.constant 0 : i32
    %c0_i32_1 = arith.constant 0 : i32
    %c0_i32_2 = arith.constant 0 : i32
    return %arg0, %2, %c0_i32, %c0_i32_1 : i32, i32, i32, i32
  }
  func.func @transform_3(%arg0: i32, %arg1: i32) -> (i32, i32, i32) {
    %c0_i32 = arith.constant 0 : i32
    %c0_i32_0 = arith.constant 0 : i32
    %c0_i32_1 = arith.constant 0 : i32
    %c0_i32_2 = arith.constant 0 : i32
    return %c0_i32, %c0_i32_0, %c0_i32_1 : i32, i32, i32
  }
  func.func @transform_4(%arg0: i32, %arg1: i32) -> (i32, i32) {
    %c0_i32 = arith.constant 0 : i32
    %c0_i32_0 = arith.constant 0 : i32
    %c0_i32_1 = arith.constant 0 : i32
    return %c0_i32, %c0_i32_0 : i32, i32
  }
  func.func @transform_5(%arg0: i32, %arg1: i32) -> (i32, i32, i32, i32) {
    %c0_i32 = arith.constant 0 : i32
    %c0_i32_0 = arith.constant 0 : i32
    %c0_i32_1 = arith.constant 0 : i32
    return %arg0, %arg1, %c0_i32, %c0_i32_0 : i32, i32, i32, i32
  }
}

</mosaic_0001>

<llo_original>
// kernel: tpu_custom_call.1
$region0: #{tpu_custom_call.1}
  #allocation0 [shape = 'u32[]', space=smem, size = 0x4, offset = 0x4, fixed_abs, tag = 'smem constant byte address 0x4 - core index']
  #allocation1 [shape = 'u32[72,128]{1,0:T(1,128)}', space=vmem, size = 0x9000, scoped, tag = 'internal scratch']
  %s0 = inlined_call_operand.hbm [shape: f32[96,128], index: 0, kind: input, shape index: {}]
  %s1 = inlined_call_operand.hbm [shape: f32[96,128], index: 1, kind: output, shape index: {}]
  %s2 = sld [smem:[#allocation0]]
  $region18: #{tpu_custom_call.1} parent=0
    _
  %s4 = ssub.s32 1, %s2
  %s5 = scalar_select 0, %s4, %s2
  $region1: #{tpu_custom_call.1} parent=0
    #allocation2 [shape = 'u8[49152]{0}', space=vmem, size = 0xc000, scoped, tag = 'input window, operand 0, single buffered']
    #allocation3 [shape = 's32[1]{0}', space=sflag, size = 0x4, scoped, tag = 'scoped memory for tpu_custom_call.1']
    #allocation4 [shape = 's32[1]{0}', space=sflag, size = 0x4, scoped, tag = 'scoped memory for tpu_custom_call.1']
    #allocation5 [shape = 'u8[49152]{0}', space=vmem, size = 0xc000, scoped, tag = 'output window, operand 0, single buffered']
    %6 = vsyncpa [#allocation3], 0
    %7 = vsyncpa [#allocation4], 0
    // Predicated region
    $region2: #{tpu_custom_call.1} parent=1 // pred_check
      _
    $region3: #{tpu_custom_call.1} parent=1 // pred_check_branch
      %9 = sbr.rel (0) target = $region5
    $region4: #{tpu_custom_call.1} parent=1 // pred_region
      %11 = vsyncadd [#allocation3], 0
      %s12 = sshll.u32 %s0, 4
      %s13 = int_to_ptr.hbm [resolvable:$true] %s12
      %s14 = sshll.u32 [#allocation2], 4
      %s15 = int_to_ptr.vmem [resolvable:$true] %s14
      %20 = dma.hbm_to_vmem [thread:$0]  %s13, 1536, %s15, [#allocation3], 128, 128, 8
    $region5: #{tpu_custom_call.1} parent=1 // pred_fallthru
      _
    // Predicated region
    $region6: #{tpu_custom_call.1} parent=1 // pred_check
      _
    $region7: #{tpu_custom_call.1} parent=1 // pred_check_branch
      %22 = sbr.rel (0) target = $region9
    $region8: #{tpu_custom_call.1} parent=1 // pred_region
      %24 = dma.done [#allocation3], 1536
    $region9: #{tpu_custom_call.1} parent=1 // pred_fallthru
      _
    %v25 = vld [vmem:[#allocation2] sm:$0xff]
    %v26 = vld [vmem:[#allocation2 + $0x8] sm:$0xff]
    %v27 = vld [vmem:[#allocation2 + $0x10] sm:$0xff]
    %v28 = vld [vmem:[#allocation2 + $0x18] sm:$0xff]
    %v29 = vld [vmem:[#allocation2 + $0x20] sm:$0xff]
    %v30 = vld [vmem:[#allocation2 + $0x28] sm:$0xff]
    %v31 = vld [vmem:[#allocation2 + $0x30] sm:$0xff]
    %v32 = vld [vmem:[#allocation2 + $0x38] sm:$0xff]
    %v33 = vld [vmem:[#allocation2 + $0x40] sm:$0xff]
    %v34 = vld [vmem:[#allocation2 + $0x48] sm:$0xff]
    %v35 = vld [vmem:[#allocation2 + $0x50] sm:$0xff]
    %v36 = vld [vmem:[#allocation2 + $0x58] sm:$0xff]
    %v37 = vrot.slane %v25, 5
    %v38 = vrot.slane %v26, 5
    %v39 = vrot.slane %v27, 5
    %v40 = vrot.slane %v28, 5
    %v41 = vrot.slane %v29, 5
    %v42 = vrot.slane %v30, 5
    %v43 = vrot.slane %v31, 5
    %v44 = vrot.slane %v32, 5
    %v45 = vrot.slane %v33, 5
    %v46 = vrot.slane %v34, 5
    %v47 = vrot.slane %v35, 5
    %v48 = vrot.slane %v36, 5
    %v49 = vlaneseq
    %v50 = vshrl.u32 %v49, 7
    %vm51 = vcmp.lt.s32.totalorder %v50, 3
    %v52 = vsel %vm51, %v47, %v48
    %v53 = vsel %vm51, %v46, %v47
    %v54 = vsel %vm51, %v45, %v46
    %v55 = vsel %vm51, %v44, %v45
    %v56 = vsel %vm51, %v43, %v44
    %v57 = vsel %vm51, %v42, %v43
    %v58 = vsel %vm51, %v41, %v42
    %v59 = vsel %vm51, %v40, %v41
    %v60 = vsel %vm51, %v39, %v40
    %v61 = vsel %vm51, %v38, %v39
    %v62 = vsel %vm51, %v37, %v38
    %v63 = vsel %vm51, %v48, %v37
    %64 = vst [vmem:[#allocation5] sm:$0xff] %v63
    %65 = vst [vmem:[#allocation5 + $0x8] sm:$0xff] %v62
    %66 = vst [vmem:[#allocation5 + $0x10] sm:$0xff] %v61
    %67 = vst [vmem:[#allocation5 + $0x18] sm:$0xff] %v60
    %68 = vst [vmem:[#allocation5 + $0x20] sm:$0xff] %v59
    %69 = vst [vmem:[#allocation5 + $0x28] sm:$0xff] %v58
    %70 = vst [vmem:[#allocation5 + $0x30] sm:$0xff] %v57
    %71 = vst [vmem:[#allocation5 + $0x38] sm:$0xff] %v56
    %72 = vst [vmem:[#allocation5 + $0x40] sm:$0xff] %v55
    %73 = vst [vmem:[#allocation5 + $0x48] sm:$0xff] %v54
    %74 = vst [vmem:[#allocation5 + $0x50] sm:$0xff] %v53
    %75 = vst [vmem:[#allocation5 + $0x58] sm:$0xff] %v52
    // Predicated region
    $region10: #{tpu_custom_call.1} parent=1 // pred_check
      _
    $region11: #{tpu_custom_call.1} parent=1 // pred_check_branch
      %77 = sbr.rel (0) target = $region13
    $region12: #{tpu_custom_call.1} parent=1 // pred_region
      %79 = vsyncadd [#allocation4], 0
      %s80 = sshll.u32 [#allocation5], 4
      %s81 = int_to_ptr.vmem [resolvable:$true] %s80
      %s82 = sshll.u32 %s1, 4
      %s83 = int_to_ptr.hbm [resolvable:$true] %s82
      %88 = dma.vmem_to_hbm [thread:$0]  %s81, 1536, %s83, [#allocation4], 128, 128, 8
    $region13: #{tpu_custom_call.1} parent=1 // pred_fallthru
      _
    // Predicated region
    $region14: #{tpu_custom_call.1} parent=1 // pred_check
      _
    $region15: #{tpu_custom_call.1} parent=1 // pred_check_branch
      %90 = sbr.rel (0) target = $region17
    $region16: #{tpu_custom_call.1} parent=1 // pred_region
      %92 = dma.done [#allocation4], 1536
    $region17: #{tpu_custom_call.1} parent=1 // pred_fallthru
      _
    %93 = vsyncpa [#allocation3], 1
    %94 = vsyncpa [#allocation4], 1

// kernel: tpu_custom_call.1
$region0: #{tpu_custom_call.1}
  #allocation0 [shape = 'u32[]', space=smem, size = 0x4, offset = 0x4, fixed_abs, tag = 'smem constant byte address 0x4 - core index']
  #allocation1 [shape = 'u32[72,128]{1,0:T(1,128)}', space=vmem, size = 0x9000, scoped, tag = 'internal scratch']
  %s0 = inlined_call_operand.hbm [shape: f32[8,128], index: 0, kind: input, shape index: {}]
  %s1 = inlined_call_operand.hbm [shape: f32[8,128], index: 1, kind: output, shape index: {}]
  %s2 = sld [smem:[#allocation0]]
  $region18: #{tpu_custom_call.1} parent=0
    _
  %s4 = ssub.s32 1, %s2
  %s5 = scalar_select 0, %s4, %s2
  $region1: #{tpu_custom_call.1} parent=0
    #allocation2 [shape = 'u8[4096]{0}', space=vmem, size = 0x1000, scoped, tag = 'input window, operand 0, single buffered']
    #allocation3 [shape = 's32[1]{0}', space=sflag, size = 0x4, scoped, tag = 'scoped memory for tpu_custom_call.1']
    #allocation4 [shape = 's32[1]{0}', space=sflag, size = 0x4, scoped, tag = 'scoped memory for tpu_custom_call.1']
    #allocation5 [shape = 'u8[4096]{0}', space=vmem, size = 0x1000, scoped, tag = 'output window, operand 0, single buffered']
    %6 = vsyncpa [#allocation3], 0
    %7 = vsyncpa [#allocation4], 0
    // Predicated region
    $region2: #{tpu_custom_call.1} parent=1 // pred_check
      _
    $region3: #{tpu_custom_call.1} parent=1 // pred_check_branch
      %9 = sbr.rel (0) target = $region5
    $region4: #{tpu_custom_call.1} parent=1 // pred_region
      %11 = vsyncadd [#allocation3], 0
      %s13 = sshll.u32 %s0, 4
      %s14 = int_to_ptr.hbm [resolvable:$true] %s13
      %s15 = sshll.u32 [#allocation2], 4
      %s16 = int_to_ptr.vmem [resolvable:$true] %s15
      %18 = dma.hbm_to_vmem [thread:$0]  %s14, 128, %s16, [#allocation3]
    $region5: #{tpu_custom_call.1} parent=1 // pred_fallthru
      _
    // Predicated region
    $region6: #{tpu_custom_call.1} parent=1 // pred_check
      _
    $region7: #{tpu_custom_call.1} parent=1 // pred_check_branch
      %20 = sbr.rel (0) target = $region9
    $region8: #{tpu_custom_call.1} parent=1 // pred_region
      %22 = dma.done [#allocation3], 128
    $region9: #{tpu_custom_call.1} parent=1 // pred_fallthru
      _
    %v23 = vld [vmem:[#allocation2] sm:$0xff]
    %24 = vst [vmem:[#allocation5] sm:$0xff] %v23
    // Predicated region
    $region10: #{tpu_custom_call.1} parent=1 // pred_check
      _
    $region11: #{tpu_custom_call.1} parent=1 // pred_check_branch
      %26 = sbr.rel (0) target = $region13
    $region12: #{tpu_custom_call.1} parent=1 // pred_region
      %28 = vsyncadd [#allocation4], 0
      %s30 = sshll.u32 [#allocation5], 4
      %s31 = int_to_ptr.vmem [resolvable:$true] %s30
      %s32 = sshll.u32 %s1, 4
      %s33 = int_to_ptr.hbm [resolvable:$true] %s32
      %35 = dma.vmem_to_hbm [thread:$0]  %s31, 128, %s33, [#allocation4]
    $region13: #{tpu_custom_call.1} parent=1 // pred_fallthru
      _
    // Predicated region
    $region14: #{tpu_custom_call.1} parent=1 // pred_check
      _
    $region15: #{tpu_custom_call.1} parent=1 // pred_check_branch
      %37 = sbr.rel (0) target = $region17
    $region16: #{tpu_custom_call.1} parent=1 // pred_region
      %39 = dma.done [#allocation4], 128
    $region17: #{tpu_custom_call.1} parent=1 // pred_fallthru
      _
    %40 = vsyncpa [#allocation3], 1
    %41 = vsyncpa [#allocation4], 1

// kernel: decoder_block_forward_nchw.3
$region0: #{decoder_block_forward_nchw.3}
  #allocation0 [shape = 'u32[]', space=smem, size = 0x4, offset = 0x4, fixed_abs, tag = 'smem constant byte address 0x4 - core index']
  #allocation1 [shape = 'u32[72,128]{1,0:T(1,128)}', space=vmem, size = 0x9000, scoped, tag = 'internal scratch']
  %s0 = inlined_call_operand.vmem [shape: bf16[2,8,8,8], index: 0, kind: input, shape index: {}]
  %s1 = inlined_call_operand.vmem [shape: bf16[4,8,4], index: 1, kind: input, shape index: {}]
  %s2 = inlined_call_operand.vmem [shape: f32[1,4], index: 2, kind: input, shape index: {}]
  %s3 = inlined_call_operand.vmem [shape: bf16[2,16,16,4], index: 3, kind: output, shape index: {}]
  %s4 = sld [smem:[#allocation0]]
  $region45: #{decoder_block_forward_nchw.3} parent=0
    _
  %s6 = ssub.s32 1, %s4
  %s7 = scalar_select 0, %s6, %s4
  loop: start=0, step=1, limit=10
  $region2: #{decoder_block_forward_nchw.3} parent=0 // loop_pre_header
    _
  $region3: #{decoder_block_forward_nchw.3} parent=0 // loop_header
    %s9 = sphi 0, %s13
    %p10 = scmp.ge.s32.totalorder %s9, 10
    %s16 = sphi 0, %s28
    %s17 = sphi 0, %s24
    %s18 = sphi 0, %s16
    %s19 = sphi 0, %s17
    %s20 = sphi 0, %s18
    %s21 = sphi 0, %s19
    %s33 = sphi 0, %s35
    %s36 = sphi 0, %s33
    %s37 = sphi 0, %s36
    %s53 = sphi 0, %s37
    %s57 = sphi 0, %s57
    %s59 = sphi 0, %s57
    %s60 = sphi 0, %s59
    %s74 = sphi 0, %s60
    %s78 = sphi 0, %s78
    %s80 = sphi 0, %s78
    %s81 = sphi 0, %s80
    %s95 = sphi 0, %s81
    %s103 = sphi 0, %s105
    %s106 = sphi 0, %s103
    %s107 = sphi 0, %s106
    %s123 = sphi 0, %s107
  $region4: #{decoder_block_forward_nchw.3} parent=0 // loop_header_branch
    %12 = sbr.rel (%p10) target = $region8
  $region5: #{decoder_block_forward_nchw.3} parent=0 // loop_body
    %s14 = ssub.s32 %s9, 1
    %s15 = ssub.s32 %s9, 2
    %s22 = sadd.s32 1, %s17
    %p23 = scmp.ge.s32.totalorder %s22, 4
    %s24 = scalar_select %p23, 0, %s22
    %s25 = sadd.s32 1, %s16
    %s26 = scalar_select %p23, %s25, %s16
    %p27 = scmp.ge.s32.totalorder %s26, 2
    %s28 = scalar_select %p27, 0, %s26
    %s29 = ssub.s32 %s16, %s28
    %s30 = ssub.s32 %s17, %s24
    %s31 = sor.u32 %s29, %s30
    %p32 = scmp.eq.s32.totalorder %s31, 0
    %s34 = sadd.s32 %s33, 1
    %s35 = scalar_select %p32, %s33, %s34
    %p38 = pneg %p32
    %p39 = scmp.eq.s32.totalorder %s9, 7
    %p40 = por %p38, %p39
    %p41 = scmp.ne.s32.totalorder %s33, %s36
    %p42 = scmp.eq.s32.totalorder %s9, 0
    %p43 = por %p41, %p42
    %p44 = scmp.ne.s32.totalorder %s33, %s36
    %p45 = scmp.eq.s32.totalorder %s14, 7
    %p46 = por %p44, %p45
    %p47 = scmp.ne.s32.totalorder %s36, %s37
    %p48 = scmp.eq.s32.totalorder %s14, 0
    %p49 = por %p47, %p48
    %p50 = scmp.ne.s32.totalorder %s36, %s37
    %p51 = scmp.eq.s32.totalorder %s15, 7
    %p52 = por %p50, %p51
    %p54 = scmp.ne.s32.totalorder %s37, %s53
    %p55 = scmp.eq.s32.totalorder %s15, 0
    %p56 = por %p54, %p55
    %s58 = sadd.s32 %s57, 1
    %p61 = scmp.eq.s32.totalorder %s9, 7
    %p62 = scmp.ne.s32.totalorder %s57, %s59
    %p63 = scmp.eq.s32.totalorder %s9, 0
    %p64 = por %p62, %p63
    %p65 = scmp.ne.s32.totalorder %s57, %s59
    %p66 = scmp.eq.s32.totalorder %s14, 7
    %p67 = por %p65, %p66
    %p68 = scmp.ne.s32.totalorder %s59, %s60
    %p69 = scmp.eq.s32.totalorder %s14, 0
    %p70 = por %p68, %p69
    %p71 = scmp.ne.s32.totalorder %s59, %s60
    %p72 = scmp.eq.s32.totalorder %s15, 7
    %p73 = por %p71, %p72
    %p75 = scmp.ne.s32.totalorder %s60, %s74
    %p76 = scmp.eq.s32.totalorder %s15, 0
    %p77 = por %p75, %p76
    %s79 = sadd.s32 %s78, 1
    %p82 = scmp.eq.s32.totalorder %s9, 7
    %p83 = scmp.ne.s32.totalorder %s78, %s80
    %p84 = scmp.eq.s32.totalorder %s9, 0
    %p85 = por %p83, %p84
    %p86 = scmp.ne.s32.totalorder %s78, %s80
    %p87 = scmp.eq.s32.totalorder %s14, 7
    %p88 = por %p86, %p87
    %p89 = scmp.ne.s32.totalorder %s80, %s81
    %p90 = scmp.eq.s32.totalorder %s14, 0
    %p91 = por %p89, %p90
    %p92 = scmp.ne.s32.totalorder %s80, %s81
    %p93 = scmp.eq.s32.totalorder %s15, 7
    %p94 = por %p92, %p93
    %p96 = scmp.ne.s32.totalorder %s81, %s95
    %p97 = scmp.eq.s32.totalorder %s15, 0
    %p98 = por %p96, %p97
    %s99 = ssub.s32 %s16, %s28
    %s100 = ssub.s32 %s17, %s24
    %s101 = sor.u32 %s99, %s100
    %p102 = scmp.eq.s32.totalorder %s101, 0
    %s104 = sadd.s32 %s103, 1
    %s105 = scalar_select %p102, %s103, %s104
    %p108 = pneg %p102
    %p109 = scmp.eq.s32.totalorder %s9, 7
    %p110 = por %p108, %p109
    %p111 = scmp.ne.s32.totalorder %s103, %s106
    %p112 = scmp.eq.s32.totalorder %s9, 0
    %p113 = por %p111, %p112
    %p114 = scmp.ne.s32.totalorder %s103, %s106
    %p115 = scmp.eq.s32.totalorder %s14, 7
    %p116 = por %p114, %p115
    %p117 = scmp.ne.s32.totalorder %s106, %s107
    %p118 = scmp.eq.s32.totalorder %s14, 0
    %p119 = por %p117, %p118
    %p120 = scmp.ne.s32.totalorder %s106, %s107
    %p121 = scmp.eq.s32.totalorder %s15, 7
    %p122 = por %p120, %p121
    %p124 = scmp.ne.s32.totalorder %s107, %s123
    %p125 = scmp.eq.s32.totalorder %s15, 0
    %p126 = por %p124, %p125
    %p127 = scmp.le.s32.totalorder 1, %s9
    %p128 = scmp.lt.s32.totalorder %s9, 9
    %p129 = pnand %p127, %p128
    %p130 = pneg %p129
    // Predicated region
    $region9: #{decoder_block_forward_nchw.3} parent=5 // pred_check
      _
    $region10: #{decoder_block_forward_nchw.3} parent=5 // pred_check_branch
      %132 = sbr.rel (%p129) target = $region12
    $region11: #{decoder_block_forward_nchw.3} parent=5 // pred_region
      %s133 = ssub.s32 %s9, 1
      // Predicated region
      $region13: #{decoder_block_forward_nchw.3} parent=11 // pred_check
        %p134 = pneg %p70
      $region14: #{decoder_block_forward_nchw.3} parent=11 // pred_check_branch
        %136 = sbr.rel (%p134) target = $region16
      $region15: #{decoder_block_forward_nchw.3} parent=11 // pred_region
        _
      $region16: #{decoder_block_forward_nchw.3} parent=11 // pred_fallthru
        _
      // Predicated region
      $region17: #{decoder_block_forward_nchw.3} parent=11 // pred_check
        %p137 = pneg %p91
      $region18: #{decoder_block_forward_nchw.3} parent=11 // pred_check_branch
        %139 = sbr.rel (%p137) target = $region20
      $region19: #{decoder_block_forward_nchw.3} parent=11 // pred_region
        _
      $region20: #{decoder_block_forward_nchw.3} parent=11 // pred_fallthru
        _
    $region12: #{decoder_block_forward_nchw.3} parent=5 // pred_fallthru
      _
    %p140 = scmp.lt.s32.totalorder %s9, 8
    // Predicated region
    $region21: #{decoder_block_forward_nchw.3} parent=5 // pred_check
      %p141 = pneg %p140
    $region22: #{decoder_block_forward_nchw.3} parent=5 // pred_check_branch
      %143 = sbr.rel (%p141) target = $region24
    $region23: #{decoder_block_forward_nchw.3} parent=5 // pred_region
      // Predicated region
      $region25: #{decoder_block_forward_nchw.3} parent=23 // pred_check
        %p144 = pneg %p43
      $region26: #{decoder_block_forward_nchw.3} parent=23 // pred_check_branch
        %146 = sbr.rel (%p144) target = $region28
      $region27: #{decoder_block_forward_nchw.3} parent=23 // pred_region
        %s147 = smul.u32 2, %s17
        %p148 = scmp.lt.s32.totalorder %s16, 1
        %s149 = scalar_select %p148, %s16, 1
        %p150 = scmp.lt.s32.totalorder %s147, 7
        %s151 = scalar_select %p150, %s147, 7
        %s152 = smul.addr %s149, 8
        %s153 = sadd.s32 %s151, %s152
        %s154 = smul.addr %s153, 4
        %s155 = scalar_lea.vmem %s0, %s154
        %s156 = smul.u32 2, %s17
      $region28: #{decoder_block_forward_nchw.3} parent=23 // pred_fallthru
        _
    $region24: #{decoder_block_forward_nchw.3} parent=5 // pred_fallthru
      _
    %p157 = scmp.le.s32.totalorder 1, %s9
    %p158 = scmp.lt.s32.totalorder %s9, 9
    %p159 = pnand %p157, %p158
    %p160 = pneg %p159
    // Predicated region
    $region29: #{decoder_block_forward_nchw.3} parent=5 // pred_check
      _
    $region30: #{decoder_block_forward_nchw.3} parent=5 // pred_check_branch
      %162 = sbr.rel (%p159) target = $region32
    $region31: #{decoder_block_forward_nchw.3} parent=5 // pred_region
      %s163 = ssub.s32 %s9, 1
      %s164 = smul.u32 2, %s19
      %p165 = scmp.lt.s32.totalorder %s18, 1
      %s166 = scalar_select %p165, %s18, 1
      %p167 = scmp.lt.s32.totalorder %s164, 7
      %s168 = scalar_select %p167, %s164, 7
      %s169 = smul.addr %s166, 8
      %s170 = sadd.s32 %s168, %s169
      %s171 = smul.addr %s170, 4
      %s172 = scalar_lea.vmem %s0, %s171
      %p173 = pneg %p49
      %p174 = pneg %p46
      %p175 = pneg %p70
      %p176 = pneg %p67
      %p177 = pneg %p91
      %p178 = pneg %p88
      %p179 = pneg %p119
      %p180 = pneg %p116
      %s181 = smul.u32 4, %s19
      %p182 = scmp.lt.s32.totalorder %s18, 1
      %s183 = scalar_select %p182, %s18, 1
      %p184 = scmp.lt.s32.totalorder %s181, 15
      %s185 = scalar_select %p184, %s181, 15
      %s186 = smul.addr %s185, 2
      %s187 = smul.addr %s183, 32
      %s188 = sadd.s32 %s186, %s187
      %s189 = smul.addr %s188, 4
      %s190 = scalar_lea.vmem %s3, %s189
      %s191 = smul.u32 2, %s19
      %p192 = scmp.lt.s32.totalorder %s18, 1
      %s193 = scalar_select %p192, %s18, 1
      %p194 = scmp.lt.s32.totalorder %s191, 7
      %s195 = scalar_select %p194, %s191, 7
      %s196 = smul.addr %s193, 8
      %s197 = sadd.s32 %s195, %s196
      %s198 = smul.addr %s197, 4
      %s199 = scalar_lea.vmem %s0, %s198
      %s200 = smul.u32 2, %s19
      %s201 = smul.u32 4, %s19
      %p202 = scmp.lt.s32.totalorder %s18, 1
      %s203 = scalar_select %p202, %s18, 1
      %p204 = scmp.lt.s32.totalorder %s201, 15
      %s205 = scalar_select %p204, %s201, 15
      %s206 = smul.addr %s205, 2
      %s207 = smul.addr %s203, 32
      %s208 = sadd.s32 %s206, %s207
      %s209 = smul.addr %s208, 4
      %s210 = scalar_lea.vmem %s3, %s209
      %s211 = smul.u32 4, %s19
      %v213 = vld [vmem:[%s199] sm:$0xf]
      %v214 = vld [vmem:[%s199 + $0x4] sm:$0xf]
      %v215 = vld [vmem:[%s2] sm:$0x1]
      %v216 = vld [vmem:[%s1] sm:$0xf]
      %v218 = vperm.slane %v215, 0
      %v222 = vunpack.c.l.b16 %v213
      %v223 = vunpack.c.l.b16 %v214
      %v224 = vpack.c.b16 %v223, %v222
      %vm225 = vcmask 64512
      %v227 = vsel %vm225, %v224, 0
      %vm229 = vcmask 1043456
      %v231 = vsel %vm229, %v216, 0
      %233 = vmatpush.bf16.msra.mxu0 0
      %234 = vmatpush.bf16.msra.mxu0 0
      %235 = vmatpush.bf16.msra.mxu0 0
      %236 = vmatpush.bf16.msra.mxu0 0
      %237 = vmatpush.bf16.msra.mxu0 0
      %238 = vmatpush.bf16.msra.mxu0 0
      %239 = vmatpush.bf16.msra.mxu0 0
      %240 = vmatpush.bf16.msra.mxu0 %v231
      %241 = vmatmul.bf16.gmra.mxu0 %v227
      %v242 = vpop.f32.mrf.mxu0
      %v243 = vadd.f32 %v218, %v242
      %v244 = vpop.f32.mrf.mxu0
      %v245 = vadd.f32 %v218, %v244
      %246 = vdwg.mxu0
      %s247 = scalar_lea.vmem %s1, 4
      %v248 = vld [vmem:[%s247] sm:$0xf]
      %v250 = vsel %vm229, %v248, 0
      %252 = vmatpush.bf16.msra.mxu0 0
      %253 = vmatpush.bf16.msra.mxu0 0
      %254 = vmatpush.bf16.msra.mxu0 0
      %255 = vmatpush.bf16.msra.mxu0 0
      %256 = vmatpush.bf16.msra.mxu0 0
      %257 = vmatpush.bf16.msra.mxu0 0
      %258 = vmatpush.bf16.msra.mxu0 0
      %259 = vmatpush.bf16.msra.mxu0 %v250
      %260 = vmatmul.bf16.gmra.mxu0 %v227
      %v261 = vpop.f32.mrf.mxu0
      %v262 = vadd.f32 %v218, %v261
      %v263 = vpop.f32.mrf.mxu0
      %v264 = vadd.f32 %v218, %v263
      %265 = vdwg.mxu0
      %v268 = vrot.slane %v243, 1
      %v269 = vrot.slane %v243, 2
      %v270 = vrot.slane %v243, 3
      %v271 = vrot.slane %v243, 4
      %v272 = vrot.slane %v243, 5
      %v273 = vrot.slane %v243, 6
      %v274 = vrot.slane %v243, 7
      %v275 = vrot.slane %v245, 1
      %v276 = vrot.slane %v245, 2
      %v277 = vrot.slane %v245, 3
      %v278 = vrot.slane %v245, 4
      %v279 = vrot.slane %v245, 5
      %v280 = vrot.slane %v245, 6
      %v281 = vrot.slane %v245, 7
      %v298 = vrot.slane %v262, 1
      %v299 = vrot.slane %v262, 2
      %v300 = vrot.slane %v262, 3
      %v301 = vrot.slane %v262, 4
      %v302 = vrot.slane %v262, 5
      %v303 = vrot.slane %v262, 6
      %v304 = vrot.slane %v262, 7
      %v305 = vrot.slane %v264, 1
      %v306 = vrot.slane %v264, 2
      %v307 = vrot.slane %v264, 3
      %v308 = vrot.slane %v264, 4
      %v309 = vrot.slane %v264, 5
      %v310 = vrot.slane %v264, 6
      %v311 = vrot.slane %v264, 7
      %v312 = vperm.slane %v262, 0
      %v313 = vperm.slane %v298, 0
      %v314 = vperm.slane %v299, 0
      %v315 = vperm.slane %v300, 0
      %v316 = vperm.slane %v301, 0
      %v317 = vperm.slane %v302, 0
      %v318 = vperm.slane %v303, 0
      %v319 = vperm.slane %v304, 0
      %v320 = vperm.slane %v264, 0
      %v321 = vperm.slane %v305, 0
      %v322 = vperm.slane %v306, 0
      %v323 = vperm.slane %v307, 0
      %v324 = vperm.slane %v308, 0
      %v325 = vperm.slane %v309, 0
      %v326 = vperm.slane %v310, 0
      %v327 = vperm.slane %v311, 0
      %vm344 = vcmask 1040384
      %v345 = vsel %vm344, %v243, %v312
      %v346 = vsel %vm344, %v268, %v313
      %v347 = vsel %vm344, %v269, %v314
      %v348 = vsel %vm344, %v270, %v315
      %v349 = vsel %vm344, %v271, %v316
      %v350 = vsel %vm344, %v272, %v317
      %v351 = vsel %vm344, %v273, %v318
      %v352 = vsel %vm344, %v274, %v319
      %v353 = vsel %vm344, %v245, %v320
      %v354 = vsel %vm344, %v275, %v321
      %v355 = vsel %vm344, %v276, %v322
      %v356 = vsel %vm344, %v277, %v323
      %v357 = vsel %vm344, %v278, %v324
      %v358 = vsel %vm344, %v279, %v325
      %v359 = vsel %vm344, %v280, %v326
      %v360 = vsel %vm344, %v281, %v327
      %s361 = scalar_lea.vmem %s1, 8
      %v362 = vld [vmem:[%s361] sm:$0xf]
      %v364 = vsel %vm229, %v362, 0
      %366 = vmatpush.bf16.msra.mxu0 0
      %367 = vmatpush.bf16.msra.mxu0 0
      %368 = vmatpush.bf16.msra.mxu0 0
      %369 = vmatpush.bf16.msra.mxu0 0
      %370 = vmatpush.bf16.msra.mxu0 0
      %371 = vmatpush.bf16.msra.mxu0 0
      %372 = vmatpush.bf16.msra.mxu0 0
      %373 = vmatpush.bf16.msra.mxu0 %v364
      %374 = vmatmul.bf16.gmra.mxu0 %v227
      %v375 = vpop.f32.mrf.mxu0
      %v376 = vadd.f32 %v218, %v375
      %v377 = vpop.f32.mrf.mxu0
      %v378 = vadd.f32 %v218, %v377
      %379 = vdwg.mxu0
      %s380 = scalar_lea.vmem %s1, 12
      %v381 = vld [vmem:[%s380] sm:$0xf]
      %v383 = vsel %vm229, %v381, 0
      %385 = vmatpush.bf16.msra.mxu0 0
      %386 = vmatpush.bf16.msra.mxu0 0
      %387 = vmatpush.bf16.msra.mxu0 0
      %388 = vmatpush.bf16.msra.mxu0 0
      %389 = vmatpush.bf16.msra.mxu0 0
      %390 = vmatpush.bf16.msra.mxu0 0
      %391 = vmatpush.bf16.msra.mxu0 0
      %392 = vmatpush.bf16.msra.mxu0 %v383
      %393 = vmatmul.bf16.gmra.mxu0 %v227
      %v394 = vpop.f32.mrf.mxu0
      %v395 = vadd.f32 %v218, %v394
      %v396 = vpop.f32.mrf.mxu0
      %v397 = vadd.f32 %v218, %v396
      %398 = vdwg.mxu0
      %v401 = vrot.slane %v376, 1
      %v402 = vrot.slane %v376, 2
      %v403 = vrot.slane %v376, 3
      %v404 = vrot.slane %v376, 4
      %v405 = vrot.slane %v376, 5
      %v406 = vrot.slane %v376, 6
      %v407 = vrot.slane %v376, 7
      %v408 = vrot.slane %v378, 1
      %v409 = vrot.slane %v378, 2
      %v410 = vrot.slane %v378, 3
      %v411 = vrot.slane %v378, 4
      %v412 = vrot.slane %v378, 5
      %v413 = vrot.slane %v378, 6
      %v414 = vrot.slane %v378, 7
      %v431 = vrot.slane %v395, 1
      %v432 = vrot.slane %v395, 2
      %v433 = vrot.slane %v395, 3
      %v434 = vrot.slane %v395, 4
      %v435 = vrot.slane %v395, 5
      %v436 = vrot.slane %v395, 6
      %v437 = vrot.slane %v395, 7
      %v438 = vrot.slane %v397, 1
      %v439 = vrot.slane %v397, 2
      %v440 = vrot.slane %v397, 3
      %v441 = vrot.slane %v397, 4
      %v442 = vrot.slane %v397, 5
      %v443 = vrot.slane %v397, 6
      %v444 = vrot.slane %v397, 7
      %v445 = vperm.slane %v395, 0
      %v446 = vperm.slane %v431, 0
      %v447 = vperm.slane %v432, 0
      %v448 = vperm.slane %v433, 0
      %v449 = vperm.slane %v434, 0
      %v450 = vperm.slane %v435, 0
      %v451 = vperm.slane %v436, 0
      %v452 = vperm.slane %v437, 0
      %v453 = vperm.slane %v397, 0
      %v454 = vperm.slane %v438, 0
      %v455 = vperm.slane %v439, 0
      %v456 = vperm.slane %v440, 0
      %v457 = vperm.slane %v441, 0
      %v458 = vperm.slane %v442, 0
      %v459 = vperm.slane %v443, 0
      %v460 = vperm.slane %v444, 0
      %v477 = vsel %vm344, %v376, %v445
      %v478 = vsel %vm344, %v401, %v446
      %v479 = vsel %vm344, %v402, %v447
      %v480 = vsel %vm344, %v403, %v448
      %v481 = vsel %vm344, %v404, %v449
      %v482 = vsel %vm344, %v405, %v450
      %v483 = vsel %vm344, %v406, %v451
      %v484 = vsel %vm344, %v407, %v452
      %v485 = vsel %vm344, %v378, %v453
      %v486 = vsel %vm344, %v408, %v454
      %v487 = vsel %vm344, %v409, %v455
      %v488 = vsel %vm344, %v410, %v456
      %v489 = vsel %vm344, %v411, %v457
      %v490 = vsel %vm344, %v412, %v458
      %v491 = vsel %vm344, %v413, %v459
      %v492 = vsel %vm344, %v414, %v460
      %525 = vst [vmem:[#allocation1] ss:$4 sm:$0xff] %v345
      %s526 = scalar_lea.vmem [#allocation1], 1
      %527 = vst [vmem:[%s526] ss:$4 sm:$0xff] %v346
      %s528 = scalar_lea.vmem [#allocation1], 2
      %529 = vst [vmem:[%s528] ss:$4 sm:$0xff] %v347
      %s530 = scalar_lea.vmem [#allocation1], 3
      %531 = vst [vmem:[%s530] ss:$4 sm:$0xff] %v348
      %s532 = scalar_lea.vmem [#allocation1], 32
      %533 = vst [vmem:[%s532] ss:$4 sm:$0xff] %v349
      %s534 = scalar_lea.vmem [#allocation1], 33
      %535 = vst [vmem:[%s534] ss:$4 sm:$0xff] %v350
      %s536 = scalar_lea.vmem [#allocation1], 34
      %537 = vst [vmem:[%s536] ss:$4 sm:$0xff] %v351
      %s538 = scalar_lea.vmem [#allocation1], 35
      %539 = vst [vmem:[%s538] ss:$4 sm:$0xff] %v352
      %v540 = vld.sshfl [vmem:[#allocation1] sm:$0xff pattern:$0x73625140]
      %v541 = vld.sshfl [vmem:[#allocation1 + $0x20] sm:$0xff pattern:$0x73625140]
      %542 = vst [vmem:[#allocation1] ss:$4 sm:$0xff] %v477
      %543 = vst [vmem:[%s526] ss:$4 sm:$0xff] %v478
      %544 = vst [vmem:[%s528] ss:$4 sm:$0xff] %v479
      %545 = vst [vmem:[%s530] ss:$4 sm:$0xff] %v480
      %546 = vst [vmem:[%s532] ss:$4 sm:$0xff] %v481
      %547 = vst [vmem:[%s534] ss:$4 sm:$0xff] %v482
      %548 = vst [vmem:[%s536] ss:$4 sm:$0xff] %v483
      %549 = vst [vmem:[%s538] ss:$4 sm:$0xff] %v484
      %v550 = vld.sshfl [vmem:[#allocation1] sm:$0xff pattern:$0x73625140]
      %v551 = vld.sshfl [vmem:[#allocation1 + $0x20] sm:$0xff pattern:$0x73625140]
      %552 = vst [vmem:[#allocation1] ss:$4 sm:$0xff] %v353
      %553 = vst [vmem:[%s526] ss:$4 sm:$0xff] %v354
      %554 = vst [vmem:[%s528] ss:$4 sm:$0xff] %v355
      %555 = vst [vmem:[%s530] ss:$4 sm:$0xff] %v356
      %556 = vst [vmem:[%s532] ss:$4 sm:$0xff] %v357
      %557 = vst [vmem:[%s534] ss:$4 sm:$0xff] %v358
      %558 = vst [vmem:[%s536] ss:$4 sm:$0xff] %v359
      %559 = vst [vmem:[%s538] ss:$4 sm:$0xff] %v360
      %v560 = vld.sshfl [vmem:[#allocation1] sm:$0xff pattern:$0x73625140]
      %v561 = vld.sshfl [vmem:[#allocation1 + $0x20] sm:$0xff pattern:$0x73625140]
      %562 = vst [vmem:[#allocation1] ss:$4 sm:$0xff] %v485
      %563 = vst [vmem:[%s526] ss:$4 sm:$0xff] %v486
      %564 = vst [vmem:[%s528] ss:$4 sm:$0xff] %v487
      %565 = vst [vmem:[%s530] ss:$4 sm:$0xff] %v488
      %566 = vst [vmem:[%s532] ss:$4 sm:$0xff] %v489
      %567 = vst [vmem:[%s534] ss:$4 sm:$0xff] %v490
      %568 = vst [vmem:[%s536] ss:$4 sm:$0xff] %v491
      %569 = vst [vmem:[%s538] ss:$4 sm:$0xff] %v492
      %v570 = vld.sshfl [vmem:[#allocation1] sm:$0xff pattern:$0x73625140]
      %v571 = vld.sshfl [vmem:[#allocation1 + $0x20] sm:$0xff pattern:$0x73625140]
      %v580 = vpack.c.bf16 %v540, %v540
      %v581 = vpack.c.bf16 %v541, %v541
      %v582 = vpack.c.bf16 %v550, %v550
      %v583 = vpack.c.bf16 %v551, %v551
      %v584 = vpack.c.bf16 %v560, %v560
      %v585 = vpack.c.bf16 %v561, %v561
      %v586 = vpack.c.bf16 %v570, %v570
      %v587 = vpack.c.bf16 %v571, %v571
      %vm588 = vcmask 27648
      %589 = vst.msk [vmem:[%s210] sm:$0xf] %vm588, %v580
      %590 = vst.msk [vmem:[%s210 + $0x4] sm:$0xf] %vm588, %v581
      %591 = vst.msk [vmem:[%s210 + $0x8] sm:$0xf] %vm588, %v582
      %592 = vst.msk [vmem:[%s210 + $0xc] sm:$0xf] %vm588, %v583
      %593 = vst.msk [vmem:[%s210 + $0x10] sm:$0xf] %vm588, %v584
      %594 = vst.msk [vmem:[%s210 + $0x14] sm:$0xf] %vm588, %v585
      %595 = vst.msk [vmem:[%s210 + $0x18] sm:$0xf] %vm588, %v586
      %596 = vst.msk [vmem:[%s210 + $0x1c] sm:$0xf] %vm588, %v587
      %s597 = smul.u32 4, %s19
      %p598 = scmp.lt.s32.totalorder %s18, 1
      %s599 = scalar_select %p598, %s18, 1
      %p600 = scmp.lt.s32.totalorder %s597, 15
      %s601 = scalar_select %p600, %s597, 15
      %s602 = smul.addr %s601, 2
      %s603 = smul.addr %s599, 32
      %s604 = sadd.s32 %s602, %s603
      %s605 = smul.addr %s604, 4
      %s606 = scalar_lea.vmem %s3, %s605
      // Predicated region
      $region33: #{decoder_block_forward_nchw.3} parent=31 // pred_check
        %p607 = pneg %p116
      $region34: #{decoder_block_forward_nchw.3} parent=31 // pred_check_branch
        %609 = sbr.rel (%p607) target = $region36
      $region35: #{decoder_block_forward_nchw.3} parent=31 // pred_region
        %s610 = smul.u32 4, %s19
      $region36: #{decoder_block_forward_nchw.3} parent=31 // pred_fallthru
        _
    $region32: #{decoder_block_forward_nchw.3} parent=5 // pred_fallthru
      _
    %p611 = scmp.le.s32.totalorder 2, %s9
    // Predicated region
    $region37: #{decoder_block_forward_nchw.3} parent=5 // pred_check
      %p612 = pneg %p611
    $region38: #{decoder_block_forward_nchw.3} parent=5 // pred_check_branch
      %614 = sbr.rel (%p612) target = $region40
    $region39: #{decoder_block_forward_nchw.3} parent=5 // pred_region
      %s615 = ssub.s32 %s9, 2
      // Predicated region
      $region41: #{decoder_block_forward_nchw.3} parent=39 // pred_check
        %p616 = pneg %p122
      $region42: #{decoder_block_forward_nchw.3} parent=39 // pred_check_branch
        %618 = sbr.rel (%p616) target = $region44
      $region43: #{decoder_block_forward_nchw.3} parent=39 // pred_region
        %s619 = smul.u32 4, %s21
        %p620 = scmp.lt.s32.totalorder %s20, 1
        %s621 = scalar_select %p620, %s20, 1
        %p622 = scmp.lt.s32.totalorder %s619, 15
        %s623 = scalar_select %p622, %s619, 15
        %s624 = smul.addr %s623, 2
        %s625 = smul.addr %s621, 32
        %s626 = sadd.s32 %s624, %s625
        %s627 = smul.addr %s626, 4
        %s628 = scalar_lea.vmem %s3, %s627
      $region44: #{decoder_block_forward_nchw.3} parent=39 // pred_fallthru
        _
    $region40: #{decoder_block_forward_nchw.3} parent=5 // pred_fallthru
      _
  $region6: #{decoder_block_forward_nchw.3} parent=0 // loop_footer
    %s13 = sadd.s32 1, %s9
  $region7: #{decoder_block_forward_nchw.3} parent=0 // loop_footer_branch
    %8 = sbr.rel target = $region3
  $region8: #{decoder_block_forward_nchw.3} parent=0 // loop_exit
    _

// kernel: decoder_block_forward_nchw.5
$region0: #{decoder_block_forward_nchw.5}
  #allocation0 [shape = 'u32[]', space=smem, size = 0x4, offset = 0x4, fixed_abs, tag = 'smem constant byte address 0x4 - core index']
  #allocation1 [shape = 'u32[72,128]{1,0:T(1,128)}', space=vmem, size = 0x9000, scoped, tag = 'internal scratch']
  %s0 = inlined_call_operand.vmem [shape: bf16[2,16,16,4], index: 0, kind: input, shape index: {}, may-alias: {0,1,2}]
  %s1 = inlined_call_operand.vmem [shape: bf16[2,16,16,4], index: 1, kind: input, shape index: {}, may-alias: {0,1,2}]
  %s2 = inlined_call_operand.vmem [shape: bf16[2,16,16,4], index: 2, kind: input, shape index: {}, may-alias: {0,1,2}]
  %s3 = inlined_call_operand.vmem [shape: bf16[9,4,4], index: 3, kind: input, shape index: {}]
  %s4 = inlined_call_operand.vmem [shape: f32[1,4], index: 4, kind: input, shape index: {}]
  %s5 = inlined_call_operand.vmem [shape: bf16[2,16,16,4], index: 5, kind: output, shape index: {}]
  %s6 = sld [smem:[#allocation0]]
  $region53: #{decoder_block_forward_nchw.5} parent=0
    _
  %s8 = ssub.s32 1, %s6
  %s9 = scalar_select 0, %s8, %s6
  loop: start=0, step=1, limit=10
  $region2: #{decoder_block_forward_nchw.5} parent=0 // loop_pre_header
    _
  $region3: #{decoder_block_forward_nchw.5} parent=0 // loop_header
    %s11 = sphi 0, %s15
    %p12 = scmp.ge.s32.totalorder %s11, 10
    %s18 = sphi 0, %s30
    %s19 = sphi 0, %s26
    %s20 = sphi 0, %s18
    %s21 = sphi 0, %s19
    %s22 = sphi 0, %s20
    %s23 = sphi 0, %s21
    %s43 = sphi 0, %s45
    %s46 = sphi 0, %s43
    %s47 = sphi 0, %s46
    %s63 = sphi 0, %s47
    %s71 = sphi 0, %s73
    %s74 = sphi 0, %s71
    %s75 = sphi 0, %s74
    %s91 = sphi 0, %s75
    %s107 = sphi 0, %s109
    %s110 = sphi 0, %s107
    %s111 = sphi 0, %s110
    %s127 = sphi 0, %s111
    %s131 = sphi 0, %s131
    %s133 = sphi 0, %s131
    %s134 = sphi 0, %s133
    %s148 = sphi 0, %s134
    %s152 = sphi 0, %s152
    %s154 = sphi 0, %s152
    %s155 = sphi 0, %s154
    %s169 = sphi 0, %s155
    %s177 = sphi 0, %s179
    %s180 = sphi 0, %s177
    %s181 = sphi 0, %s180
    %s197 = sphi 0, %s181
  $region4: #{decoder_block_forward_nchw.5} parent=0 // loop_header_branch
    %14 = sbr.rel (%p12) target = $region8
  $region5: #{decoder_block_forward_nchw.5} parent=0 // loop_body
    %s16 = ssub.s32 %s11, 1
    %s17 = ssub.s32 %s11, 2
    %s24 = sadd.s32 1, %s19
    %p25 = scmp.ge.s32.totalorder %s24, 4
    %s26 = scalar_select %p25, 0, %s24
    %s27 = sadd.s32 1, %s18
    %s28 = scalar_select %p25, %s27, %s18
    %p29 = scmp.ge.s32.totalorder %s28, 2
    %s30 = scalar_select %p29, 0, %s28
    %s31 = smul.u32 %s19, 4
    %s32 = ssub.s32 %s31, 1
    %p33 = scmp.gt.s32.totalorder %s32, 0
    %s34 = scalar_select %p33, %s32, 0
    %s35 = smul.u32 %s26, 4
    %s36 = ssub.s32 %s35, 1
    %p37 = scmp.gt.s32.totalorder %s36, 0
    %s38 = scalar_select %p37, %s36, 0
    %s39 = ssub.s32 %s18, %s30
    %s40 = ssub.s32 %s34, %s38
    %s41 = sor.u32 %s39, %s40
    %p42 = scmp.eq.s32.totalorder %s41, 0
    %s44 = sadd.s32 %s43, 1
    %s45 = scalar_select %p42, %s43, %s44
    %p48 = pneg %p42
    %p49 = scmp.eq.s32.totalorder %s11, 7
    %p50 = por %p48, %p49
    %p51 = scmp.ne.s32.totalorder %s43, %s46
    %p52 = scmp.eq.s32.totalorder %s11, 0
    %p53 = por %p51, %p52
    %p54 = scmp.ne.s32.totalorder %s43, %s46
    %p55 = scmp.eq.s32.totalorder %s16, 7
    %p56 = por %p54, %p55
    %p57 = scmp.ne.s32.totalorder %s46, %s47
    %p58 = scmp.eq.s32.totalorder %s16, 0
    %p59 = por %p57, %p58
    %p60 = scmp.ne.s32.totalorder %s46, %s47
    %p61 = scmp.eq.s32.totalorder %s17, 7
    %p62 = por %p60, %p61
    %p64 = scmp.ne.s32.totalorder %s47, %s63
    %p65 = scmp.eq.s32.totalorder %s17, 0
    %p66 = por %p64, %p65
    %s67 = ssub.s32 %s18, %s30
    %s68 = ssub.s32 %s19, %s26
    %s69 = sor.u32 %s67, %s68
    %p70 = scmp.eq.s32.totalorder %s69, 0
    %s72 = sadd.s32 %s71, 1
    %s73 = scalar_select %p70, %s71, %s72
    %p76 = pneg %p70
    %p77 = scmp.eq.s32.totalorder %s11, 7
    %p78 = por %p76, %p77
    %p79 = scmp.ne.s32.totalorder %s71, %s74
    %p80 = scmp.eq.s32.totalorder %s11, 0
    %p81 = por %p79, %p80
    %p82 = scmp.ne.s32.totalorder %s71, %s74
    %p83 = scmp.eq.s32.totalorder %s16, 7
    %p84 = por %p82, %p83
    %p85 = scmp.ne.s32.totalorder %s74, %s75
    %p86 = scmp.eq.s32.totalorder %s16, 0
    %p87 = por %p85, %p86
    %p88 = scmp.ne.s32.totalorder %s74, %s75
    %p89 = scmp.eq.s32.totalorder %s17, 7
    %p90 = por %p88, %p89
    %p92 = scmp.ne.s32.totalorder %s75, %s91
    %p93 = scmp.eq.s32.totalorder %s17, 0
    %p94 = por %p92, %p93
    %s95 = smul.u32 %s19, 4
    %s96 = sadd.s32 %s95, 4
    %p97 = scmp.lt.s32.totalorder %s96, 15
    %s98 = scalar_select %p97, %s96, 15
    %s99 = smul.u32 %s26, 4
    %s100 = sadd.s32 %s99, 4
    %p101 = scmp.lt.s32.totalorder %s100, 15
    %s102 = scalar_select %p101, %s100, 15
    %s103 = ssub.s32 %s18, %s30
    %s104 = ssub.s32 %s98, %s102
    %s105 = sor.u32 %s103, %s104
    %p106 = scmp.eq.s32.totalorder %s105, 0
    %s108 = sadd.s32 %s107, 1
    %s109 = scalar_select %p106, %s107, %s108
    %p112 = pneg %p106
    %p113 = scmp.eq.s32.totalorder %s11, 7
    %p114 = por %p112, %p113
    %p115 = scmp.ne.s32.totalorder %s107, %s110
    %p116 = scmp.eq.s32.totalorder %s11, 0
    %p117 = por %p115, %p116
    %p118 = scmp.ne.s32.totalorder %s107, %s110
    %p119 = scmp.eq.s32.totalorder %s16, 7
    %p120 = por %p118, %p119
    %p121 = scmp.ne.s32.totalorder %s110, %s111
    %p122 = scmp.eq.s32.totalorder %s16, 0
    %p123 = por %p121, %p122
    %p124 = scmp.ne.s32.totalorder %s110, %s111
    %p125 = scmp.eq.s32.totalorder %s17, 7
    %p126 = por %p124, %p125
    %p128 = scmp.ne.s32.totalorder %s111, %s127
    %p129 = scmp.eq.s32.totalorder %s17, 0
    %p130 = por %p128, %p129
    %s132 = sadd.s32 %s131, 1
    %p135 = scmp.eq.s32.totalorder %s11, 7
    %p136 = scmp.ne.s32.totalorder %s131, %s133
    %p137 = scmp.eq.s32.totalorder %s11, 0
    %p138 = por %p136, %p137
    %p139 = scmp.ne.s32.totalorder %s131, %s133
    %p140 = scmp.eq.s32.totalorder %s16, 7
    %p141 = por %p139, %p140
    %p142 = scmp.ne.s32.totalorder %s133, %s134
    %p143 = scmp.eq.s32.totalorder %s16, 0
    %p144 = por %p142, %p143
    %p145 = scmp.ne.s32.totalorder %s133, %s134
    %p146 = scmp.eq.s32.totalorder %s17, 7
    %p147 = por %p145, %p146
    %p149 = scmp.ne.s32.totalorder %s134, %s148
    %p150 = scmp.eq.s32.totalorder %s17, 0
    %p151 = por %p149, %p150
    %s153 = sadd.s32 %s152, 1
    %p156 = scmp.eq.s32.totalorder %s11, 7
    %p157 = scmp.ne.s32.totalorder %s152, %s154
    %p158 = scmp.eq.s32.totalorder %s11, 0
    %p159 = por %p157, %p158
    %p160 = scmp.ne.s32.totalorder %s152, %s154
    %p161 = scmp.eq.s32.totalorder %s16, 7
    %p162 = por %p160, %p161
    %p163 = scmp.ne.s32.totalorder %s154, %s155
    %p164 = scmp.eq.s32.totalorder %s16, 0
    %p165 = por %p163, %p164
    %p166 = scmp.ne.s32.totalorder %s154, %s155
    %p167 = scmp.eq.s32.totalorder %s17, 7
    %p168 = por %p166, %p167
    %p170 = scmp.ne.s32.totalorder %s155, %s169
    %p171 = scmp.eq.s32.totalorder %s17, 0
    %p172 = por %p170, %p171
    %s173 = ssub.s32 %s18, %s30
    %s174 = ssub.s32 %s19, %s26
    %s175 = sor.u32 %s173, %s174
    %p176 = scmp.eq.s32.totalorder %s175, 0
    %s178 = sadd.s32 %s177, 1
    %s179 = scalar_select %p176, %s177, %s178
    %p182 = pneg %p176
    %p183 = scmp.eq.s32.totalorder %s11, 7
    %p184 = por %p182, %p183
    %p185 = scmp.ne.s32.totalorder %s177, %s180
    %p186 = scmp.eq.s32.totalorder %s11, 0
    %p187 = por %p185, %p186
    %p188 = scmp.ne.s32.totalorder %s177, %s180
    %p189 = scmp.eq.s32.totalorder %s16, 7
    %p190 = por %p188, %p189
    %p191 = scmp.ne.s32.totalorder %s180, %s181
    %p192 = scmp.eq.s32.totalorder %s16, 0
    %p193 = por %p191, %p192
    %p194 = scmp.ne.s32.totalorder %s180, %s181
    %p195 = scmp.eq.s32.totalorder %s17, 7
    %p196 = por %p194, %p195
    %p198 = scmp.ne.s32.totalorder %s181, %s197
    %p199 = scmp.eq.s32.totalorder %s17, 0
    %p200 = por %p198, %p199
    %p201 = scmp.le.s32.totalorder 1, %s11
    %p202 = scmp.lt.s32.totalorder %s11, 9
    %p203 = pnand %p201, %p202
    %p204 = pneg %p203
    // Predicated region
    $region9: #{decoder_block_forward_nchw.5} parent=5 // pred_check
      _
    $region10: #{decoder_block_forward_nchw.5} parent=5 // pred_check_branch
      %206 = sbr.rel (%p203) target = $region12
    $region11: #{decoder_block_forward_nchw.5} parent=5 // pred_region
      %s207 = ssub.s32 %s11, 1
      // Predicated region
      $region13: #{decoder_block_forward_nchw.5} parent=11 // pred_check
        %p208 = pneg %p144
      $region14: #{decoder_block_forward_nchw.5} parent=11 // pred_check_branch
        %210 = sbr.rel (%p208) target = $region16
      $region15: #{decoder_block_forward_nchw.5} parent=11 // pred_region
        _
      $region16: #{decoder_block_forward_nchw.5} parent=11 // pred_fallthru
        _
      // Predicated region
      $region17: #{decoder_block_forward_nchw.5} parent=11 // pred_check
        %p211 = pneg %p165
      $region18: #{decoder_block_forward_nchw.5} parent=11 // pred_check_branch
        %213 = sbr.rel (%p211) target = $region20
      $region19: #{decoder_block_forward_nchw.5} parent=11 // pred_region
        _
      $region20: #{decoder_block_forward_nchw.5} parent=11 // pred_fallthru
        _
    $region12: #{decoder_block_forward_nchw.5} parent=5 // pred_fallthru
      _
    %p214 = scmp.lt.s32.totalorder %s11, 8
    // Predicated region
    $region21: #{decoder_block_forward_nchw.5} parent=5 // pred_check
      %p215 = pneg %p214
    $region22: #{decoder_block_forward_nchw.5} parent=5 // pred_check_branch
      %217 = sbr.rel (%p215) target = $region24
    $region23: #{decoder_block_forward_nchw.5} parent=5 // pred_region
      // Predicated region
      $region25: #{decoder_block_forward_nchw.5} parent=23 // pred_check
        %p218 = pneg %p53
      $region26: #{decoder_block_forward_nchw.5} parent=23 // pred_check_branch
        %220 = sbr.rel (%p218) target = $region28
      $region27: #{decoder_block_forward_nchw.5} parent=23 // pred_region
        %s221 = smul.u32 %s19, 4
        %s222 = ssub.s32 %s221, 1
        %p223 = scmp.gt.s32.totalorder %s222, 0
        %s224 = scalar_select %p223, %s222, 0
        %p225 = scmp.lt.s32.totalorder %s18, 1
        %s226 = scalar_select %p225, %s18, 1
        %p227 = scmp.lt.s32.totalorder %s224, 15
        %s228 = scalar_select %p227, %s224, 15
        %s229 = smul.addr %s228, 2
        %s230 = smul.addr %s226, 32
        %s231 = sadd.s32 %s229, %s230
        %s232 = smul.addr %s231, 4
        %s233 = scalar_lea.vmem %s0, %s232
        %s234 = smul.u32 %s19, 4
        %s235 = ssub.s32 %s234, 1
        %p236 = scmp.gt.s32.totalorder %s235, 0
        %s237 = scalar_select %p236, %s235, 0
      $region28: #{decoder_block_forward_nchw.5} parent=23 // pred_fallthru
        _
      // Predicated region
      $region29: #{decoder_block_forward_nchw.5} parent=23 // pred_check
        %p238 = pneg %p81
      $region30: #{decoder_block_forward_nchw.5} parent=23 // pred_check_branch
        %240 = sbr.rel (%p238) target = $region32
      $region31: #{decoder_block_forward_nchw.5} parent=23 // pred_region
        %s241 = smul.u32 4, %s19
        %p242 = scmp.lt.s32.totalorder %s18, 1
        %s243 = scalar_select %p242, %s18, 1
        %p244 = scmp.lt.s32.totalorder %s241, 15
        %s245 = scalar_select %p244, %s241, 15
        %s246 = smul.addr %s245, 2
        %s247 = smul.addr %s243, 32
        %s248 = sadd.s32 %s246, %s247
        %s249 = smul.addr %s248, 4
        %s250 = scalar_lea.vmem %s1, %s249
        %s251 = smul.u32 4, %s19
      $region32: #{decoder_block_forward_nchw.5} parent=23 // pred_fallthru
        _
      // Predicated region
      $region33: #{decoder_block_forward_nchw.5} parent=23 // pred_check
        %p252 = pneg %p117
      $region34: #{decoder_block_forward_nchw.5} parent=23 // pred_check_branch
        %254 = sbr.rel (%p252) target = $region36
      $region35: #{decoder_block_forward_nchw.5} parent=23 // pred_region
        %s255 = smul.u32 %s19, 4
        %s256 = sadd.s32 %s255, 4
        %p257 = scmp.lt.s32.totalorder %s256, 15
        %s258 = scalar_select %p257, %s256, 15
        %p259 = scmp.lt.s32.totalorder %s18, 1
        %s260 = scalar_select %p259, %s18, 1
        %p261 = scmp.lt.s32.totalorder %s258, 15
        %s262 = scalar_select %p261, %s258, 15
        %s263 = smul.addr %s262, 2
        %s264 = smul.addr %s260, 32
        %s265 = sadd.s32 %s263, %s264
        %s266 = smul.addr %s265, 4
        %s267 = scalar_lea.vmem %s2, %s266
        %s268 = smul.u32 %s19, 4
        %s269 = sadd.s32 %s268, 4
        %p270 = scmp.lt.s32.totalorder %s269, 15
        %s271 = scalar_select %p270, %s269, 15
      $region36: #{decoder_block_forward_nchw.5} parent=23 // pred_fallthru
        _
    $region24: #{decoder_block_forward_nchw.5} parent=5 // pred_fallthru
      _
    %p272 = scmp.le.s32.totalorder 1, %s11
    %p273 = scmp.lt.s32.totalorder %s11, 9
    %p274 = pnand %p272, %p273
    %p275 = pneg %p274
    // Predicated region
    $region37: #{decoder_block_forward_nchw.5} parent=5 // pred_check
      _
    $region38: #{decoder_block_forward_nchw.5} parent=5 // pred_check_branch
      %277 = sbr.rel (%p274) target = $region40
    $region39: #{decoder_block_forward_nchw.5} parent=5 // pred_region
      %s278 = ssub.s32 %s11, 1
      %s279 = smul.u32 %s21, 4
      %s280 = ssub.s32 %s279, 1
      %p281 = scmp.gt.s32.totalorder %s280, 0
      %s282 = scalar_select %p281, %s280, 0
      %p283 = scmp.lt.s32.totalorder %s20, 1
      %s284 = scalar_select %p283, %s20, 1
      %p285 = scmp.lt.s32.totalorder %s282, 15
      %s286 = scalar_select %p285, %s282, 15
      %s287 = smul.addr %s286, 2
      %s288 = smul.addr %s284, 32
      %s289 = sadd.s32 %s287, %s288
      %s290 = smul.addr %s289, 4
      %s291 = scalar_lea.vmem %s0, %s290
      %p292 = pneg %p59
      %p293 = pneg %p56
      %s294 = smul.u32 4, %s21
      %p295 = scmp.lt.s32.totalorder %s20, 1
      %s296 = scalar_select %p295, %s20, 1
      %p297 = scmp.lt.s32.totalorder %s294, 15
      %s298 = scalar_select %p297, %s294, 15
      %s299 = smul.addr %s298, 2
      %s300 = smul.addr %s296, 32
      %s301 = sadd.s32 %s299, %s300
      %s302 = smul.addr %s301, 4
      %s303 = scalar_lea.vmem %s1, %s302
      %p304 = pneg %p87
      %p305 = pneg %p84
      %s306 = smul.u32 %s21, 4
      %s307 = sadd.s32 %s306, 4
      %p308 = scmp.lt.s32.totalorder %s307, 15
      %s309 = scalar_select %p308, %s307, 15
      %p310 = scmp.lt.s32.totalorder %s20, 1
      %s311 = scalar_select %p310, %s20, 1
      %p312 = scmp.lt.s32.totalorder %s309, 15
      %s313 = scalar_select %p312, %s309, 15
      %s314 = smul.addr %s313, 2
      %s315 = smul.addr %s311, 32
      %s316 = sadd.s32 %s314, %s315
      %s317 = smul.addr %s316, 4
      %s318 = scalar_lea.vmem %s2, %s317
      %p319 = pneg %p123
      %p320 = pneg %p120
      %p321 = pneg %p144
      %p322 = pneg %p141
      %p323 = pneg %p165
      %p324 = pneg %p162
      %p325 = pneg %p193
      %p326 = pneg %p190
      %s327 = smul.u32 4, %s21
      %p328 = scmp.lt.s32.totalorder %s20, 1
      %s329 = scalar_select %p328, %s20, 1
      %p330 = scmp.lt.s32.totalorder %s327, 15
      %s331 = scalar_select %p330, %s327, 15
      %s332 = smul.addr %s331, 2
      %s333 = smul.addr %s329, 32
      %s334 = sadd.s32 %s332, %s333
      %s335 = smul.addr %s334, 4
      %s336 = scalar_lea.vmem %s5, %s335
      %s337 = smul.u32 %s21, 4
      %s338 = ssub.s32 %s337, 1
      %p339 = scmp.gt.s32.totalorder %s338, 0
      %s340 = scalar_select %p339, %s338, 0
      %p341 = scmp.lt.s32.totalorder %s20, 1
      %s342 = scalar_select %p341, %s20, 1
      %p343 = scmp.lt.s32.totalorder %s340, 15
      %s344 = scalar_select %p343, %s340, 15
      %s345 = smul.addr %s344, 2
      %s346 = smul.addr %s342, 32
      %s347 = sadd.s32 %s345, %s346
      %s348 = smul.addr %s347, 4
      %s349 = scalar_lea.vmem %s0, %s348
      %s350 = smul.u32 %s21, 4
      %s351 = ssub.s32 %s350, 1
      %p352 = scmp.gt.s32.totalorder %s351, 0
      %s353 = scalar_select %p352, %s351, 0
      %s354 = smul.u32 4, %s21
      %p355 = scmp.lt.s32.totalorder %s20, 1
      %s356 = scalar_select %p355, %s20, 1
      %p357 = scmp.lt.s32.totalorder %s354, 15
      %s358 = scalar_select %p357, %s354, 15
      %s359 = smul.addr %s358, 2
      %s360 = smul.addr %s356, 32
      %s361 = sadd.s32 %s359, %s360
      %s362 = smul.addr %s361, 4
      %s363 = scalar_lea.vmem %s1, %s362
      %s364 = smul.u32 4, %s21
      %s365 = smul.u32 %s21, 4
      %s366 = sadd.s32 %s365, 4
      %p367 = scmp.lt.s32.totalorder %s366, 15
      %s368 = scalar_select %p367, %s366, 15
      %p369 = scmp.lt.s32.totalorder %s20, 1
      %s370 = scalar_select %p369, %s20, 1
      %p371 = scmp.lt.s32.totalorder %s368, 15
      %s372 = scalar_select %p371, %s368, 15
      %s373 = smul.addr %s372, 2
      %s374 = smul.addr %s370, 32
      %s375 = sadd.s32 %s373, %s374
      %s376 = smul.addr %s375, 4
      %s377 = scalar_lea.vmem %s2, %s376
      %s378 = smul.u32 %s21, 4
      %s379 = sadd.s32 %s378, 4
      %p380 = scmp.lt.s32.totalorder %s379, 15
      %s381 = scalar_select %p380, %s379, 15
      %s382 = smul.u32 4, %s21
      %p383 = scmp.lt.s32.totalorder %s20, 1
      %s384 = scalar_select %p383, %s20, 1
      %p385 = scmp.lt.s32.totalorder %s382, 15
      %s386 = scalar_select %p385, %s382, 15
      %s387 = smul.addr %s386, 2
      %s388 = smul.addr %s384, 32
      %s389 = sadd.s32 %s387, %s388
      %s390 = smul.addr %s389, 4
      %s391 = scalar_lea.vmem %s5, %s390
      %s392 = smul.u32 4, %s21
      %v396 = vlaneseq
      %v397 = vshrl.u32 %v396, 7
      %v398 = vadd.s32 %v397, 8
      %vm399 = vcmp.ne.s32.totalorder %v397, 15
      %vm400 = vcmp.ne.s32.totalorder %v398, 15
      %vm401 = vcmp.ne.s32.totalorder %v397, 0
      %vm402 = vcmp.ne.s32.totalorder %v398, 0
      %v403 = vld [vmem:[%s349] sm:$0xf]
      %v404 = vld [vmem:[%s349 + $0x4] sm:$0xf]
      %v405 = vld [vmem:[%s377] sm:$0xf]
      %v406 = vld [vmem:[%s377 + $0x4] sm:$0xf]
      %p407 = scmp.ne.s32.totalorder %s21, 0
      %s408 = scalar_select %p407, 1, 0
      %s409 = scvt.s32.f32 %s408
      %p411 = scmp.ne.f32.partialorder %s409, %s409
      %s412 = sshrl.u32 %s409, 16
      %s413 = sand.u32 %s412, 1
      %s414 = sadd.s32 32767, %s413
      %s415 = sadd.s32 %s409, %s414
      %s416 = sand.u32 %s415, 4294901760
      %s417 = scalar_select %p411, 2143289344, %s416
      %s419 = sshrl.u32 %s417, 16
      %s420 = sshll.u32 %s419, 16
      %s421 = sor.u32 %s419, %s420
      %v422 = vstv %s421
      %v424 = vunpack.c.l.bf16 %v403
      %v425 = vunpack.c.l.bf16 %v404
      %v426 = vunpack.c.l.bf16 %v422
      %v427 = vmul.f32 %v424, %v426
      %v428 = vmul.f32 %v425, %v426
      %v429 = vpack.c.bf16 %v427, %v427
      %v430 = vpack.c.bf16 %v428, %v428
      %p431 = scmp.ne.s32.totalorder %s21, 3
      %s432 = scalar_select %p431, 1, 0
      %s433 = scvt.s32.f32 %s432
      %p435 = scmp.ne.f32.partialorder %s433, %s433
      %s436 = sshrl.u32 %s433, 16
      %s437 = sand.u32 %s436, 1
      %s438 = sadd.s32 32767, %s437
      %s439 = sadd.s32 %s433, %s438
      %s440 = sand.u32 %s439, 4294901760
      %s441 = scalar_select %p435, 2143289344, %s440
      %s443 = sshrl.u32 %s441, 16
      %s444 = sshll.u32 %s443, 16
      %s445 = sor.u32 %s443, %s444
      %v446 = vstv %s445
      %v448 = vunpack.c.l.bf16 %v405
      %v449 = vunpack.c.l.bf16 %v406
      %v450 = vunpack.c.l.bf16 %v446
      %v451 = vmul.f32 %v448, %v450
      %v452 = vmul.f32 %v449, %v450
      %v453 = vpack.c.bf16 %v451, %v451
      %v454 = vpack.c.bf16 %v452, %v452
      %v455 = vld [vmem:[%s363] sm:$0xf]
      %v456 = vld [vmem:[%s363 + $0x4] sm:$0xf]
      %v457 = vld [vmem:[%s363 + $0x8] sm:$0xf]
      %v458 = vld [vmem:[%s363 + $0xc] sm:$0xf]
      %v459 = vld [vmem:[%s363 + $0x10] sm:$0xf]
      %v460 = vld [vmem:[%s363 + $0x14] sm:$0xf]
      %v461 = vld [vmem:[%s363 + $0x18] sm:$0xf]
      %v462 = vld [vmem:[%s363 + $0x1c] sm:$0xf]
      %v465 = vunpack.c.l.b16 %v429
      %v466 = vunpack.c.l.b16 %v430
      %v467 = vpack.c.b16 %v466, %v465
      %v477 = vunpack.c.l.b16 %v455
      %v478 = vunpack.c.l.b16 %v456
      %v479 = vunpack.c.l.b16 %v457
      %v480 = vunpack.c.l.b16 %v458
      %v481 = vunpack.c.l.b16 %v459
      %v482 = vunpack.c.l.b16 %v460
      %v483 = vunpack.c.l.b16 %v461
      %v484 = vunpack.c.l.b16 %v462
      %v485 = vpack.c.b16 %v478, %v477
      %v486 = vpack.c.b16 %v480, %v479
      %v487 = vpack.c.b16 %v482, %v481
      %v488 = vpack.c.b16 %v484, %v483
      %v495 = vunpack.c.l.b16 %v453
      %v496 = vunpack.c.l.b16 %v454
      %v497 = vpack.c.b16 %v496, %v495
      %v499 = vsel %vm399, 1, 0
      %v500 = vsel %vm400, 1, 0
      %vm501 = vcmp.eq.s32.totalorder %v499, 1
      %vm502 = vcmp.eq.s32.totalorder %v500, 1
      %vm503 = vmpackc.low %vm501, %vm501
      %vm504 = vmpackc.low %vm502, %vm502
      %v505 = vsel %vm503, 65537, 0
      %v506 = vsel %vm504, 65537, 0
      %v507 = vunpack.c.l.b16 %v505
      %v508 = vunpack.c.l.b16 %v506
      %v509 = vpack.c.b16 %v508, %v507
      %v510 = vunpack.c.l.b16 %v509
      %v511 = vunpack.c.h.b16 %v509
      %v512 = vunpack.c.l.b16 0
      %v513 = vunpack.c.h.b16 0
      %vm514 = vcmp.ne.s32.totalorder %v510, %v512
      %vm515 = vcmp.ne.s32.totalorder %v511, %v513
      %vm516 = vmpackc.low %vm515, %vm514
      %v517 = vsel %vm516, %v467, 0
      %v518 = vsel %vm516, %v485, 0
      %v519 = vsel %vm516, %v486, 0
      %v520 = vsel %vm516, %v487, 0
      %v521 = vsel %vm516, %v488, 0
      %v522 = vsel %vm516, %v497, 0
      %v523 = vsel %vm401, 1, 0
      %v524 = vsel %vm402, 1, 0
      %vm525 = vcmp.eq.s32.totalorder %v523, 1
      %vm526 = vcmp.eq.s32.totalorder %v524, 1
      %vm527 = vmpackc.low %vm525, %vm525
      %vm528 = vmpackc.low %vm526, %vm526
      %v529 = vsel %vm527, 65537, 0
      %v530 = vsel %vm528, 65537, 0
      %v531 = vunpack.c.l.b16 %v529
      %v532 = vunpack.c.l.b16 %v530
      %v533 = vpack.c.b16 %v532, %v531
      %v534 = vunpack.c.l.b16 %v533
      %v535 = vunpack.c.h.b16 %v533
      %v536 = vunpack.c.l.b16 0
      %v537 = vunpack.c.h.b16 0
      %vm538 = vcmp.ne.s32.totalorder %v534, %v536
      %vm539 = vcmp.ne.s32.totalorder %v535, %v537
      %vm540 = vmpackc.low %vm539, %vm538
      %v541 = vsel %vm540, %v467, 0
      %v542 = vsel %vm540, %v485, 0
      %v543 = vsel %vm540, %v486, 0
      %v544 = vsel %vm540, %v487, 0
      %v545 = vsel %vm540, %v488, 0
      %v546 = vsel %vm540, %v497, 0
      %v547 = vld [vmem:[%s4] sm:$0x1]
      %v548 = vld [vmem:[%s3] sm:$0x3]
      %vm549 = vcmask 31744
      %v551 = vsel %vm549, %v517, 0
      %v554 = vsel %vm549, %v518, 0
      %v557 = vsel %vm549, %v519, 0
      %v560 = vsel %vm549, %v520, 0
      %v563 = vsel %vm549, %v521, 0
      %v566 = vsel %vm549, %v522, 0
      %vm568 = vcmask 1041408
      %v570 = vsel %vm568, %v548, 0
      %572 = vmatpush.bf16.msra.mxu0 0
      %573 = vmatpush.bf16.msra.mxu0 0
      %574 = vmatpush.bf16.msra.mxu0 0
      %575 = vmatpush.bf16.msra.mxu0 0
      %576 = vmatpush.bf16.msra.mxu0 0
      %577 = vmatpush.bf16.msra.mxu0 0
      %578 = vmatpush.bf16.msra.mxu0 0
      %579 = vmatpush.bf16.msra.mxu0 %v570
      %580 = vmatmul.bf16.gmra.mxu0 %v551
      %v581 = vpop.f32.mrf.mxu0
      %v582 = vadd.f32 0.0, %v581
      %v583 = vpop.f32.mrf.mxu0
      %v584 = vadd.f32 0.0, %v583
      %585 = vmatmul.bf16.gmra.mxu0 %v554
      %v586 = vpop.f32.mrf.mxu0
      %v587 = vadd.f32 0.0, %v586
      %v588 = vpop.f32.mrf.mxu0
      %v589 = vadd.f32 0.0, %v588
      %590 = vmatmul.bf16.gmra.mxu0 %v557
      %v591 = vpop.f32.mrf.mxu0
      %v592 = vadd.f32 0.0, %v591
      %v593 = vpop.f32.mrf.mxu0
      %v594 = vadd.f32 0.0, %v593
      %595 = vmatmul.bf16.gmra.mxu0 %v560
      %v596 = vpop.f32.mrf.mxu0
      %v597 = vadd.f32 0.0, %v596
      %v598 = vpop.f32.mrf.mxu0
      %v599 = vadd.f32 0.0, %v598
      %600 = vmatmul.bf16.gmra.mxu0 %v563
      %v601 = vpop.f32.mrf.mxu0
      %v602 = vpop.f32.mrf.mxu0
      %603 = vmatmul.bf16.gmra.mxu0 %v566
      %v604 = vpop.f32.mrf.mxu0
      %v605 = vpop.f32.mrf.mxu0
      %v606 = vadd.f32 0.0, %v605
      %607 = vdwg.mxu0
      %v609 = vrot.slane %v606, 7
      %vm619 = vcmask 1040384
      %v620 = vrot.slane %v582, 7
      %v621 = vrot.slane %v584, 7
      %v622 = vsel %vm619, %v620, %v621
      %v623 = vrot.slane %v587, 7
      %v624 = vsel %vm619, %v621, %v623
      %v625 = vrot.slane %v589, 7
      %v626 = vsel %vm619, %v623, %v625
      %v627 = vrot.slane %v592, 7
      %v628 = vsel %vm619, %v625, %v627
      %v629 = vrot.slane %v594, 7
      %v630 = vsel %vm619, %v627, %v629
      %v631 = vrot.slane %v597, 7
      %v632 = vsel %vm619, %v629, %v631
      %v633 = vrot.slane %v599, 7
      %v634 = vsel %vm619, %v631, %v633
      %v643 = vsel %vm619, %v609, %v620
      %v644 = vadd.f32 %v643, 0.0
      %v645 = vadd.f32 %v622, 0.0
      %v646 = vadd.f32 %v624, 0.0
      %v647 = vadd.f32 %v626, 0.0
      %v648 = vadd.f32 %v628, 0.0
      %v649 = vadd.f32 %v630, 0.0
      %v650 = vadd.f32 %v632, 0.0
      %v651 = vadd.f32 %v634, 0.0
      %s652 = scalar_lea.vmem %s3, 2
      %v653 = vld [vmem:[%s652] sm:$0x3]
      %v655 = vsel %vm549, %v467, 0
      %v658 = vsel %vm549, %v485, 0
      %v661 = vsel %vm549, %v486, 0
      %v664 = vsel %vm549, %v487, 0
      %v667 = vsel %vm549, %v488, 0
      %v670 = vsel %vm549, %v497, 0
      %v673 = vsel %vm568, %v653, 0
      %675 = vmatpush.bf16.msra.mxu0 0
      %676 = vmatpush.bf16.msra.mxu0 0
      %677 = vmatpush.bf16.msra.mxu0 0
      %678 = vmatpush.bf16.msra.mxu0 0
      %679 = vmatpush.bf16.msra.mxu0 0
      %680 = vmatpush.bf16.msra.mxu0 0
      %681 = vmatpush.bf16.msra.mxu0 0
      %682 = vmatpush.bf16.msra.mxu0 %v673
      %683 = vmatmul.bf16.gmra.mxu0 %v655
      %v684 = vpop.f32.mrf.mxu0
      %v685 = vadd.f32 0.0, %v684
      %v686 = vpop.f32.mrf.mxu0
      %v687 = vadd.f32 0.0, %v686
      %688 = vmatmul.bf16.gmra.mxu0 %v658
      %v689 = vpop.f32.mrf.mxu0
      %v690 = vadd.f32 0.0, %v689
      %v691 = vpop.f32.mrf.mxu0
      %v692 = vadd.f32 0.0, %v691
      %693 = vmatmul.bf16.gmra.mxu0 %v661
      %v694 = vpop.f32.mrf.mxu0
      %v695 = vadd.f32 0.0, %v694
      %v696 = vpop.f32.mrf.mxu0
      %v697 = vadd.f32 0.0, %v696
      %698 = vmatmul.bf16.gmra.mxu0 %v664
      %v699 = vpop.f32.mrf.mxu0
      %v700 = vadd.f32 0.0, %v699
      %v701 = vpop.f32.mrf.mxu0
      %v702 = vadd.f32 0.0, %v701
      %703 = vmatmul.bf16.gmra.mxu0 %v667
      %v704 = vpop.f32.mrf.mxu0
      %v705 = vpop.f32.mrf.mxu0
      %706 = vmatmul.bf16.gmra.mxu0 %v670
      %v707 = vpop.f32.mrf.mxu0
      %v708 = vpop.f32.mrf.mxu0
      %709 = vdwg.mxu0
      %v710 = vadd.f32 %v644, %v685
      %v711 = vadd.f32 %v645, %v687
      %v712 = vadd.f32 %v646, %v690
      %v713 = vadd.f32 %v647, %v692
      %v714 = vadd.f32 %v648, %v695
      %v715 = vadd.f32 %v649, %v697
      %v716 = vadd.f32 %v650, %v700
      %v717 = vadd.f32 %v651, %v702
      %s718 = scalar_lea.vmem %s3, 4
      %v719 = vld [vmem:[%s718] sm:$0x3]
      %v721 = vsel %vm549, %v541, 0
      %v724 = vsel %vm549, %v542, 0
      %v727 = vsel %vm549, %v543, 0
      %v730 = vsel %vm549, %v544, 0
      %v733 = vsel %vm549, %v545, 0
      %v736 = vsel %vm549, %v546, 0
      %v739 = vsel %vm568, %v719, 0
      %741 = vmatpush.bf16.msra.mxu0 0
      %742 = vmatpush.bf16.msra.mxu0 0
      %743 = vmatpush.bf16.msra.mxu0 0
      %744 = vmatpush.bf16.msra.mxu0 0
      %745 = vmatpush.bf16.msra.mxu0 0
      %746 = vmatpush.bf16.msra.mxu0 0
      %747 = vmatpush.bf16.msra.mxu0 0
      %748 = vmatpush.bf16.msra.mxu0 %v739
      %749 = vmatmul.bf16.gmra.mxu0 %v721
      %v750 = vpop.f32.mrf.mxu0
      %v751 = vadd.f32 0.0, %v750
      %v752 = vpop.f32.mrf.mxu0
      %v753 = vadd.f32 0.0, %v752
      %754 = vmatmul.bf16.gmra.mxu0 %v724
      %v755 = vpop.f32.mrf.mxu0
      %v756 = vadd.f32 0.0, %v755
      %v757 = vpop.f32.mrf.mxu0
      %v758 = vadd.f32 0.0, %v757
      %759 = vmatmul.bf16.gmra.mxu0 %v727
      %v760 = vpop.f32.mrf.mxu0
      %v761 = vadd.f32 0.0, %v760
      %v762 = vpop.f32.mrf.mxu0
      %v763 = vadd.f32 0.0, %v762
      %764 = vmatmul.bf16.gmra.mxu0 %v730
      %v765 = vpop.f32.mrf.mxu0
      %v766 = vadd.f32 0.0, %v765
      %v767 = vpop.f32.mrf.mxu0
      %v768 = vadd.f32 0.0, %v767
      %769 = vmatmul.bf16.gmra.mxu0 %v733
      %v770 = vpop.f32.mrf.mxu0
      %v771 = vadd.f32 0.0, %v770
      %v772 = vpop.f32.mrf.mxu0
      %773 = vmatmul.bf16.gmra.mxu0 %v736
      %v774 = vpop.f32.mrf.mxu0
      %v775 = vpop.f32.mrf.mxu0
      %776 = vdwg.mxu0
      %vm786 = vcmask 1046528
      %v787 = vrot.slane %v751, 1
      %v788 = vrot.slane %v753, 1
      %v789 = vsel %vm786, %v787, %v788
      %v790 = vrot.slane %v756, 1
      %v791 = vsel %vm786, %v788, %v790
      %v792 = vrot.slane %v758, 1
      %v793 = vsel %vm786, %v790, %v792
      %v794 = vrot.slane %v761, 1
      %v795 = vsel %vm786, %v792, %v794
      %v796 = vrot.slane %v763, 1
      %v797 = vsel %vm786, %v794, %v796
      %v798 = vrot.slane %v766, 1
      %v799 = vsel %vm786, %v796, %v798
      %v800 = vrot.slane %v768, 1
      %v801 = vsel %vm786, %v798, %v800
      %v802 = vrot.slane %v771, 1
      %v803 = vsel %vm786, %v800, %v802
      %v812 = vadd.f32 %v710, %v789
      %v813 = vadd.f32 %v711, %v791
      %v814 = vadd.f32 %v712, %v793
      %v815 = vadd.f32 %v713, %v795
      %v816 = vadd.f32 %v714, %v797
      %v817 = vadd.f32 %v715, %v799
      %v818 = vadd.f32 %v716, %v801
      %v819 = vadd.f32 %v717, %v803
      %s820 = scalar_lea.vmem %s3, 6
      %v821 = vld [vmem:[%s820] sm:$0x3]
      %v823 = vsel %vm568, %v821, 0
      %825 = vmatpush.bf16.msra.mxu0 0
      %826 = vmatpush.bf16.msra.mxu0 0
      %827 = vmatpush.bf16.msra.mxu0 0
      %828 = vmatpush.bf16.msra.mxu0 0
      %829 = vmatpush.bf16.msra.mxu0 0
      %830 = vmatpush.bf16.msra.mxu0 0
      %831 = vmatpush.bf16.msra.mxu0 0
      %832 = vmatpush.bf16.msra.mxu0 %v823
      %833 = vmatmul.bf16.gmra.mxu0 %v551
      %v834 = vpop.f32.mrf.mxu0
      %v835 = vpop.f32.mrf.mxu0
      %v836 = vadd.f32 0.0, %v835
      %837 = vmatmul.bf16.gmra.mxu0 %v554
      %v838 = vpop.f32.mrf.mxu0
      %v839 = vadd.f32 0.0, %v838
      %v840 = vpop.f32.mrf.mxu0
      %v841 = vadd.f32 0.0, %v840
      %842 = vmatmul.bf16.gmra.mxu0 %v557
      %v843 = vpop.f32.mrf.mxu0
      %v844 = vadd.f32 0.0, %v843
      %v845 = vpop.f32.mrf.mxu0
      %v846 = vadd.f32 0.0, %v845
      %847 = vmatmul.bf16.gmra.mxu0 %v560
      %v848 = vpop.f32.mrf.mxu0
      %v849 = vadd.f32 0.0, %v848
      %v850 = vpop.f32.mrf.mxu0
      %v851 = vadd.f32 0.0, %v850
      %852 = vmatmul.bf16.gmra.mxu0 %v563
      %v853 = vpop.f32.mrf.mxu0
      %v854 = vadd.f32 0.0, %v853
      %v855 = vpop.f32.mrf.mxu0
      %v856 = vadd.f32 0.0, %v855
      %857 = vmatmul.bf16.gmra.mxu0 %v566
      %v858 = vpop.f32.mrf.mxu0
      %v859 = vpop.f32.mrf.mxu0
      %860 = vdwg.mxu0
      %v870 = vrot.slane %v836, 7
      %v871 = vrot.slane %v839, 7
      %v872 = vsel %vm619, %v870, %v871
      %v873 = vrot.slane %v841, 7
      %v874 = vsel %vm619, %v871, %v873
      %v875 = vrot.slane %v844, 7
      %v876 = vsel %vm619, %v873, %v875
      %v877 = vrot.slane %v846, 7
      %v878 = vsel %vm619, %v875, %v877
      %v879 = vrot.slane %v849, 7
      %v880 = vsel %vm619, %v877, %v879
      %v881 = vrot.slane %v851, 7
      %v882 = vsel %vm619, %v879, %v881
      %v883 = vrot.slane %v854, 7
      %v884 = vsel %vm619, %v881, %v883
      %v885 = vrot.slane %v856, 7
      %v886 = vsel %vm619, %v883, %v885
      %v895 = vadd.f32 %v812, %v872
      %v896 = vadd.f32 %v813, %v874
      %v897 = vadd.f32 %v814, %v876
      %v898 = vadd.f32 %v815, %v878
      %v899 = vadd.f32 %v816, %v880
      %v900 = vadd.f32 %v817, %v882
      %v901 = vadd.f32 %v818, %v884
      %v902 = vadd.f32 %v819, %v886
      %s903 = scalar_lea.vmem %s3, 8
      %v904 = vld [vmem:[%s903] sm:$0x3]
      %v906 = vsel %vm568, %v904, 0
      %908 = vmatpush.bf16.msra.mxu0 0
      %909 = vmatpush.bf16.msra.mxu0 0
      %910 = vmatpush.bf16.msra.mxu0 0
      %911 = vmatpush.bf16.msra.mxu0 0
      %912 = vmatpush.bf16.msra.mxu0 0
      %913 = vmatpush.bf16.msra.mxu0 0
      %914 = vmatpush.bf16.msra.mxu0 0
      %915 = vmatpush.bf16.msra.mxu0 %v906
      %916 = vmatmul.bf16.gmra.mxu0 %v655
      %v917 = vpop.f32.mrf.mxu0
      %v918 = vpop.f32.mrf.mxu0
      %919 = vmatmul.bf16.gmra.mxu0 %v658
      %v920 = vpop.f32.mrf.mxu0
      %v921 = vadd.f32 0.0, %v920
      %v922 = vpop.f32.mrf.mxu0
      %v923 = vadd.f32 0.0, %v922
      %924 = vmatmul.bf16.gmra.mxu0 %v661
      %v925 = vpop.f32.mrf.mxu0
      %v926 = vadd.f32 0.0, %v925
      %v927 = vpop.f32.mrf.mxu0
      %v928 = vadd.f32 0.0, %v927
      %929 = vmatmul.bf16.gmra.mxu0 %v664
      %v930 = vpop.f32.mrf.mxu0
      %v931 = vadd.f32 0.0, %v930
      %v932 = vpop.f32.mrf.mxu0
      %v933 = vadd.f32 0.0, %v932
      %934 = vmatmul.bf16.gmra.mxu0 %v667
      %v935 = vpop.f32.mrf.mxu0
      %v936 = vadd.f32 0.0, %v935
      %v937 = vpop.f32.mrf.mxu0
      %v938 = vadd.f32 0.0, %v937
      %939 = vmatmul.bf16.gmra.mxu0 %v670
      %v940 = vpop.f32.mrf.mxu0
      %v941 = vpop.f32.mrf.mxu0
      %942 = vdwg.mxu0
      %v943 = vadd.f32 %v895, %v921
      %v944 = vadd.f32 %v896, %v923
      %v945 = vadd.f32 %v897, %v926
      %v946 = vadd.f32 %v898, %v928
      %v947 = vadd.f32 %v899, %v931
      %v948 = vadd.f32 %v900, %v933
      %v949 = vadd.f32 %v901, %v936
      %v950 = vadd.f32 %v902, %v938
      %s951 = scalar_lea.vmem %s3, 10
      %v952 = vld [vmem:[%s951] sm:$0x3]
      %v954 = vsel %vm568, %v952, 0
      %956 = vmatpush.bf16.msra.mxu0 0
      %957 = vmatpush.bf16.msra.mxu0 0
      %958 = vmatpush.bf16.msra.mxu0 0
      %959 = vmatpush.bf16.msra.mxu0 0
      %960 = vmatpush.bf16.msra.mxu0 0
      %961 = vmatpush.bf16.msra.mxu0 0
      %962 = vmatpush.bf16.msra.mxu0 0
      %963 = vmatpush.bf16.msra.mxu0 %v954
      %964 = vmatmul.bf16.gmra.mxu0 %v721
      %v965 = vpop.f32.mrf.mxu0
      %v966 = vpop.f32.mrf.mxu0
      %967 = vmatmul.bf16.gmra.mxu0 %v724
      %v968 = vpop.f32.mrf.mxu0
      %v969 = vadd.f32 0.0, %v968
      %v970 = vpop.f32.mrf.mxu0
      %v971 = vadd.f32 0.0, %v970
      %972 = vmatmul.bf16.gmra.mxu0 %v727
      %v973 = vpop.f32.mrf.mxu0
      %v974 = vadd.f32 0.0, %v973
      %v975 = vpop.f32.mrf.mxu0
      %v976 = vadd.f32 0.0, %v975
      %977 = vmatmul.bf16.gmra.mxu0 %v730
      %v978 = vpop.f32.mrf.mxu0
      %v979 = vadd.f32 0.0, %v978
      %v980 = vpop.f32.mrf.mxu0
      %v981 = vadd.f32 0.0, %v980
      %982 = vmatmul.bf16.gmra.mxu0 %v733
      %v983 = vpop.f32.mrf.mxu0
      %v984 = vadd.f32 0.0, %v983
      %v985 = vpop.f32.mrf.mxu0
      %v986 = vadd.f32 0.0, %v985
      %987 = vmatmul.bf16.gmra.mxu0 %v736
      %v988 = vpop.f32.mrf.mxu0
      %v989 = vadd.f32 0.0, %v988
      %v990 = vpop.f32.mrf.mxu0
      %991 = vdwg.mxu0
      %v1001 = vrot.slane %v969, 1
      %v1002 = vrot.slane %v971, 1
      %v1003 = vsel %vm786, %v1001, %v1002
      %v1004 = vrot.slane %v974, 1
      %v1005 = vsel %vm786, %v1002, %v1004
      %v1006 = vrot.slane %v976, 1
      %v1007 = vsel %vm786, %v1004, %v1006
      %v1008 = vrot.slane %v979, 1
      %v1009 = vsel %vm786, %v1006, %v1008
      %v1010 = vrot.slane %v981, 1
      %v1011 = vsel %vm786, %v1008, %v1010
      %v1012 = vrot.slane %v984, 1
      %v1013 = vsel %vm786, %v1010, %v1012
      %v1014 = vrot.slane %v986, 1
      %v1015 = vsel %vm786, %v1012, %v1014
      %v1016 = vrot.slane %v989, 1
      %v1017 = vsel %vm786, %v1014, %v1016
      %v1026 = vadd.f32 %v943, %v1003
      %v1027 = vadd.f32 %v944, %v1005
      %v1028 = vadd.f32 %v945, %v1007
      %v1029 = vadd.f32 %v946, %v1009
      %v1030 = vadd.f32 %v947, %v1011
      %v1031 = vadd.f32 %v948, %v1013
      %v1032 = vadd.f32 %v949, %v1015
      %v1033 = vadd.f32 %v950, %v1017
      %s1034 = scalar_lea.vmem %s3, 12
      %v1035 = vld [vmem:[%s1034] sm:$0x3]
      %v1037 = vsel %vm568, %v1035, 0
      %1039 = vmatpush.bf16.msra.mxu0 0
      %1040 = vmatpush.bf16.msra.mxu0 0
      %1041 = vmatpush.bf16.msra.mxu0 0
      %1042 = vmatpush.bf16.msra.mxu0 0
      %1043 = vmatpush.bf16.msra.mxu0 0
      %1044 = vmatpush.bf16.msra.mxu0 0
      %1045 = vmatpush.bf16.msra.mxu0 0
      %1046 = vmatpush.bf16.msra.mxu0 %v1037
      %1047 = vmatmul.bf16.gmra.mxu0 %v551
      %v1048 = vpop.f32.mrf.mxu0
      %v1049 = vpop.f32.mrf.mxu0
      %1050 = vmatmul.bf16.gmra.mxu0 %v554
      %v1051 = vpop.f32.mrf.mxu0
      %v1052 = vpop.f32.mrf.mxu0
      %v1053 = vadd.f32 0.0, %v1052
      %1054 = vmatmul.bf16.gmra.mxu0 %v557
      %v1055 = vpop.f32.mrf.mxu0
      %v1056 = vadd.f32 0.0, %v1055
      %v1057 = vpop.f32.mrf.mxu0
      %v1058 = vadd.f32 0.0, %v1057
      %1059 = vmatmul.bf16.gmra.mxu0 %v560
      %v1060 = vpop.f32.mrf.mxu0
      %v1061 = vadd.f32 0.0, %v1060
      %v1062 = vpop.f32.mrf.mxu0
      %v1063 = vadd.f32 0.0, %v1062
      %1064 = vmatmul.bf16.gmra.mxu0 %v563
      %v1065 = vpop.f32.mrf.mxu0
      %v1066 = vadd.f32 0.0, %v1065
      %v1067 = vpop.f32.mrf.mxu0
      %v1068 = vadd.f32 0.0, %v1067
      %1069 = vmatmul.bf16.gmra.mxu0 %v566
      %v1070 = vpop.f32.mrf.mxu0
      %v1071 = vadd.f32 0.0, %v1070
      %v1072 = vpop.f32.mrf.mxu0
      %v1073 = vadd.f32 0.0, %v1072
      %1074 = vdwg.mxu0
      %v1084 = vrot.slane %v1053, 7
      %v1085 = vrot.slane %v1056, 7
      %v1086 = vsel %vm619, %v1084, %v1085
      %v1087 = vrot.slane %v1058, 7
      %v1088 = vsel %vm619, %v1085, %v1087
      %v1089 = vrot.slane %v1061, 7
      %v1090 = vsel %vm619, %v1087, %v1089
      %v1091 = vrot.slane %v1063, 7
      %v1092 = vsel %vm619, %v1089, %v1091
      %v1093 = vrot.slane %v1066, 7
      %v1094 = vsel %vm619, %v1091, %v1093
      %v1095 = vrot.slane %v1068, 7
      %v1096 = vsel %vm619, %v1093, %v1095
      %v1097 = vrot.slane %v1071, 7
      %v1098 = vsel %vm619, %v1095, %v1097
      %v1099 = vrot.slane %v1073, 7
      %v1100 = vsel %vm619, %v1097, %v1099
      %v1109 = vadd.f32 %v1026, %v1086
      %v1110 = vadd.f32 %v1027, %v1088
      %v1111 = vadd.f32 %v1028, %v1090
      %v1112 = vadd.f32 %v1029, %v1092
      %v1113 = vadd.f32 %v1030, %v1094
      %v1114 = vadd.f32 %v1031, %v1096
      %v1115 = vadd.f32 %v1032, %v1098
      %v1116 = vadd.f32 %v1033, %v1100
      %s1117 = scalar_lea.vmem %s3, 14
      %v1118 = vld [vmem:[%s1117] sm:$0x3]
      %v1120 = vsel %vm568, %v1118, 0
      %1122 = vmatpush.bf16.msra.mxu0 0
      %1123 = vmatpush.bf16.msra.mxu0 0
      %1124 = vmatpush.bf16.msra.mxu0 0
      %1125 = vmatpush.bf16.msra.mxu0 0
      %1126 = vmatpush.bf16.msra.mxu0 0
      %1127 = vmatpush.bf16.msra.mxu0 0
      %1128 = vmatpush.bf16.msra.mxu0 0
      %1129 = vmatpush.bf16.msra.mxu0 %v1120
      %1130 = vmatmul.bf16.gmra.mxu0 %v655
      %v1131 = vpop.f32.mrf.mxu0
      %v1132 = vpop.f32.mrf.mxu0
      %1133 = vmatmul.bf16.gmra.mxu0 %v658
      %v1134 = vpop.f32.mrf.mxu0
      %v1135 = vpop.f32.mrf.mxu0
      %1136 = vmatmul.bf16.gmra.mxu0 %v661
      %v1137 = vpop.f32.mrf.mxu0
      %v1138 = vadd.f32 0.0, %v1137
      %v1139 = vpop.f32.mrf.mxu0
      %v1140 = vadd.f32 0.0, %v1139
      %1141 = vmatmul.bf16.gmra.mxu0 %v664
      %v1142 = vpop.f32.mrf.mxu0
      %v1143 = vadd.f32 0.0, %v1142
      %v1144 = vpop.f32.mrf.mxu0
      %v1145 = vadd.f32 0.0, %v1144
      %1146 = vmatmul.bf16.gmra.mxu0 %v667
      %v1147 = vpop.f32.mrf.mxu0
      %v1148 = vadd.f32 0.0, %v1147
      %v1149 = vpop.f32.mrf.mxu0
      %v1150 = vadd.f32 0.0, %v1149
      %1151 = vmatmul.bf16.gmra.mxu0 %v670
      %v1152 = vpop.f32.mrf.mxu0
      %v1153 = vadd.f32 0.0, %v1152
      %v1154 = vpop.f32.mrf.mxu0
      %v1155 = vadd.f32 0.0, %v1154
      %1156 = vdwg.mxu0
      %v1157 = vadd.f32 %v1109, %v1138
      %v1158 = vadd.f32 %v1110, %v1140
      %v1159 = vadd.f32 %v1111, %v1143
      %v1160 = vadd.f32 %v1112, %v1145
      %v1161 = vadd.f32 %v1113, %v1148
      %v1162 = vadd.f32 %v1114, %v1150
      %v1163 = vadd.f32 %v1115, %v1153
      %v1164 = vadd.f32 %v1116, %v1155
      %s1165 = scalar_lea.vmem %s3, 16
      %v1166 = vld [vmem:[%s1165] sm:$0x3]
      %v1168 = vsel %vm568, %v1166, 0
      %1170 = vmatpush.bf16.msra.mxu0 0
      %1171 = vmatpush.bf16.msra.mxu0 0
      %1172 = vmatpush.bf16.msra.mxu0 0
      %1173 = vmatpush.bf16.msra.mxu0 0
      %1174 = vmatpush.bf16.msra.mxu0 0
      %1175 = vmatpush.bf16.msra.mxu0 0
      %1176 = vmatpush.bf16.msra.mxu0 0
      %1177 = vmatpush.bf16.msra.mxu0 %v1168
      %1178 = vmatmul.bf16.gmra.mxu0 %v721
      %v1179 = vpop.f32.mrf.mxu0
      %v1180 = vadd.f32 0.0, %v1179
      %v1181 = vpop.f32.mrf.mxu0
      %1182 = vmatmul.bf16.gmra.mxu0 %v724
      %v1183 = vpop.f32.mrf.mxu0
      %v1184 = vpop.f32.mrf.mxu0
      %1185 = vmatmul.bf16.gmra.mxu0 %v727
      %v1186 = vpop.f32.mrf.mxu0
      %v1187 = vadd.f32 0.0, %v1186
      %v1188 = vpop.f32.mrf.mxu0
      %v1189 = vadd.f32 0.0, %v1188
      %1190 = vmatmul.bf16.gmra.mxu0 %v730
      %v1191 = vpop.f32.mrf.mxu0
      %v1192 = vadd.f32 0.0, %v1191
      %v1193 = vpop.f32.mrf.mxu0
      %v1194 = vadd.f32 0.0, %v1193
      %1195 = vmatmul.bf16.gmra.mxu0 %v733
      %v1196 = vpop.f32.mrf.mxu0
      %v1197 = vadd.f32 0.0, %v1196
      %v1198 = vpop.f32.mrf.mxu0
      %v1199 = vadd.f32 0.0, %v1198
      %1200 = vmatmul.bf16.gmra.mxu0 %v736
      %v1201 = vpop.f32.mrf.mxu0
      %v1202 = vadd.f32 0.0, %v1201
      %v1203 = vpop.f32.mrf.mxu0
      %v1204 = vadd.f32 0.0, %v1203
      %1205 = vdwg.mxu0
      %v1214 = vrot.slane %v1187, 1
      %v1215 = vrot.slane %v1189, 1
      %v1216 = vsel %vm786, %v1214, %v1215
      %v1217 = vrot.slane %v1192, 1
      %v1218 = vsel %vm786, %v1215, %v1217
      %v1219 = vrot.slane %v1194, 1
      %v1220 = vsel %vm786, %v1217, %v1219
      %v1221 = vrot.slane %v1197, 1
      %v1222 = vsel %vm786, %v1219, %v1221
      %v1223 = vrot.slane %v1199, 1
      %v1224 = vsel %vm786, %v1221, %v1223
      %v1225 = vrot.slane %v1202, 1
      %v1226 = vsel %vm786, %v1223, %v1225
      %v1227 = vrot.slane %v1204, 1
      %v1228 = vsel %vm786, %v1225, %v1227
      %v1238 = vrot.slane %v1180, 1
      %v1240 = vsel %vm786, %v1227, %v1238
      %v1241 = vadd.f32 %v1157, %v1216
      %v1242 = vadd.f32 %v1158, %v1218
      %v1243 = vadd.f32 %v1159, %v1220
      %v1244 = vadd.f32 %v1160, %v1222
      %v1245 = vadd.f32 %v1161, %v1224
      %v1246 = vadd.f32 %v1162, %v1226
      %v1247 = vadd.f32 %v1163, %v1228
      %v1248 = vadd.f32 %v1164, %v1240
      %v1250 = vperm.slane %v547, 0
      %v1252 = vadd.f32 %v1241, %v1250
      %v1253 = vadd.f32 %v1242, %v1250
      %v1254 = vadd.f32 %v1243, %v1250
      %v1255 = vadd.f32 %v1244, %v1250
      %v1256 = vadd.f32 %v1245, %v1250
      %v1257 = vadd.f32 %v1246, %v1250
      %v1258 = vadd.f32 %v1247, %v1250
      %v1259 = vadd.f32 %v1248, %v1250
      %v1260 = vmax.f32 %v1252, 0.0
      %v1261 = vmax.f32 %v1253, 0.0
      %v1262 = vmax.f32 %v1254, 0.0
      %v1263 = vmax.f32 %v1255, 0.0
      %v1264 = vmax.f32 %v1256, 0.0
      %v1265 = vmax.f32 %v1257, 0.0
      %v1266 = vmax.f32 %v1258, 0.0
      %v1267 = vmax.f32 %v1259, 0.0
      %v1268 = vpack.c.bf16 %v1260, %v1260
      %v1269 = vpack.c.bf16 %v1261, %v1261
      %v1270 = vpack.c.bf16 %v1262, %v1262
      %v1271 = vpack.c.bf16 %v1263, %v1263
      %v1272 = vpack.c.bf16 %v1264, %v1264
      %v1273 = vpack.c.bf16 %v1265, %v1265
      %v1274 = vpack.c.bf16 %v1266, %v1266
      %v1275 = vpack.c.bf16 %v1267, %v1267
      %vm1276 = vcmask 27648
      %1277 = vst.msk [vmem:[%s391] sm:$0xf] %vm1276, %v1268
      %1278 = vst.msk [vmem:[%s391 + $0x4] sm:$0xf] %vm1276, %v1269
      %1279 = vst.msk [vmem:[%s391 + $0x8] sm:$0xf] %vm1276, %v1270
      %1280 = vst.msk [vmem:[%s391 + $0xc] sm:$0xf] %vm1276, %v1271
      %1281 = vst.msk [vmem:[%s391 + $0x10] sm:$0xf] %vm1276, %v1272
      %1282 = vst.msk [vmem:[%s391 + $0x14] sm:$0xf] %vm1276, %v1273
      %1283 = vst.msk [vmem:[%s391 + $0x18] sm:$0xf] %vm1276, %v1274
      %1284 = vst.msk [vmem:[%s391 + $0x1c] sm:$0xf] %vm1276, %v1275
      %s1285 = smul.u32 4, %s21
      %p1286 = scmp.lt.s32.totalorder %s20, 1
      %s1287 = scalar_select %p1286, %s20, 1
      %p1288 = scmp.lt.s32.totalorder %s1285, 15
      %s1289 = scalar_select %p1288, %s1285, 15
      %s1290 = smul.addr %s1289, 2
      %s1291 = smul.addr %s1287, 32
      %s1292 = sadd.s32 %s1290, %s1291
      %s1293 = smul.addr %s1292, 4
      %s1294 = scalar_lea.vmem %s5, %s1293
      // Predicated region
      $region41: #{decoder_block_forward_nchw.5} parent=39 // pred_check
        %p1295 = pneg %p190
      $region42: #{decoder_block_forward_nchw.5} parent=39 // pred_check_branch
        %1297 = sbr.rel (%p1295) target = $region44
      $region43: #{decoder_block_forward_nchw.5} parent=39 // pred_region
        %s1298 = smul.u32 4, %s21
      $region44: #{decoder_block_forward_nchw.5} parent=39 // pred_fallthru
        _
    $region40: #{decoder_block_forward_nchw.5} parent=5 // pred_fallthru
      _
    %p1299 = scmp.le.s32.totalorder 2, %s11
    // Predicated region
    $region45: #{decoder_block_forward_nchw.5} parent=5 // pred_check
      %p1300 = pneg %p1299
    $region46: #{decoder_block_forward_nchw.5} parent=5 // pred_check_branch
      %1302 = sbr.rel (%p1300) target = $region48
    $region47: #{decoder_block_forward_nchw.5} parent=5 // pred_region
      %s1303 = ssub.s32 %s11, 2
      // Predicated region
      $region49: #{decoder_block_forward_nchw.5} parent=47 // pred_check
        %p1304 = pneg %p196
      $region50: #{decoder_block_forward_nchw.5} parent=47 // pred_check_branch
        %1306 = sbr.rel (%p1304) target = $region52
      $region51: #{decoder_block_forward_nchw.5} parent=47 // pred_region
        %s1307 = smul.u32 4, %s23
        %p1308 = scmp.lt.s32.totalorder %s22, 1
        %s1309 = scalar_select %p1308, %s22, 1
        %p1310 = scmp.lt.s32.totalorder %s1307, 15
        %s1311 = scalar_select %p1310, %s1307, 15
        %s1312 = smul.addr %s1311, 2
        %s1313 = smul.addr %s1309, 32
        %s1314 = sadd.s32 %s1312, %s1313
        %s1315 = smul.addr %s1314, 4
        %s1316 = scalar_lea.vmem %s5, %s1315
      $region52: #{decoder_block_forward_nchw.5} parent=47 // pred_fallthru
        _
    $region48: #{decoder_block_forward_nchw.5} parent=5 // pred_fallthru
      _
  $region6: #{decoder_block_forward_nchw.5} parent=0 // loop_footer
    %s15 = sadd.s32 1, %s11
  $region7: #{decoder_block_forward_nchw.5} parent=0 // loop_footer_branch
    %10 = sbr.rel target = $region3
  $region8: #{decoder_block_forward_nchw.5} parent=0 // loop_exit
    _

// kernel: decoder_block_forward_nchw.4
$region0: #{decoder_block_forward_nchw.4}
  #allocation0 [shape = 'u32[]', space=smem, size = 0x4, offset = 0x4, fixed_abs, tag = 'smem constant byte address 0x4 - core index']
  #allocation1 [shape = 'u32[72,128]{1,0:T(1,128)}', space=vmem, size = 0x9000, scoped, tag = 'internal scratch']
  %s0 = inlined_call_operand.vmem [shape: bf16[2,16,16,4], index: 0, kind: input, shape index: {}, may-alias: {0,1,2}]
  %s1 = inlined_call_operand.vmem [shape: bf16[2,16,16,4], index: 1, kind: input, shape index: {}, may-alias: {0,1,2}]
  %s2 = inlined_call_operand.vmem [shape: bf16[2,16,16,4], index: 2, kind: input, shape index: {}, may-alias: {0,1,2}]
  %s3 = inlined_call_operand.vmem [shape: bf16[2,16,16,4], index: 3, kind: input, shape index: {}, may-alias: {3,4,5}]
  %s4 = inlined_call_operand.vmem [shape: bf16[2,16,16,4], index: 4, kind: input, shape index: {}, may-alias: {3,4,5}]
  %s5 = inlined_call_operand.vmem [shape: bf16[2,16,16,4], index: 5, kind: input, shape index: {}, may-alias: {3,4,5}]
  %s6 = inlined_call_operand.vmem [shape: bf16[9,4,4], index: 6, kind: input, shape index: {}]
  %s7 = inlined_call_operand.vmem [shape: bf16[9,4,4], index: 7, kind: input, shape index: {}]
  %s8 = inlined_call_operand.vmem [shape: f32[1,4], index: 8, kind: input, shape index: {}]
  %s9 = inlined_call_operand.vmem [shape: bf16[2,16,16,4], index: 9, kind: output, shape index: {}]
  %s10 = sld [smem:[#allocation0]]
  $region69: #{decoder_block_forward_nchw.4} parent=0
    _
  %s12 = ssub.s32 1, %s10
  %s13 = scalar_select 0, %s12, %s10
  loop: start=0, step=1, limit=10
  $region2: #{decoder_block_forward_nchw.4} parent=0 // loop_pre_header
    _
  $region3: #{decoder_block_forward_nchw.4} parent=0 // loop_header
    %s15 = sphi 0, %s19
    %p16 = scmp.ge.s32.totalorder %s15, 10
    %s22 = sphi 0, %s34
    %s23 = sphi 0, %s30
    %s24 = sphi 0, %s22
    %s25 = sphi 0, %s23
    %s26 = sphi 0, %s24
    %s27 = sphi 0, %s25
    %s47 = sphi 0, %s49
    %s50 = sphi 0, %s47
    %s51 = sphi 0, %s50
    %s67 = sphi 0, %s51
    %s75 = sphi 0, %s77
    %s78 = sphi 0, %s75
    %s79 = sphi 0, %s78
    %s95 = sphi 0, %s79
    %s111 = sphi 0, %s113
    %s114 = sphi 0, %s111
    %s115 = sphi 0, %s114
    %s131 = sphi 0, %s115
    %s147 = sphi 0, %s149
    %s150 = sphi 0, %s147
    %s151 = sphi 0, %s150
    %s167 = sphi 0, %s151
    %s175 = sphi 0, %s177
    %s178 = sphi 0, %s175
    %s179 = sphi 0, %s178
    %s195 = sphi 0, %s179
    %s211 = sphi 0, %s213
    %s214 = sphi 0, %s211
    %s215 = sphi 0, %s214
    %s231 = sphi 0, %s215
    %s235 = sphi 0, %s235
    %s237 = sphi 0, %s235
    %s238 = sphi 0, %s237
    %s252 = sphi 0, %s238
    %s256 = sphi 0, %s256
    %s258 = sphi 0, %s256
    %s259 = sphi 0, %s258
    %s273 = sphi 0, %s259
    %s277 = sphi 0, %s277
    %s279 = sphi 0, %s277
    %s280 = sphi 0, %s279
    %s294 = sphi 0, %s280
    %s302 = sphi 0, %s304
    %s305 = sphi 0, %s302
    %s306 = sphi 0, %s305
    %s322 = sphi 0, %s306
  $region4: #{decoder_block_forward_nchw.4} parent=0 // loop_header_branch
    %18 = sbr.rel (%p16) target = $region8
  $region5: #{decoder_block_forward_nchw.4} parent=0 // loop_body
    %s20 = ssub.s32 %s15, 1
    %s21 = ssub.s32 %s15, 2
    %s28 = sadd.s32 1, %s23
    %p29 = scmp.ge.s32.totalorder %s28, 4
    %s30 = scalar_select %p29, 0, %s28
    %s31 = sadd.s32 1, %s22
    %s32 = scalar_select %p29, %s31, %s22
    %p33 = scmp.ge.s32.totalorder %s32, 2
    %s34 = scalar_select %p33, 0, %s32
    %s35 = smul.u32 %s23, 4
    %s36 = ssub.s32 %s35, 1
    %p37 = scmp.gt.s32.totalorder %s36, 0
    %s38 = scalar_select %p37, %s36, 0
    %s39 = smul.u32 %s30, 4
    %s40 = ssub.s32 %s39, 1
    %p41 = scmp.gt.s32.totalorder %s40, 0
    %s42 = scalar_select %p41, %s40, 0
    %s43 = ssub.s32 %s22, %s34
    %s44 = ssub.s32 %s38, %s42
    %s45 = sor.u32 %s43, %s44
    %p46 = scmp.eq.s32.totalorder %s45, 0
    %s48 = sadd.s32 %s47, 1
    %s49 = scalar_select %p46, %s47, %s48
    %p52 = pneg %p46
    %p53 = scmp.eq.s32.totalorder %s15, 7
    %p54 = por %p52, %p53
    %p55 = scmp.ne.s32.totalorder %s47, %s50
    %p56 = scmp.eq.s32.totalorder %s15, 0
    %p57 = por %p55, %p56
    %p58 = scmp.ne.s32.totalorder %s47, %s50
    %p59 = scmp.eq.s32.totalorder %s20, 7
    %p60 = por %p58, %p59
    %p61 = scmp.ne.s32.totalorder %s50, %s51
    %p62 = scmp.eq.s32.totalorder %s20, 0
    %p63 = por %p61, %p62
    %p64 = scmp.ne.s32.totalorder %s50, %s51
    %p65 = scmp.eq.s32.totalorder %s21, 7
    %p66 = por %p64, %p65
    %p68 = scmp.ne.s32.totalorder %s51, %s67
    %p69 = scmp.eq.s32.totalorder %s21, 0
    %p70 = por %p68, %p69
    %s71 = ssub.s32 %s22, %s34
    %s72 = ssub.s32 %s23, %s30
    %s73 = sor.u32 %s71, %s72
    %p74 = scmp.eq.s32.totalorder %s73, 0
    %s76 = sadd.s32 %s75, 1
    %s77 = scalar_select %p74, %s75, %s76
    %p80 = pneg %p74
    %p81 = scmp.eq.s32.totalorder %s15, 7
    %p82 = por %p80, %p81
    %p83 = scmp.ne.s32.totalorder %s75, %s78
    %p84 = scmp.eq.s32.totalorder %s15, 0
    %p85 = por %p83, %p84
    %p86 = scmp.ne.s32.totalorder %s75, %s78
    %p87 = scmp.eq.s32.totalorder %s20, 7
    %p88 = por %p86, %p87
    %p89 = scmp.ne.s32.totalorder %s78, %s79
    %p90 = scmp.eq.s32.totalorder %s20, 0
    %p91 = por %p89, %p90
    %p92 = scmp.ne.s32.totalorder %s78, %s79
    %p93 = scmp.eq.s32.totalorder %s21, 7
    %p94 = por %p92, %p93
    %p96 = scmp.ne.s32.totalorder %s79, %s95
    %p97 = scmp.eq.s32.totalorder %s21, 0
    %p98 = por %p96, %p97
    %s99 = smul.u32 %s23, 4
    %s100 = sadd.s32 %s99, 4
    %p101 = scmp.lt.s32.totalorder %s100, 15
    %s102 = scalar_select %p101, %s100, 15
    %s103 = smul.u32 %s30, 4
    %s104 = sadd.s32 %s103, 4
    %p105 = scmp.lt.s32.totalorder %s104, 15
    %s106 = scalar_select %p105, %s104, 15
    %s107 = ssub.s32 %s22, %s34
    %s108 = ssub.s32 %s102, %s106
    %s109 = sor.u32 %s107, %s108
    %p110 = scmp.eq.s32.totalorder %s109, 0
    %s112 = sadd.s32 %s111, 1
    %s113 = scalar_select %p110, %s111, %s112
    %p116 = pneg %p110
    %p117 = scmp.eq.s32.totalorder %s15, 7
    %p118 = por %p116, %p117
    %p119 = scmp.ne.s32.totalorder %s111, %s114
    %p120 = scmp.eq.s32.totalorder %s15, 0
    %p121 = por %p119, %p120
    %p122 = scmp.ne.s32.totalorder %s111, %s114
    %p123 = scmp.eq.s32.totalorder %s20, 7
    %p124 = por %p122, %p123
    %p125 = scmp.ne.s32.totalorder %s114, %s115
    %p126 = scmp.eq.s32.totalorder %s20, 0
    %p127 = por %p125, %p126
    %p128 = scmp.ne.s32.totalorder %s114, %s115
    %p129 = scmp.eq.s32.totalorder %s21, 7
    %p130 = por %p128, %p129
    %p132 = scmp.ne.s32.totalorder %s115, %s131
    %p133 = scmp.eq.s32.totalorder %s21, 0
    %p134 = por %p132, %p133
    %s135 = smul.u32 %s23, 4
    %s136 = ssub.s32 %s135, 1
    %p137 = scmp.gt.s32.totalorder %s136, 0
    %s138 = scalar_select %p137, %s136, 0
    %s139 = smul.u32 %s30, 4
    %s140 = ssub.s32 %s139, 1
    %p141 = scmp.gt.s32.totalorder %s140, 0
    %s142 = scalar_select %p141, %s140, 0
    %s143 = ssub.s32 %s22, %s34
    %s144 = ssub.s32 %s138, %s142
    %s145 = sor.u32 %s143, %s144
    %p146 = scmp.eq.s32.totalorder %s145, 0
    %s148 = sadd.s32 %s147, 1
    %s149 = scalar_select %p146, %s147, %s148
    %p152 = pneg %p146
    %p153 = scmp.eq.s32.totalorder %s15, 7
    %p154 = por %p152, %p153
    %p155 = scmp.ne.s32.totalorder %s147, %s150
    %p156 = scmp.eq.s32.totalorder %s15, 0
    %p157 = por %p155, %p156
    %p158 = scmp.ne.s32.totalorder %s147, %s150
    %p159 = scmp.eq.s32.totalorder %s20, 7
    %p160 = por %p158, %p159
    %p161 = scmp.ne.s32.totalorder %s150, %s151
    %p162 = scmp.eq.s32.totalorder %s20, 0
    %p163 = por %p161, %p162
    %p164 = scmp.ne.s32.totalorder %s150, %s151
    %p165 = scmp.eq.s32.totalorder %s21, 7
    %p166 = por %p164, %p165
    %p168 = scmp.ne.s32.totalorder %s151, %s167
    %p169 = scmp.eq.s32.totalorder %s21, 0
    %p170 = por %p168, %p169
    %s171 = ssub.s32 %s22, %s34
    %s172 = ssub.s32 %s23, %s30
    %s173 = sor.u32 %s171, %s172
    %p174 = scmp.eq.s32.totalorder %s173, 0
    %s176 = sadd.s32 %s175, 1
    %s177 = scalar_select %p174, %s175, %s176
    %p180 = pneg %p174
    %p181 = scmp.eq.s32.totalorder %s15, 7
    %p182 = por %p180, %p181
    %p183 = scmp.ne.s32.totalorder %s175, %s178
    %p184 = scmp.eq.s32.totalorder %s15, 0
    %p185 = por %p183, %p184
    %p186 = scmp.ne.s32.totalorder %s175, %s178
    %p187 = scmp.eq.s32.totalorder %s20, 7
    %p188 = por %p186, %p187
    %p189 = scmp.ne.s32.totalorder %s178, %s179
    %p190 = scmp.eq.s32.totalorder %s20, 0
    %p191 = por %p189, %p190
    %p192 = scmp.ne.s32.totalorder %s178, %s179
    %p193 = scmp.eq.s32.totalorder %s21, 7
    %p194 = por %p192, %p193
    %p196 = scmp.ne.s32.totalorder %s179, %s195
    %p197 = scmp.eq.s32.totalorder %s21, 0
    %p198 = por %p196, %p197
    %s199 = smul.u32 %s23, 4
    %s200 = sadd.s32 %s199, 4
    %p201 = scmp.lt.s32.totalorder %s200, 15
    %s202 = scalar_select %p201, %s200, 15
    %s203 = smul.u32 %s30, 4
    %s204 = sadd.s32 %s203, 4
    %p205 = scmp.lt.s32.totalorder %s204, 15
    %s206 = scalar_select %p205, %s204, 15
    %s207 = ssub.s32 %s22, %s34
    %s208 = ssub.s32 %s202, %s206
    %s209 = sor.u32 %s207, %s208
    %p210 = scmp.eq.s32.totalorder %s209, 0
    %s212 = sadd.s32 %s211, 1
    %s213 = scalar_select %p210, %s211, %s212
    %p216 = pneg %p210
    %p217 = scmp.eq.s32.totalorder %s15, 7
    %p218 = por %p216, %p217
    %p219 = scmp.ne.s32.totalorder %s211, %s214
    %p220 = scmp.eq.s32.totalorder %s15, 0
    %p221 = por %p219, %p220
    %p222 = scmp.ne.s32.totalorder %s211, %s214
    %p223 = scmp.eq.s32.totalorder %s20, 7
    %p224 = por %p222, %p223
    %p225 = scmp.ne.s32.totalorder %s214, %s215
    %p226 = scmp.eq.s32.totalorder %s20, 0
    %p227 = por %p225, %p226
    %p228 = scmp.ne.s32.totalorder %s214, %s215
    %p229 = scmp.eq.s32.totalorder %s21, 7
    %p230 = por %p228, %p229
    %p232 = scmp.ne.s32.totalorder %s215, %s231
    %p233 = scmp.eq.s32.totalorder %s21, 0
    %p234 = por %p232, %p233
    %s236 = sadd.s32 %s235, 1
    %p239 = scmp.eq.s32.totalorder %s15, 7
    %p240 = scmp.ne.s32.totalorder %s235, %s237
    %p241 = scmp.eq.s32.totalorder %s15, 0
    %p242 = por %p240, %p241
    %p243 = scmp.ne.s32.totalorder %s235, %s237
    %p244 = scmp.eq.s32.totalorder %s20, 7
    %p245 = por %p243, %p244
    %p246 = scmp.ne.s32.totalorder %s237, %s238
    %p247 = scmp.eq.s32.totalorder %s20, 0
    %p248 = por %p246, %p247
    %p249 = scmp.ne.s32.totalorder %s237, %s238
    %p250 = scmp.eq.s32.totalorder %s21, 7
    %p251 = por %p249, %p250
    %p253 = scmp.ne.s32.totalorder %s238, %s252
    %p254 = scmp.eq.s32.totalorder %s21, 0
    %p255 = por %p253, %p254
    %s257 = sadd.s32 %s256, 1
    %p260 = scmp.eq.s32.totalorder %s15, 7
    %p261 = scmp.ne.s32.totalorder %s256, %s258
    %p262 = scmp.eq.s32.totalorder %s15, 0
    %p263 = por %p261, %p262
    %p264 = scmp.ne.s32.totalorder %s256, %s258
    %p265 = scmp.eq.s32.totalorder %s20, 7
    %p266 = por %p264, %p265
    %p267 = scmp.ne.s32.totalorder %s258, %s259
    %p268 = scmp.eq.s32.totalorder %s20, 0
    %p269 = por %p267, %p268
    %p270 = scmp.ne.s32.totalorder %s258, %s259
    %p271 = scmp.eq.s32.totalorder %s21, 7
    %p272 = por %p270, %p271
    %p274 = scmp.ne.s32.totalorder %s259, %s273
    %p275 = scmp.eq.s32.totalorder %s21, 0
    %p276 = por %p274, %p275
    %s278 = sadd.s32 %s277, 1
    %p281 = scmp.eq.s32.totalorder %s15, 7
    %p282 = scmp.ne.s32.totalorder %s277, %s279
    %p283 = scmp.eq.s32.totalorder %s15, 0
    %p284 = por %p282, %p283
    %p285 = scmp.ne.s32.totalorder %s277, %s279
    %p286 = scmp.eq.s32.totalorder %s20, 7
    %p287 = por %p285, %p286
    %p288 = scmp.ne.s32.totalorder %s279, %s280
    %p289 = scmp.eq.s32.totalorder %s20, 0
    %p290 = por %p288, %p289
    %p291 = scmp.ne.s32.totalorder %s279, %s280
    %p292 = scmp.eq.s32.totalorder %s21, 7
    %p293 = por %p291, %p292
    %p295 = scmp.ne.s32.totalorder %s280, %s294
    %p296 = scmp.eq.s32.totalorder %s21, 0
    %p297 = por %p295, %p296
    %s298 = ssub.s32 %s22, %s34
    %s299 = ssub.s32 %s23, %s30
    %s300 = sor.u32 %s298, %s299
    %p301 = scmp.eq.s32.totalorder %s300, 0
    %s303 = sadd.s32 %s302, 1
    %s304 = scalar_select %p301, %s302, %s303
    %p307 = pneg %p301
    %p308 = scmp.eq.s32.totalorder %s15, 7
    %p309 = por %p307, %p308
    %p310 = scmp.ne.s32.totalorder %s302, %s305
    %p311 = scmp.eq.s32.totalorder %s15, 0
    %p312 = por %p310, %p311
    %p313 = scmp.ne.s32.totalorder %s302, %s305
    %p314 = scmp.eq.s32.totalorder %s20, 7
    %p315 = por %p313, %p314
    %p316 = scmp.ne.s32.totalorder %s305, %s306
    %p317 = scmp.eq.s32.totalorder %s20, 0
    %p318 = por %p316, %p317
    %p319 = scmp.ne.s32.totalorder %s305, %s306
    %p320 = scmp.eq.s32.totalorder %s21, 7
    %p321 = por %p319, %p320
    %p323 = scmp.ne.s32.totalorder %s306, %s322
    %p324 = scmp.eq.s32.totalorder %s21, 0
    %p325 = por %p323, %p324
    %p326 = scmp.le.s32.totalorder 1, %s15
    %p327 = scmp.lt.s32.totalorder %s15, 9
    %p328 = pnand %p326, %p327
    %p329 = pneg %p328
    // Predicated region
    $region9: #{decoder_block_forward_nchw.4} parent=5 // pred_check
      _
    $region10: #{decoder_block_forward_nchw.4} parent=5 // pred_check_branch
      %331 = sbr.rel (%p328) target = $region12
    $region11: #{decoder_block_forward_nchw.4} parent=5 // pred_region
      %s332 = ssub.s32 %s15, 1
      // Predicated region
      $region13: #{decoder_block_forward_nchw.4} parent=11 // pred_check
        %p333 = pneg %p248
      $region14: #{decoder_block_forward_nchw.4} parent=11 // pred_check_branch
        %335 = sbr.rel (%p333) target = $region16
      $region15: #{decoder_block_forward_nchw.4} parent=11 // pred_region
        _
      $region16: #{decoder_block_forward_nchw.4} parent=11 // pred_fallthru
        _
      // Predicated region
      $region17: #{decoder_block_forward_nchw.4} parent=11 // pred_check
        %p336 = pneg %p269
      $region18: #{decoder_block_forward_nchw.4} parent=11 // pred_check_branch
        %338 = sbr.rel (%p336) target = $region20
      $region19: #{decoder_block_forward_nchw.4} parent=11 // pred_region
        _
      $region20: #{decoder_block_forward_nchw.4} parent=11 // pred_fallthru
        _
      // Predicated region
      $region21: #{decoder_block_forward_nchw.4} parent=11 // pred_check
        %p339 = pneg %p290
      $region22: #{decoder_block_forward_nchw.4} parent=11 // pred_check_branch
        %341 = sbr.rel (%p339) target = $region24
      $region23: #{decoder_block_forward_nchw.4} parent=11 // pred_region
        _
      $region24: #{decoder_block_forward_nchw.4} parent=11 // pred_fallthru
        _
    $region12: #{decoder_block_forward_nchw.4} parent=5 // pred_fallthru
      _
    %p342 = scmp.lt.s32.totalorder %s15, 8
    // Predicated region
    $region25: #{decoder_block_forward_nchw.4} parent=5 // pred_check
      %p343 = pneg %p342
    $region26: #{decoder_block_forward_nchw.4} parent=5 // pred_check_branch
      %345 = sbr.rel (%p343) target = $region28
    $region27: #{decoder_block_forward_nchw.4} parent=5 // pred_region
      // Predicated region
      $region29: #{decoder_block_forward_nchw.4} parent=27 // pred_check
        %p346 = pneg %p57
      $region30: #{decoder_block_forward_nchw.4} parent=27 // pred_check_branch
        %348 = sbr.rel (%p346) target = $region32
      $region31: #{decoder_block_forward_nchw.4} parent=27 // pred_region
        %s349 = smul.u32 %s23, 4
        %s350 = ssub.s32 %s349, 1
        %p351 = scmp.gt.s32.totalorder %s350, 0
        %s352 = scalar_select %p351, %s350, 0
        %p353 = scmp.lt.s32.totalorder %s22, 1
        %s354 = scalar_select %p353, %s22, 1
        %p355 = scmp.lt.s32.totalorder %s352, 15
        %s356 = scalar_select %p355, %s352, 15
        %s357 = smul.addr %s356, 2
        %s358 = smul.addr %s354, 32
        %s359 = sadd.s32 %s357, %s358
        %s360 = smul.addr %s359, 4
        %s361 = scalar_lea.vmem %s0, %s360
        %s362 = smul.u32 %s23, 4
        %s363 = ssub.s32 %s362, 1
        %p364 = scmp.gt.s32.totalorder %s363, 0
        %s365 = scalar_select %p364, %s363, 0
      $region32: #{decoder_block_forward_nchw.4} parent=27 // pred_fallthru
        _
      // Predicated region
      $region33: #{decoder_block_forward_nchw.4} parent=27 // pred_check
        %p366 = pneg %p85
      $region34: #{decoder_block_forward_nchw.4} parent=27 // pred_check_branch
        %368 = sbr.rel (%p366) target = $region36
      $region35: #{decoder_block_forward_nchw.4} parent=27 // pred_region
        %s369 = smul.u32 4, %s23
        %p370 = scmp.lt.s32.totalorder %s22, 1
        %s371 = scalar_select %p370, %s22, 1
        %p372 = scmp.lt.s32.totalorder %s369, 15
        %s373 = scalar_select %p372, %s369, 15
        %s374 = smul.addr %s373, 2
        %s375 = smul.addr %s371, 32
        %s376 = sadd.s32 %s374, %s375
        %s377 = smul.addr %s376, 4
        %s378 = scalar_lea.vmem %s1, %s377
        %s379 = smul.u32 4, %s23
      $region36: #{decoder_block_forward_nchw.4} parent=27 // pred_fallthru
        _
      // Predicated region
      $region37: #{decoder_block_forward_nchw.4} parent=27 // pred_check
        %p380 = pneg %p121
      $region38: #{decoder_block_forward_nchw.4} parent=27 // pred_check_branch
        %382 = sbr.rel (%p380) target = $region40
      $region39: #{decoder_block_forward_nchw.4} parent=27 // pred_region
        %s383 = smul.u32 %s23, 4
        %s384 = sadd.s32 %s383, 4
        %p385 = scmp.lt.s32.totalorder %s384, 15
        %s386 = scalar_select %p385, %s384, 15
        %p387 = scmp.lt.s32.totalorder %s22, 1
        %s388 = scalar_select %p387, %s22, 1
        %p389 = scmp.lt.s32.totalorder %s386, 15
        %s390 = scalar_select %p389, %s386, 15
        %s391 = smul.addr %s390, 2
        %s392 = smul.addr %s388, 32
        %s393 = sadd.s32 %s391, %s392
        %s394 = smul.addr %s393, 4
        %s395 = scalar_lea.vmem %s2, %s394
        %s396 = smul.u32 %s23, 4
        %s397 = sadd.s32 %s396, 4
        %p398 = scmp.lt.s32.totalorder %s397, 15
        %s399 = scalar_select %p398, %s397, 15
      $region40: #{decoder_block_forward_nchw.4} parent=27 // pred_fallthru
        _
      // Predicated region
      $region41: #{decoder_block_forward_nchw.4} parent=27 // pred_check
        %p400 = pneg %p157
      $region42: #{decoder_block_forward_nchw.4} parent=27 // pred_check_branch
        %402 = sbr.rel (%p400) target = $region44
      $region43: #{decoder_block_forward_nchw.4} parent=27 // pred_region
        %s403 = smul.u32 %s23, 4
        %s404 = ssub.s32 %s403, 1
        %p405 = scmp.gt.s32.totalorder %s404, 0
        %s406 = scalar_select %p405, %s404, 0
        %p407 = scmp.lt.s32.totalorder %s22, 1
        %s408 = scalar_select %p407, %s22, 1
        %p409 = scmp.lt.s32.totalorder %s406, 15
        %s410 = scalar_select %p409, %s406, 15
        %s411 = smul.addr %s410, 2
        %s412 = smul.addr %s408, 32
        %s413 = sadd.s32 %s411, %s412
        %s414 = smul.addr %s413, 4
        %s415 = scalar_lea.vmem %s3, %s414
        %s416 = smul.u32 %s23, 4
        %s417 = ssub.s32 %s416, 1
        %p418 = scmp.gt.s32.totalorder %s417, 0
        %s419 = scalar_select %p418, %s417, 0
      $region44: #{decoder_block_forward_nchw.4} parent=27 // pred_fallthru
        _
      // Predicated region
      $region45: #{decoder_block_forward_nchw.4} parent=27 // pred_check
        %p420 = pneg %p185
      $region46: #{decoder_block_forward_nchw.4} parent=27 // pred_check_branch
        %422 = sbr.rel (%p420) target = $region48
      $region47: #{decoder_block_forward_nchw.4} parent=27 // pred_region
        %s423 = smul.u32 4, %s23
        %p424 = scmp.lt.s32.totalorder %s22, 1
        %s425 = scalar_select %p424, %s22, 1
        %p426 = scmp.lt.s32.totalorder %s423, 15
        %s427 = scalar_select %p426, %s423, 15
        %s428 = smul.addr %s427, 2
        %s429 = smul.addr %s425, 32
        %s430 = sadd.s32 %s428, %s429
        %s431 = smul.addr %s430, 4
        %s432 = scalar_lea.vmem %s4, %s431
        %s433 = smul.u32 4, %s23
      $region48: #{decoder_block_forward_nchw.4} parent=27 // pred_fallthru
        _
      // Predicated region
      $region49: #{decoder_block_forward_nchw.4} parent=27 // pred_check
        %p434 = pneg %p221
      $region50: #{decoder_block_forward_nchw.4} parent=27 // pred_check_branch
        %436 = sbr.rel (%p434) target = $region52
      $region51: #{decoder_block_forward_nchw.4} parent=27 // pred_region
        %s437 = smul.u32 %s23, 4
        %s438 = sadd.s32 %s437, 4
        %p439 = scmp.lt.s32.totalorder %s438, 15
        %s440 = scalar_select %p439, %s438, 15
        %p441 = scmp.lt.s32.totalorder %s22, 1
        %s442 = scalar_select %p441, %s22, 1
        %p443 = scmp.lt.s32.totalorder %s440, 15
        %s444 = scalar_select %p443, %s440, 15
        %s445 = smul.addr %s444, 2
        %s446 = smul.addr %s442, 32
        %s447 = sadd.s32 %s445, %s446
        %s448 = smul.addr %s447, 4
        %s449 = scalar_lea.vmem %s5, %s448
        %s450 = smul.u32 %s23, 4
        %s451 = sadd.s32 %s450, 4
        %p452 = scmp.lt.s32.totalorder %s451, 15
        %s453 = scalar_select %p452, %s451, 15
      $region52: #{decoder_block_forward_nchw.4} parent=27 // pred_fallthru
        _
    $region28: #{decoder_block_forward_nchw.4} parent=5 // pred_fallthru
      _
    %p454 = scmp.le.s32.totalorder 1, %s15
    %p455 = scmp.lt.s32.totalorder %s15, 9
    %p456 = pnand %p454, %p455
    %p457 = pneg %p456
    // Predicated region
    $region53: #{decoder_block_forward_nchw.4} parent=5 // pred_check
      _
    $region54: #{decoder_block_forward_nchw.4} parent=5 // pred_check_branch
      %459 = sbr.rel (%p456) target = $region56
    $region55: #{decoder_block_forward_nchw.4} parent=5 // pred_region
      %s460 = ssub.s32 %s15, 1
      %s461 = smul.u32 %s25, 4
      %s462 = ssub.s32 %s461, 1
      %p463 = scmp.gt.s32.totalorder %s462, 0
      %s464 = scalar_select %p463, %s462, 0
      %p465 = scmp.lt.s32.totalorder %s24, 1
      %s466 = scalar_select %p465, %s24, 1
      %p467 = scmp.lt.s32.totalorder %s464, 15
      %s468 = scalar_select %p467, %s464, 15
      %s469 = smul.addr %s468, 2
      %s470 = smul.addr %s466, 32
      %s471 = sadd.s32 %s469, %s470
      %s472 = smul.addr %s471, 4
      %s473 = scalar_lea.vmem %s0, %s472
      %p474 = pneg %p63
      %p475 = pneg %p60
      %s476 = smul.u32 4, %s25
      %p477 = scmp.lt.s32.totalorder %s24, 1
      %s478 = scalar_select %p477, %s24, 1
      %p479 = scmp.lt.s32.totalorder %s476, 15
      %s480 = scalar_select %p479, %s476, 15
      %s481 = smul.addr %s480, 2
      %s482 = smul.addr %s478, 32
      %s483 = sadd.s32 %s481, %s482
      %s484 = smul.addr %s483, 4
      %s485 = scalar_lea.vmem %s1, %s484
      %p486 = pneg %p91
      %p487 = pneg %p88
      %s488 = smul.u32 %s25, 4
      %s489 = sadd.s32 %s488, 4
      %p490 = scmp.lt.s32.totalorder %s489, 15
      %s491 = scalar_select %p490, %s489, 15
      %p492 = scmp.lt.s32.totalorder %s24, 1
      %s493 = scalar_select %p492, %s24, 1
      %p494 = scmp.lt.s32.totalorder %s491, 15
      %s495 = scalar_select %p494, %s491, 15
      %s496 = smul.addr %s495, 2
      %s497 = smul.addr %s493, 32
      %s498 = sadd.s32 %s496, %s497
      %s499 = smul.addr %s498, 4
      %s500 = scalar_lea.vmem %s2, %s499
      %p501 = pneg %p127
      %p502 = pneg %p124
      %s503 = smul.u32 %s25, 4
      %s504 = ssub.s32 %s503, 1
      %p505 = scmp.gt.s32.totalorder %s504, 0
      %s506 = scalar_select %p505, %s504, 0
      %p507 = scmp.lt.s32.totalorder %s24, 1
      %s508 = scalar_select %p507, %s24, 1
      %p509 = scmp.lt.s32.totalorder %s506, 15
      %s510 = scalar_select %p509, %s506, 15
      %s511 = smul.addr %s510, 2
      %s512 = smul.addr %s508, 32
      %s513 = sadd.s32 %s511, %s512
      %s514 = smul.addr %s513, 4
      %s515 = scalar_lea.vmem %s3, %s514
      %p516 = pneg %p163
      %p517 = pneg %p160
      %s518 = smul.u32 4, %s25
      %p519 = scmp.lt.s32.totalorder %s24, 1
      %s520 = scalar_select %p519, %s24, 1
      %p521 = scmp.lt.s32.totalorder %s518, 15
      %s522 = scalar_select %p521, %s518, 15
      %s523 = smul.addr %s522, 2
      %s524 = smul.addr %s520, 32
      %s525 = sadd.s32 %s523, %s524
      %s526 = smul.addr %s525, 4
      %s527 = scalar_lea.vmem %s4, %s526
      %p528 = pneg %p191
      %p529 = pneg %p188
      %s530 = smul.u32 %s25, 4
      %s531 = sadd.s32 %s530, 4
      %p532 = scmp.lt.s32.totalorder %s531, 15
      %s533 = scalar_select %p532, %s531, 15
      %p534 = scmp.lt.s32.totalorder %s24, 1
      %s535 = scalar_select %p534, %s24, 1
      %p536 = scmp.lt.s32.totalorder %s533, 15
      %s537 = scalar_select %p536, %s533, 15
      %s538 = smul.addr %s537, 2
      %s539 = smul.addr %s535, 32
      %s540 = sadd.s32 %s538, %s539
      %s541 = smul.addr %s540, 4
      %s542 = scalar_lea.vmem %s5, %s541
      %p543 = pneg %p227
      %p544 = pneg %p224
      %p545 = pneg %p248
      %p546 = pneg %p245
      %p547 = pneg %p269
      %p548 = pneg %p266
      %p549 = pneg %p290
      %p550 = pneg %p287
      %p551 = pneg %p318
      %p552 = pneg %p315
      %s553 = smul.u32 4, %s25
      %p554 = scmp.lt.s32.totalorder %s24, 1
      %s555 = scalar_select %p554, %s24, 1
      %p556 = scmp.lt.s32.totalorder %s553, 15
      %s557 = scalar_select %p556, %s553, 15
      %s558 = smul.addr %s557, 2
      %s559 = smul.addr %s555, 32
      %s560 = sadd.s32 %s558, %s559
      %s561 = smul.addr %s560, 4
      %s562 = scalar_lea.vmem %s9, %s561
      %s563 = smul.u32 %s25, 4
      %s564 = ssub.s32 %s563, 1
      %p565 = scmp.gt.s32.totalorder %s564, 0
      %s566 = scalar_select %p565, %s564, 0
      %p567 = scmp.lt.s32.totalorder %s24, 1
      %s568 = scalar_select %p567, %s24, 1
      %p569 = scmp.lt.s32.totalorder %s566, 15
      %s570 = scalar_select %p569, %s566, 15
      %s571 = smul.addr %s570, 2
      %s572 = smul.addr %s568, 32
      %s573 = sadd.s32 %s571, %s572
      %s574 = smul.addr %s573, 4
      %s575 = scalar_lea.vmem %s0, %s574
      %s576 = smul.u32 %s25, 4
      %s577 = ssub.s32 %s576, 1
      %p578 = scmp.gt.s32.totalorder %s577, 0
      %s579 = scalar_select %p578, %s577, 0
      %s580 = smul.u32 4, %s25
      %p581 = scmp.lt.s32.totalorder %s24, 1
      %s582 = scalar_select %p581, %s24, 1
      %p583 = scmp.lt.s32.totalorder %s580, 15
      %s584 = scalar_select %p583, %s580, 15
      %s585 = smul.addr %s584, 2
      %s586 = smul.addr %s582, 32
      %s587 = sadd.s32 %s585, %s586
      %s588 = smul.addr %s587, 4
      %s589 = scalar_lea.vmem %s1, %s588
      %s590 = smul.u32 4, %s25
      %s591 = smul.u32 %s25, 4
      %s592 = sadd.s32 %s591, 4
      %p593 = scmp.lt.s32.totalorder %s592, 15
      %s594 = scalar_select %p593, %s592, 15
      %p595 = scmp.lt.s32.totalorder %s24, 1
      %s596 = scalar_select %p595, %s24, 1
      %p597 = scmp.lt.s32.totalorder %s594, 15
      %s598 = scalar_select %p597, %s594, 15
      %s599 = smul.addr %s598, 2
      %s600 = smul.addr %s596, 32
      %s601 = sadd.s32 %s599, %s600
      %s602 = smul.addr %s601, 4
      %s603 = scalar_lea.vmem %s2, %s602
      %s604 = smul.u32 %s25, 4
      %s605 = sadd.s32 %s604, 4
      %p606 = scmp.lt.s32.totalorder %s605, 15
      %s607 = scalar_select %p606, %s605, 15
      %s608 = smul.u32 %s25, 4
      %s609 = ssub.s32 %s608, 1
      %p610 = scmp.gt.s32.totalorder %s609, 0
      %s611 = scalar_select %p610, %s609, 0
      %p612 = scmp.lt.s32.totalorder %s24, 1
      %s613 = scalar_select %p612, %s24, 1
      %p614 = scmp.lt.s32.totalorder %s611, 15
      %s615 = scalar_select %p614, %s611, 15
      %s616 = smul.addr %s615, 2
      %s617 = smul.addr %s613, 32
      %s618 = sadd.s32 %s616, %s617
      %s619 = smul.addr %s618, 4
      %s620 = scalar_lea.vmem %s3, %s619
      %s621 = smul.u32 %s25, 4
      %s622 = ssub.s32 %s621, 1
      %p623 = scmp.gt.s32.totalorder %s622, 0
      %s624 = scalar_select %p623, %s622, 0
      %s625 = smul.u32 4, %s25
      %p626 = scmp.lt.s32.totalorder %s24, 1
      %s627 = scalar_select %p626, %s24, 1
      %p628 = scmp.lt.s32.totalorder %s625, 15
      %s629 = scalar_select %p628, %s625, 15
      %s630 = smul.addr %s629, 2
      %s631 = smul.addr %s627, 32
      %s632 = sadd.s32 %s630, %s631
      %s633 = smul.addr %s632, 4
      %s634 = scalar_lea.vmem %s4, %s633
      %s635 = smul.u32 4, %s25
      %s636 = smul.u32 %s25, 4
      %s637 = sadd.s32 %s636, 4
      %p638 = scmp.lt.s32.totalorder %s637, 15
      %s639 = scalar_select %p638, %s637, 15
      %p640 = scmp.lt.s32.totalorder %s24, 1
      %s641 = scalar_select %p640, %s24, 1
      %p642 = scmp.lt.s32.totalorder %s639, 15
      %s643 = scalar_select %p642, %s639, 15
      %s644 = smul.addr %s643, 2
      %s645 = smul.addr %s641, 32
      %s646 = sadd.s32 %s644, %s645
      %s647 = smul.addr %s646, 4
      %s648 = scalar_lea.vmem %s5, %s647
      %s649 = smul.u32 %s25, 4
      %s650 = sadd.s32 %s649, 4
      %p651 = scmp.lt.s32.totalorder %s650, 15
      %s652 = scalar_select %p651, %s650, 15
      %s653 = smul.u32 4, %s25
      %p654 = scmp.lt.s32.totalorder %s24, 1
      %s655 = scalar_select %p654, %s24, 1
      %p656 = scmp.lt.s32.totalorder %s653, 15
      %s657 = scalar_select %p656, %s653, 15
      %s658 = smul.addr %s657, 2
      %s659 = smul.addr %s655, 32
      %s660 = sadd.s32 %s658, %s659
      %s661 = smul.addr %s660, 4
      %s662 = scalar_lea.vmem %s9, %s661
      %s663 = smul.u32 4, %s25
      %v667 = vlaneseq
      %v668 = vshrl.u32 %v667, 7
      %v669 = vadd.s32 %v668, 8
      %vm670 = vcmp.ne.s32.totalorder %v668, 15
      %vm671 = vcmp.ne.s32.totalorder %v669, 15
      %vm672 = vcmp.ne.s32.totalorder %v668, 0
      %vm673 = vcmp.ne.s32.totalorder %v669, 0
      %v674 = vld [vmem:[%s575] sm:$0xf]
      %v675 = vld [vmem:[%s575 + $0x4] sm:$0xf]
      %v676 = vld [vmem:[%s603] sm:$0xf]
      %v677 = vld [vmem:[%s603 + $0x4] sm:$0xf]
      %p678 = scmp.ne.s32.totalorder %s25, 0
      %s679 = scalar_select %p678, 1, 0
      %s680 = scvt.s32.f32 %s679
      %p682 = scmp.ne.f32.partialorder %s680, %s680
      %s683 = sshrl.u32 %s680, 16
      %s684 = sand.u32 %s683, 1
      %s685 = sadd.s32 32767, %s684
      %s686 = sadd.s32 %s680, %s685
      %s687 = sand.u32 %s686, 4294901760
      %s688 = scalar_select %p682, 2143289344, %s687
      %s690 = sshrl.u32 %s688, 16
      %s691 = sshll.u32 %s690, 16
      %s692 = sor.u32 %s690, %s691
      %v693 = vstv %s692
      %v695 = vunpack.c.l.bf16 %v674
      %v696 = vunpack.c.l.bf16 %v675
      %v697 = vunpack.c.l.bf16 %v693
      %v698 = vmul.f32 %v695, %v697
      %v699 = vmul.f32 %v696, %v697
      %v700 = vpack.c.bf16 %v698, %v698
      %v701 = vpack.c.bf16 %v699, %v699
      %p702 = scmp.ne.s32.totalorder %s25, 3
      %s703 = scalar_select %p702, 1, 0
      %s704 = scvt.s32.f32 %s703
      %p706 = scmp.ne.f32.partialorder %s704, %s704
      %s707 = sshrl.u32 %s704, 16
      %s708 = sand.u32 %s707, 1
      %s709 = sadd.s32 32767, %s708
      %s710 = sadd.s32 %s704, %s709
      %s711 = sand.u32 %s710, 4294901760
      %s712 = scalar_select %p706, 2143289344, %s711
      %s714 = sshrl.u32 %s712, 16
      %s715 = sshll.u32 %s714, 16
      %s716 = sor.u32 %s714, %s715
      %v717 = vstv %s716
      %v719 = vunpack.c.l.bf16 %v676
      %v720 = vunpack.c.l.bf16 %v677
      %v721 = vunpack.c.l.bf16 %v717
      %v722 = vmul.f32 %v719, %v721
      %v723 = vmul.f32 %v720, %v721
      %v724 = vpack.c.bf16 %v722, %v722
      %v725 = vpack.c.bf16 %v723, %v723
      %v726 = vld [vmem:[%s589] sm:$0xf]
      %v727 = vld [vmem:[%s589 + $0x4] sm:$0xf]
      %v728 = vld [vmem:[%s589 + $0x8] sm:$0xf]
      %v729 = vld [vmem:[%s589 + $0xc] sm:$0xf]
      %v730 = vld [vmem:[%s589 + $0x10] sm:$0xf]
      %v731 = vld [vmem:[%s589 + $0x14] sm:$0xf]
      %v732 = vld [vmem:[%s589 + $0x18] sm:$0xf]
      %v733 = vld [vmem:[%s589 + $0x1c] sm:$0xf]
      %v736 = vunpack.c.l.b16 %v700
      %v737 = vunpack.c.l.b16 %v701
      %v738 = vpack.c.b16 %v737, %v736
      %v748 = vunpack.c.l.b16 %v726
      %v749 = vunpack.c.l.b16 %v727
      %v750 = vunpack.c.l.b16 %v728
      %v751 = vunpack.c.l.b16 %v729
      %v752 = vunpack.c.l.b16 %v730
      %v753 = vunpack.c.l.b16 %v731
      %v754 = vunpack.c.l.b16 %v732
      %v755 = vunpack.c.l.b16 %v733
      %v756 = vpack.c.b16 %v749, %v748
      %v757 = vpack.c.b16 %v751, %v750
      %v758 = vpack.c.b16 %v753, %v752
      %v759 = vpack.c.b16 %v755, %v754
      %v766 = vunpack.c.l.b16 %v724
      %v767 = vunpack.c.l.b16 %v725
      %v768 = vpack.c.b16 %v767, %v766
      %v770 = vsel %vm670, 1, 0
      %v771 = vsel %vm671, 1, 0
      %vm772 = vcmp.eq.s32.totalorder %v770, 1
      %vm773 = vcmp.eq.s32.totalorder %v771, 1
      %vm774 = vmpackc.low %vm772, %vm772
      %vm775 = vmpackc.low %vm773, %vm773
      %v776 = vsel %vm774, 65537, 0
      %v777 = vsel %vm775, 65537, 0
      %v778 = vunpack.c.l.b16 %v776
      %v779 = vunpack.c.l.b16 %v777
      %v780 = vpack.c.b16 %v779, %v778
      %v781 = vunpack.c.l.b16 %v780
      %v782 = vunpack.c.h.b16 %v780
      %v783 = vunpack.c.l.b16 0
      %v784 = vunpack.c.h.b16 0
      %vm785 = vcmp.ne.s32.totalorder %v781, %v783
      %vm786 = vcmp.ne.s32.totalorder %v782, %v784
      %vm787 = vmpackc.low %vm786, %vm785
      %v788 = vsel %vm787, %v738, 0
      %v789 = vsel %vm787, %v756, 0
      %v790 = vsel %vm787, %v757, 0
      %v791 = vsel %vm787, %v758, 0
      %v792 = vsel %vm787, %v759, 0
      %v793 = vsel %vm787, %v768, 0
      %v794 = vsel %vm672, 1, 0
      %v795 = vsel %vm673, 1, 0
      %vm796 = vcmp.eq.s32.totalorder %v794, 1
      %vm797 = vcmp.eq.s32.totalorder %v795, 1
      %vm798 = vmpackc.low %vm796, %vm796
      %vm799 = vmpackc.low %vm797, %vm797
      %v800 = vsel %vm798, 65537, 0
      %v801 = vsel %vm799, 65537, 0
      %v802 = vunpack.c.l.b16 %v800
      %v803 = vunpack.c.l.b16 %v801
      %v804 = vpack.c.b16 %v803, %v802
      %v805 = vunpack.c.l.b16 %v804
      %v806 = vunpack.c.h.b16 %v804
      %v807 = vunpack.c.l.b16 0
      %v808 = vunpack.c.h.b16 0
      %vm809 = vcmp.ne.s32.totalorder %v805, %v807
      %vm810 = vcmp.ne.s32.totalorder %v806, %v808
      %vm811 = vmpackc.low %vm810, %vm809
      %v812 = vsel %vm811, %v738, 0
      %v813 = vsel %vm811, %v756, 0
      %v814 = vsel %vm811, %v757, 0
      %v815 = vsel %vm811, %v758, 0
      %v816 = vsel %vm811, %v759, 0
      %v817 = vsel %vm811, %v768, 0
      %v818 = vld [vmem:[%s620] sm:$0xf]
      %v819 = vld [vmem:[%s620 + $0x4] sm:$0xf]
      %v820 = vld [vmem:[%s648] sm:$0xf]
      %v821 = vld [vmem:[%s648 + $0x4] sm:$0xf]
      %v822 = vunpack.c.l.bf16 %v818
      %v823 = vunpack.c.l.bf16 %v819
      %v824 = vmul.f32 %v822, %v697
      %v825 = vmul.f32 %v823, %v697
      %v826 = vpack.c.bf16 %v824, %v824
      %v827 = vpack.c.bf16 %v825, %v825
      %v828 = vunpack.c.l.bf16 %v820
      %v829 = vunpack.c.l.bf16 %v821
      %v830 = vmul.f32 %v828, %v721
      %v831 = vmul.f32 %v829, %v721
      %v832 = vpack.c.bf16 %v830, %v830
      %v833 = vpack.c.bf16 %v831, %v831
      %v834 = vld [vmem:[%s634] sm:$0xf]
      %v835 = vld [vmem:[%s634 + $0x4] sm:$0xf]
      %v836 = vld [vmem:[%s634 + $0x8] sm:$0xf]
      %v837 = vld [vmem:[%s634 + $0xc] sm:$0xf]
      %v838 = vld [vmem:[%s634 + $0x10] sm:$0xf]
      %v839 = vld [vmem:[%s634 + $0x14] sm:$0xf]
      %v840 = vld [vmem:[%s634 + $0x18] sm:$0xf]
      %v841 = vld [vmem:[%s634 + $0x1c] sm:$0xf]
      %v844 = vunpack.c.l.b16 %v826
      %v845 = vunpack.c.l.b16 %v827
      %v846 = vpack.c.b16 %v845, %v844
      %v856 = vunpack.c.l.b16 %v834
      %v857 = vunpack.c.l.b16 %v835
      %v858 = vunpack.c.l.b16 %v836
      %v859 = vunpack.c.l.b16 %v837
      %v860 = vunpack.c.l.b16 %v838
      %v861 = vunpack.c.l.b16 %v839
      %v862 = vunpack.c.l.b16 %v840
      %v863 = vunpack.c.l.b16 %v841
      %v864 = vpack.c.b16 %v857, %v856
      %v865 = vpack.c.b16 %v859, %v858
      %v866 = vpack.c.b16 %v861, %v860
      %v867 = vpack.c.b16 %v863, %v862
      %v874 = vunpack.c.l.b16 %v832
      %v875 = vunpack.c.l.b16 %v833
      %v876 = vpack.c.b16 %v875, %v874
      %v878 = vsel %vm787, %v846, 0
      %v879 = vsel %vm787, %v864, 0
      %v880 = vsel %vm787, %v865, 0
      %v881 = vsel %vm787, %v866, 0
      %v882 = vsel %vm787, %v867, 0
      %v883 = vsel %vm787, %v876, 0
      %v884 = vsel %vm811, %v846, 0
      %v885 = vsel %vm811, %v864, 0
      %v886 = vsel %vm811, %v865, 0
      %v887 = vsel %vm811, %v866, 0
      %v888 = vsel %vm811, %v867, 0
      %v889 = vsel %vm811, %v876, 0
      %v890 = vld [vmem:[%s8] sm:$0x1]
      %v891 = vld [vmem:[%s6] sm:$0x3]
      %vm892 = vcmask 31744
      %v894 = vsel %vm892, %v788, 0
      %v897 = vsel %vm892, %v789, 0
      %v900 = vsel %vm892, %v790, 0
      %v903 = vsel %vm892, %v791, 0
      %v906 = vsel %vm892, %v792, 0
      %v909 = vsel %vm892, %v793, 0
      %vm911 = vcmask 1041408
      %v913 = vsel %vm911, %v891, 0
      %915 = vmatpush.bf16.msra.mxu0 0
      %916 = vmatpush.bf16.msra.mxu0 0
      %917 = vmatpush.bf16.msra.mxu0 0
      %918 = vmatpush.bf16.msra.mxu0 0
      %919 = vmatpush.bf16.msra.mxu0 0
      %920 = vmatpush.bf16.msra.mxu0 0
      %921 = vmatpush.bf16.msra.mxu0 0
      %922 = vmatpush.bf16.msra.mxu0 %v913
      %923 = vmatmul.bf16.gmra.mxu0 %v894
      %v924 = vpop.f32.mrf.mxu0
      %v925 = vadd.f32 0.0, %v924
      %v926 = vpop.f32.mrf.mxu0
      %v927 = vadd.f32 0.0, %v926
      %928 = vmatmul.bf16.gmra.mxu0 %v897
      %v929 = vpop.f32.mrf.mxu0
      %v930 = vadd.f32 0.0, %v929
      %v931 = vpop.f32.mrf.mxu0
      %v932 = vadd.f32 0.0, %v931
      %933 = vmatmul.bf16.gmra.mxu0 %v900
      %v934 = vpop.f32.mrf.mxu0
      %v935 = vadd.f32 0.0, %v934
      %v936 = vpop.f32.mrf.mxu0
      %v937 = vadd.f32 0.0, %v936
      %938 = vmatmul.bf16.gmra.mxu0 %v903
      %v939 = vpop.f32.mrf.mxu0
      %v940 = vadd.f32 0.0, %v939
      %v941 = vpop.f32.mrf.mxu0
      %v942 = vadd.f32 0.0, %v941
      %943 = vmatmul.bf16.gmra.mxu0 %v906
      %v944 = vpop.f32.mrf.mxu0
      %v945 = vpop.f32.mrf.mxu0
      %946 = vmatmul.bf16.gmra.mxu0 %v909
      %v947 = vpop.f32.mrf.mxu0
      %v948 = vpop.f32.mrf.mxu0
      %v949 = vadd.f32 0.0, %v948
      %950 = vdwg.mxu0
      %v952 = vrot.slane %v949, 7
      %vm962 = vcmask 1040384
      %v963 = vrot.slane %v925, 7
      %v964 = vrot.slane %v927, 7
      %v965 = vsel %vm962, %v963, %v964
      %v966 = vrot.slane %v930, 7
      %v967 = vsel %vm962, %v964, %v966
      %v968 = vrot.slane %v932, 7
      %v969 = vsel %vm962, %v966, %v968
      %v970 = vrot.slane %v935, 7
      %v971 = vsel %vm962, %v968, %v970
      %v972 = vrot.slane %v937, 7
      %v973 = vsel %vm962, %v970, %v972
      %v974 = vrot.slane %v940, 7
      %v975 = vsel %vm962, %v972, %v974
      %v976 = vrot.slane %v942, 7
      %v977 = vsel %vm962, %v974, %v976
      %v986 = vsel %vm962, %v952, %v963
      %v987 = vadd.f32 %v986, 0.0
      %v988 = vadd.f32 %v965, 0.0
      %v989 = vadd.f32 %v967, 0.0
      %v990 = vadd.f32 %v969, 0.0
      %v991 = vadd.f32 %v971, 0.0
      %v992 = vadd.f32 %v973, 0.0
      %v993 = vadd.f32 %v975, 0.0
      %v994 = vadd.f32 %v977, 0.0
      %s995 = scalar_lea.vmem %s6, 2
      %v996 = vld [vmem:[%s995] sm:$0x3]
      %v998 = vsel %vm892, %v738, 0
      %v1001 = vsel %vm892, %v756, 0
      %v1004 = vsel %vm892, %v757, 0
      %v1007 = vsel %vm892, %v758, 0
      %v1010 = vsel %vm892, %v759, 0
      %v1013 = vsel %vm892, %v768, 0
      %v1016 = vsel %vm911, %v996, 0
      %1018 = vmatpush.bf16.msra.mxu0 0
      %1019 = vmatpush.bf16.msra.mxu0 0
      %1020 = vmatpush.bf16.msra.mxu0 0
      %1021 = vmatpush.bf16.msra.mxu0 0
      %1022 = vmatpush.bf16.msra.mxu0 0
      %1023 = vmatpush.bf16.msra.mxu0 0
      %1024 = vmatpush.bf16.msra.mxu0 0
      %1025 = vmatpush.bf16.msra.mxu0 %v1016
      %1026 = vmatmul.bf16.gmra.mxu0 %v998
      %v1027 = vpop.f32.mrf.mxu0
      %v1028 = vadd.f32 0.0, %v1027
      %v1029 = vpop.f32.mrf.mxu0
      %v1030 = vadd.f32 0.0, %v1029
      %1031 = vmatmul.bf16.gmra.mxu0 %v1001
      %v1032 = vpop.f32.mrf.mxu0
      %v1033 = vadd.f32 0.0, %v1032
      %v1034 = vpop.f32.mrf.mxu0
      %v1035 = vadd.f32 0.0, %v1034
      %1036 = vmatmul.bf16.gmra.mxu0 %v1004
      %v1037 = vpop.f32.mrf.mxu0
      %v1038 = vadd.f32 0.0, %v1037
      %v1039 = vpop.f32.mrf.mxu0
      %v1040 = vadd.f32 0.0, %v1039
      %1041 = vmatmul.bf16.gmra.mxu0 %v1007
      %v1042 = vpop.f32.mrf.mxu0
      %v1043 = vadd.f32 0.0, %v1042
      %v1044 = vpop.f32.mrf.mxu0
      %v1045 = vadd.f32 0.0, %v1044
      %1046 = vmatmul.bf16.gmra.mxu0 %v1010
      %v1047 = vpop.f32.mrf.mxu0
      %v1048 = vpop.f32.mrf.mxu0
      %1049 = vmatmul.bf16.gmra.mxu0 %v1013
      %v1050 = vpop.f32.mrf.mxu0
      %v1051 = vpop.f32.mrf.mxu0
      %1052 = vdwg.mxu0
      %v1053 = vadd.f32 %v987, %v1028
      %v1054 = vadd.f32 %v988, %v1030
      %v1055 = vadd.f32 %v989, %v1033
      %v1056 = vadd.f32 %v990, %v1035
      %v1057 = vadd.f32 %v991, %v1038
      %v1058 = vadd.f32 %v992, %v1040
      %v1059 = vadd.f32 %v993, %v1043
      %v1060 = vadd.f32 %v994, %v1045
      %s1061 = scalar_lea.vmem %s6, 4
      %v1062 = vld [vmem:[%s1061] sm:$0x3]
      %v1064 = vsel %vm892, %v812, 0
      %v1067 = vsel %vm892, %v813, 0
      %v1070 = vsel %vm892, %v814, 0
      %v1073 = vsel %vm892, %v815, 0
      %v1076 = vsel %vm892, %v816, 0
      %v1079 = vsel %vm892, %v817, 0
      %v1082 = vsel %vm911, %v1062, 0
      %1084 = vmatpush.bf16.msra.mxu0 0
      %1085 = vmatpush.bf16.msra.mxu0 0
      %1086 = vmatpush.bf16.msra.mxu0 0
      %1087 = vmatpush.bf16.msra.mxu0 0
      %1088 = vmatpush.bf16.msra.mxu0 0
      %1089 = vmatpush.bf16.msra.mxu0 0
      %1090 = vmatpush.bf16.msra.mxu0 0
      %1091 = vmatpush.bf16.msra.mxu0 %v1082
      %1092 = vmatmul.bf16.gmra.mxu0 %v1064
      %v1093 = vpop.f32.mrf.mxu0
      %v1094 = vadd.f32 0.0, %v1093
      %v1095 = vpop.f32.mrf.mxu0
      %v1096 = vadd.f32 0.0, %v1095
      %1097 = vmatmul.bf16.gmra.mxu0 %v1067
      %v1098 = vpop.f32.mrf.mxu0
      %v1099 = vadd.f32 0.0, %v1098
      %v1100 = vpop.f32.mrf.mxu0
      %v1101 = vadd.f32 0.0, %v1100
      %1102 = vmatmul.bf16.gmra.mxu0 %v1070
      %v1103 = vpop.f32.mrf.mxu0
      %v1104 = vadd.f32 0.0, %v1103
      %v1105 = vpop.f32.mrf.mxu0
      %v1106 = vadd.f32 0.0, %v1105
      %1107 = vmatmul.bf16.gmra.mxu0 %v1073
      %v1108 = vpop.f32.mrf.mxu0
      %v1109 = vadd.f32 0.0, %v1108
      %v1110 = vpop.f32.mrf.mxu0
      %v1111 = vadd.f32 0.0, %v1110
      %1112 = vmatmul.bf16.gmra.mxu0 %v1076
      %v1113 = vpop.f32.mrf.mxu0
      %v1114 = vadd.f32 0.0, %v1113
      %v1115 = vpop.f32.mrf.mxu0
      %1116 = vmatmul.bf16.gmra.mxu0 %v1079
      %v1117 = vpop.f32.mrf.mxu0
      %v1118 = vpop.f32.mrf.mxu0
      %1119 = vdwg.mxu0
      %vm1129 = vcmask 1046528
      %v1130 = vrot.slane %v1094, 1
      %v1131 = vrot.slane %v1096, 1
      %v1132 = vsel %vm1129, %v1130, %v1131
      %v1133 = vrot.slane %v1099, 1
      %v1134 = vsel %vm1129, %v1131, %v1133
      %v1135 = vrot.slane %v1101, 1
      %v1136 = vsel %vm1129, %v1133, %v1135
      %v1137 = vrot.slane %v1104, 1
      %v1138 = vsel %vm1129, %v1135, %v1137
      %v1139 = vrot.slane %v1106, 1
      %v1140 = vsel %vm1129, %v1137, %v1139
      %v1141 = vrot.slane %v1109, 1
      %v1142 = vsel %vm1129, %v1139, %v1141
      %v1143 = vrot.slane %v1111, 1
      %v1144 = vsel %vm1129, %v1141, %v1143
      %v1145 = vrot.slane %v1114, 1
      %v1146 = vsel %vm1129, %v1143, %v1145
      %v1155 = vadd.f32 %v1053, %v1132
      %v1156 = vadd.f32 %v1054, %v1134
      %v1157 = vadd.f32 %v1055, %v1136
      %v1158 = vadd.f32 %v1056, %v1138
      %v1159 = vadd.f32 %v1057, %v1140
      %v1160 = vadd.f32 %v1058, %v1142
      %v1161 = vadd.f32 %v1059, %v1144
      %v1162 = vadd.f32 %v1060, %v1146
      %s1163 = scalar_lea.vmem %s6, 6
      %v1164 = vld [vmem:[%s1163] sm:$0x3]
      %v1166 = vsel %vm911, %v1164, 0
      %1168 = vmatpush.bf16.msra.mxu0 0
      %1169 = vmatpush.bf16.msra.mxu0 0
      %1170 = vmatpush.bf16.msra.mxu0 0
      %1171 = vmatpush.bf16.msra.mxu0 0
      %1172 = vmatpush.bf16.msra.mxu0 0
      %1173 = vmatpush.bf16.msra.mxu0 0
      %1174 = vmatpush.bf16.msra.mxu0 0
      %1175 = vmatpush.bf16.msra.mxu0 %v1166
      %1176 = vmatmul.bf16.gmra.mxu0 %v894
      %v1177 = vpop.f32.mrf.mxu0
      %v1178 = vpop.f32.mrf.mxu0
      %v1179 = vadd.f32 0.0, %v1178
      %1180 = vmatmul.bf16.gmra.mxu0 %v897
      %v1181 = vpop.f32.mrf.mxu0
      %v1182 = vadd.f32 0.0, %v1181
      %v1183 = vpop.f32.mrf.mxu0
      %v1184 = vadd.f32 0.0, %v1183
      %1185 = vmatmul.bf16.gmra.mxu0 %v900
      %v1186 = vpop.f32.mrf.mxu0
      %v1187 = vadd.f32 0.0, %v1186
      %v1188 = vpop.f32.mrf.mxu0
      %v1189 = vadd.f32 0.0, %v1188
      %1190 = vmatmul.bf16.gmra.mxu0 %v903
      %v1191 = vpop.f32.mrf.mxu0
      %v1192 = vadd.f32 0.0, %v1191
      %v1193 = vpop.f32.mrf.mxu0
      %v1194 = vadd.f32 0.0, %v1193
      %1195 = vmatmul.bf16.gmra.mxu0 %v906
      %v1196 = vpop.f32.mrf.mxu0
      %v1197 = vadd.f32 0.0, %v1196
      %v1198 = vpop.f32.mrf.mxu0
      %v1199 = vadd.f32 0.0, %v1198
      %1200 = vmatmul.bf16.gmra.mxu0 %v909
      %v1201 = vpop.f32.mrf.mxu0
      %v1202 = vpop.f32.mrf.mxu0
      %1203 = vdwg.mxu0
      %v1213 = vrot.slane %v1179, 7
      %v1214 = vrot.slane %v1182, 7
      %v1215 = vsel %vm962, %v1213, %v1214
      %v1216 = vrot.slane %v1184, 7
      %v1217 = vsel %vm962, %v1214, %v1216
      %v1218 = vrot.slane %v1187, 7
      %v1219 = vsel %vm962, %v1216, %v1218
      %v1220 = vrot.slane %v1189, 7
      %v1221 = vsel %vm962, %v1218, %v1220
      %v1222 = vrot.slane %v1192, 7
      %v1223 = vsel %vm962, %v1220, %v1222
      %v1224 = vrot.slane %v1194, 7
      %v1225 = vsel %vm962, %v1222, %v1224
      %v1226 = vrot.slane %v1197, 7
      %v1227 = vsel %vm962, %v1224, %v1226
      %v1228 = vrot.slane %v1199, 7
      %v1229 = vsel %vm962, %v1226, %v1228
      %v1238 = vadd.f32 %v1155, %v1215
      %v1239 = vadd.f32 %v1156, %v1217
      %v1240 = vadd.f32 %v1157, %v1219
      %v1241 = vadd.f32 %v1158, %v1221
      %v1242 = vadd.f32 %v1159, %v1223
      %v1243 = vadd.f32 %v1160, %v1225
      %v1244 = vadd.f32 %v1161, %v1227
      %v1245 = vadd.f32 %v1162, %v1229
      %s1246 = scalar_lea.vmem %s6, 8
      %v1247 = vld [vmem:[%s1246] sm:$0x3]
      %v1249 = vsel %vm911, %v1247, 0
      %1251 = vmatpush.bf16.msra.mxu0 0
      %1252 = vmatpush.bf16.msra.mxu0 0
      %1253 = vmatpush.bf16.msra.mxu0 0
      %1254 = vmatpush.bf16.msra.mxu0 0
      %1255 = vmatpush.bf16.msra.mxu0 0
      %1256 = vmatpush.bf16.msra.mxu0 0
      %1257 = vmatpush.bf16.msra.mxu0 0
      %1258 = vmatpush.bf16.msra.mxu0 %v1249
      %1259 = vmatmul.bf16.gmra.mxu0 %v998
      %v1260 = vpop.f32.mrf.mxu0
      %v1261 = vpop.f32.mrf.mxu0
      %1262 = vmatmul.bf16.gmra.mxu0 %v1001
      %v1263 = vpop.f32.mrf.mxu0
      %v1264 = vadd.f32 0.0, %v1263
      %v1265 = vpop.f32.mrf.mxu0
      %v1266 = vadd.f32 0.0, %v1265
      %1267 = vmatmul.bf16.gmra.mxu0 %v1004
      %v1268 = vpop.f32.mrf.mxu0
      %v1269 = vadd.f32 0.0, %v1268
      %v1270 = vpop.f32.mrf.mxu0
      %v1271 = vadd.f32 0.0, %v1270
      %1272 = vmatmul.bf16.gmra.mxu0 %v1007
      %v1273 = vpop.f32.mrf.mxu0
      %v1274 = vadd.f32 0.0, %v1273
      %v1275 = vpop.f32.mrf.mxu0
      %v1276 = vadd.f32 0.0, %v1275
      %1277 = vmatmul.bf16.gmra.mxu0 %v1010
      %v1278 = vpop.f32.mrf.mxu0
      %v1279 = vadd.f32 0.0, %v1278
      %v1280 = vpop.f32.mrf.mxu0
      %v1281 = vadd.f32 0.0, %v1280
      %1282 = vmatmul.bf16.gmra.mxu0 %v1013
      %v1283 = vpop.f32.mrf.mxu0
      %v1284 = vpop.f32.mrf.mxu0
      %1285 = vdwg.mxu0
      %v1286 = vadd.f32 %v1238, %v1264
      %v1287 = vadd.f32 %v1239, %v1266
      %v1288 = vadd.f32 %v1240, %v1269
      %v1289 = vadd.f32 %v1241, %v1271
      %v1290 = vadd.f32 %v1242, %v1274
      %v1291 = vadd.f32 %v1243, %v1276
      %v1292 = vadd.f32 %v1244, %v1279
      %v1293 = vadd.f32 %v1245, %v1281
      %s1294 = scalar_lea.vmem %s6, 10
      %v1295 = vld [vmem:[%s1294] sm:$0x3]
      %v1297 = vsel %vm911, %v1295, 0
      %1299 = vmatpush.bf16.msra.mxu0 0
      %1300 = vmatpush.bf16.msra.mxu0 0
      %1301 = vmatpush.bf16.msra.mxu0 0
      %1302 = vmatpush.bf16.msra.mxu0 0
      %1303 = vmatpush.bf16.msra.mxu0 0
      %1304 = vmatpush.bf16.msra.mxu0 0
      %1305 = vmatpush.bf16.msra.mxu0 0
      %1306 = vmatpush.bf16.msra.mxu0 %v1297
      %1307 = vmatmul.bf16.gmra.mxu0 %v1064
      %v1308 = vpop.f32.mrf.mxu0
      %v1309 = vpop.f32.mrf.mxu0
      %1310 = vmatmul.bf16.gmra.mxu0 %v1067
      %v1311 = vpop.f32.mrf.mxu0
      %v1312 = vadd.f32 0.0, %v1311
      %v1313 = vpop.f32.mrf.mxu0
      %v1314 = vadd.f32 0.0, %v1313
      %1315 = vmatmul.bf16.gmra.mxu0 %v1070
      %v1316 = vpop.f32.mrf.mxu0
      %v1317 = vadd.f32 0.0, %v1316
      %v1318 = vpop.f32.mrf.mxu0
      %v1319 = vadd.f32 0.0, %v1318
      %1320 = vmatmul.bf16.gmra.mxu0 %v1073
      %v1321 = vpop.f32.mrf.mxu0
      %v1322 = vadd.f32 0.0, %v1321
      %v1323 = vpop.f32.mrf.mxu0
      %v1324 = vadd.f32 0.0, %v1323
      %1325 = vmatmul.bf16.gmra.mxu0 %v1076
      %v1326 = vpop.f32.mrf.mxu0
      %v1327 = vadd.f32 0.0, %v1326
      %v1328 = vpop.f32.mrf.mxu0
      %v1329 = vadd.f32 0.0, %v1328
      %1330 = vmatmul.bf16.gmra.mxu0 %v1079
      %v1331 = vpop.f32.mrf.mxu0
      %v1332 = vadd.f32 0.0, %v1331
      %v1333 = vpop.f32.mrf.mxu0
      %1334 = vdwg.mxu0
      %v1344 = vrot.slane %v1312, 1
      %v1345 = vrot.slane %v1314, 1
      %v1346 = vsel %vm1129, %v1344, %v1345
      %v1347 = vrot.slane %v1317, 1
      %v1348 = vsel %vm1129, %v1345, %v1347
      %v1349 = vrot.slane %v1319, 1
      %v1350 = vsel %vm1129, %v1347, %v1349
      %v1351 = vrot.slane %v1322, 1
      %v1352 = vsel %vm1129, %v1349, %v1351
      %v1353 = vrot.slane %v1324, 1
      %v1354 = vsel %vm1129, %v1351, %v1353
      %v1355 = vrot.slane %v1327, 1
      %v1356 = vsel %vm1129, %v1353, %v1355
      %v1357 = vrot.slane %v1329, 1
      %v1358 = vsel %vm1129, %v1355, %v1357
      %v1359 = vrot.slane %v1332, 1
      %v1360 = vsel %vm1129, %v1357, %v1359
      %v1369 = vadd.f32 %v1286, %v1346
      %v1370 = vadd.f32 %v1287, %v1348
      %v1371 = vadd.f32 %v1288, %v1350
      %v1372 = vadd.f32 %v1289, %v1352
      %v1373 = vadd.f32 %v1290, %v1354
      %v1374 = vadd.f32 %v1291, %v1356
      %v1375 = vadd.f32 %v1292, %v1358
      %v1376 = vadd.f32 %v1293, %v1360
      %s1377 = scalar_lea.vmem %s6, 12
      %v1378 = vld [vmem:[%s1377] sm:$0x3]
      %v1380 = vsel %vm911, %v1378, 0
      %1382 = vmatpush.bf16.msra.mxu0 0
      %1383 = vmatpush.bf16.msra.mxu0 0
      %1384 = vmatpush.bf16.msra.mxu0 0
      %1385 = vmatpush.bf16.msra.mxu0 0
      %1386 = vmatpush.bf16.msra.mxu0 0
      %1387 = vmatpush.bf16.msra.mxu0 0
      %1388 = vmatpush.bf16.msra.mxu0 0
      %1389 = vmatpush.bf16.msra.mxu0 %v1380
      %1390 = vmatmul.bf16.gmra.mxu0 %v894
      %v1391 = vpop.f32.mrf.mxu0
      %v1392 = vpop.f32.mrf.mxu0
      %1393 = vmatmul.bf16.gmra.mxu0 %v897
      %v1394 = vpop.f32.mrf.mxu0
      %v1395 = vpop.f32.mrf.mxu0
      %v1396 = vadd.f32 0.0, %v1395
      %1397 = vmatmul.bf16.gmra.mxu0 %v900
      %v1398 = vpop.f32.mrf.mxu0
      %v1399 = vadd.f32 0.0, %v1398
      %v1400 = vpop.f32.mrf.mxu0
      %v1401 = vadd.f32 0.0, %v1400
      %1402 = vmatmul.bf16.gmra.mxu0 %v903
      %v1403 = vpop.f32.mrf.mxu0
      %v1404 = vadd.f32 0.0, %v1403
      %v1405 = vpop.f32.mrf.mxu0
      %v1406 = vadd.f32 0.0, %v1405
      %1407 = vmatmul.bf16.gmra.mxu0 %v906
      %v1408 = vpop.f32.mrf.mxu0
      %v1409 = vadd.f32 0.0, %v1408
      %v1410 = vpop.f32.mrf.mxu0
      %v1411 = vadd.f32 0.0, %v1410
      %1412 = vmatmul.bf16.gmra.mxu0 %v909
      %v1413 = vpop.f32.mrf.mxu0
      %v1414 = vadd.f32 0.0, %v1413
      %v1415 = vpop.f32.mrf.mxu0
      %v1416 = vadd.f32 0.0, %v1415
      %1417 = vdwg.mxu0
      %v1427 = vrot.slane %v1396, 7
      %v1428 = vrot.slane %v1399, 7
      %v1429 = vsel %vm962, %v1427, %v1428
      %v1430 = vrot.slane %v1401, 7
      %v1431 = vsel %vm962, %v1428, %v1430
      %v1432 = vrot.slane %v1404, 7
      %v1433 = vsel %vm962, %v1430, %v1432
      %v1434 = vrot.slane %v1406, 7
      %v1435 = vsel %vm962, %v1432, %v1434
      %v1436 = vrot.slane %v1409, 7
      %v1437 = vsel %vm962, %v1434, %v1436
      %v1438 = vrot.slane %v1411, 7
      %v1439 = vsel %vm962, %v1436, %v1438
      %v1440 = vrot.slane %v1414, 7
      %v1441 = vsel %vm962, %v1438, %v1440
      %v1442 = vrot.slane %v1416, 7
      %v1443 = vsel %vm962, %v1440, %v1442
      %v1452 = vadd.f32 %v1369, %v1429
      %v1453 = vadd.f32 %v1370, %v1431
      %v1454 = vadd.f32 %v1371, %v1433
      %v1455 = vadd.f32 %v1372, %v1435
      %v1456 = vadd.f32 %v1373, %v1437
      %v1457 = vadd.f32 %v1374, %v1439
      %v1458 = vadd.f32 %v1375, %v1441
      %v1459 = vadd.f32 %v1376, %v1443
      %s1460 = scalar_lea.vmem %s6, 14
      %v1461 = vld [vmem:[%s1460] sm:$0x3]
      %v1463 = vsel %vm911, %v1461, 0
      %1465 = vmatpush.bf16.msra.mxu0 0
      %1466 = vmatpush.bf16.msra.mxu0 0
      %1467 = vmatpush.bf16.msra.mxu0 0
      %1468 = vmatpush.bf16.msra.mxu0 0
      %1469 = vmatpush.bf16.msra.mxu0 0
      %1470 = vmatpush.bf16.msra.mxu0 0
      %1471 = vmatpush.bf16.msra.mxu0 0
      %1472 = vmatpush.bf16.msra.mxu0 %v1463
      %1473 = vmatmul.bf16.gmra.mxu0 %v998
      %v1474 = vpop.f32.mrf.mxu0
      %v1475 = vpop.f32.mrf.mxu0
      %1476 = vmatmul.bf16.gmra.mxu0 %v1001
      %v1477 = vpop.f32.mrf.mxu0
      %v1478 = vpop.f32.mrf.mxu0
      %1479 = vmatmul.bf16.gmra.mxu0 %v1004
      %v1480 = vpop.f32.mrf.mxu0
      %v1481 = vadd.f32 0.0, %v1480
      %v1482 = vpop.f32.mrf.mxu0
      %v1483 = vadd.f32 0.0, %v1482
      %1484 = vmatmul.bf16.gmra.mxu0 %v1007
      %v1485 = vpop.f32.mrf.mxu0
      %v1486 = vadd.f32 0.0, %v1485
      %v1487 = vpop.f32.mrf.mxu0
      %v1488 = vadd.f32 0.0, %v1487
      %1489 = vmatmul.bf16.gmra.mxu0 %v1010
      %v1490 = vpop.f32.mrf.mxu0
      %v1491 = vadd.f32 0.0, %v1490
      %v1492 = vpop.f32.mrf.mxu0
      %v1493 = vadd.f32 0.0, %v1492
      %1494 = vmatmul.bf16.gmra.mxu0 %v1013
      %v1495 = vpop.f32.mrf.mxu0
      %v1496 = vadd.f32 0.0, %v1495
      %v1497 = vpop.f32.mrf.mxu0
      %v1498 = vadd.f32 0.0, %v1497
      %1499 = vdwg.mxu0
      %v1500 = vadd.f32 %v1452, %v1481
      %v1501 = vadd.f32 %v1453, %v1483
      %v1502 = vadd.f32 %v1454, %v1486
      %v1503 = vadd.f32 %v1455, %v1488
      %v1504 = vadd.f32 %v1456, %v1491
      %v1505 = vadd.f32 %v1457, %v1493
      %v1506 = vadd.f32 %v1458, %v1496
      %v1507 = vadd.f32 %v1459, %v1498
      %s1508 = scalar_lea.vmem %s6, 16
      %v1509 = vld [vmem:[%s1508] sm:$0x3]
      %v1511 = vsel %vm911, %v1509, 0
      %1513 = vmatpush.bf16.msra.mxu0 0
      %1514 = vmatpush.bf16.msra.mxu0 0
      %1515 = vmatpush.bf16.msra.mxu0 0
      %1516 = vmatpush.bf16.msra.mxu0 0
      %1517 = vmatpush.bf16.msra.mxu0 0
      %1518 = vmatpush.bf16.msra.mxu0 0
      %1519 = vmatpush.bf16.msra.mxu0 0
      %1520 = vmatpush.bf16.msra.mxu0 %v1511
      %1521 = vmatmul.bf16.gmra.mxu0 %v1064
      %v1522 = vpop.f32.mrf.mxu0
      %v1523 = vadd.f32 0.0, %v1522
      %v1524 = vpop.f32.mrf.mxu0
      %1525 = vmatmul.bf16.gmra.mxu0 %v1067
      %v1526 = vpop.f32.mrf.mxu0
      %v1527 = vpop.f32.mrf.mxu0
      %1528 = vmatmul.bf16.gmra.mxu0 %v1070
      %v1529 = vpop.f32.mrf.mxu0
      %v1530 = vadd.f32 0.0, %v1529
      %v1531 = vpop.f32.mrf.mxu0
      %v1532 = vadd.f32 0.0, %v1531
      %1533 = vmatmul.bf16.gmra.mxu0 %v1073
      %v1534 = vpop.f32.mrf.mxu0
      %v1535 = vadd.f32 0.0, %v1534
      %v1536 = vpop.f32.mrf.mxu0
      %v1537 = vadd.f32 0.0, %v1536
      %1538 = vmatmul.bf16.gmra.mxu0 %v1076
      %v1539 = vpop.f32.mrf.mxu0
      %v1540 = vadd.f32 0.0, %v1539
      %v1541 = vpop.f32.mrf.mxu0
      %v1542 = vadd.f32 0.0, %v1541
      %1543 = vmatmul.bf16.gmra.mxu0 %v1079
      %v1544 = vpop.f32.mrf.mxu0
      %v1545 = vadd.f32 0.0, %v1544
      %v1546 = vpop.f32.mrf.mxu0
      %v1547 = vadd.f32 0.0, %v1546
      %1548 = vdwg.mxu0
      %v1557 = vrot.slane %v1530, 1
      %v1558 = vrot.slane %v1532, 1
      %v1559 = vsel %vm1129, %v1557, %v1558
      %v1560 = vrot.slane %v1535, 1
      %v1561 = vsel %vm1129, %v1558, %v1560
      %v1562 = vrot.slane %v1537, 1
      %v1563 = vsel %vm1129, %v1560, %v1562
      %v1564 = vrot.slane %v1540, 1
      %v1565 = vsel %vm1129, %v1562, %v1564
      %v1566 = vrot.slane %v1542, 1
      %v1567 = vsel %vm1129, %v1564, %v1566
      %v1568 = vrot.slane %v1545, 1
      %v1569 = vsel %vm1129, %v1566, %v1568
      %v1570 = vrot.slane %v1547, 1
      %v1571 = vsel %vm1129, %v1568, %v1570
      %v1581 = vrot.slane %v1523, 1
      %v1583 = vsel %vm1129, %v1570, %v1581
      %v1584 = vadd.f32 %v1500, %v1559
      %v1585 = vadd.f32 %v1501, %v1561
      %v1586 = vadd.f32 %v1502, %v1563
      %v1587 = vadd.f32 %v1503, %v1565
      %v1588 = vadd.f32 %v1504, %v1567
      %v1589 = vadd.f32 %v1505, %v1569
      %v1590 = vadd.f32 %v1506, %v1571
      %v1591 = vadd.f32 %v1507, %v1583
      %v1592 = vld [vmem:[%s7] sm:$0x3]
      %v1594 = vsel %vm892, %v878, 0
      %v1597 = vsel %vm892, %v879, 0
      %v1600 = vsel %vm892, %v880, 0
      %v1603 = vsel %vm892, %v881, 0
      %v1606 = vsel %vm892, %v882, 0
      %v1609 = vsel %vm892, %v883, 0
      %v1612 = vsel %vm911, %v1592, 0
      %1614 = vmatpush.bf16.msra.mxu0 0
      %1615 = vmatpush.bf16.msra.mxu0 0
      %1616 = vmatpush.bf16.msra.mxu0 0
      %1617 = vmatpush.bf16.msra.mxu0 0
      %1618 = vmatpush.bf16.msra.mxu0 0
      %1619 = vmatpush.bf16.msra.mxu0 0
      %1620 = vmatpush.bf16.msra.mxu0 0
      %1621 = vmatpush.bf16.msra.mxu0 %v1612
      %1622 = vmatmul.bf16.gmra.mxu0 %v1594
      %v1623 = vpop.f32.mrf.mxu0
      %v1624 = vadd.f32 0.0, %v1623
      %v1625 = vpop.f32.mrf.mxu0
      %v1626 = vadd.f32 0.0, %v1625
      %1627 = vmatmul.bf16.gmra.mxu0 %v1597
      %v1628 = vpop.f32.mrf.mxu0
      %v1629 = vadd.f32 0.0, %v1628
      %v1630 = vpop.f32.mrf.mxu0
      %v1631 = vadd.f32 0.0, %v1630
      %1632 = vmatmul.bf16.gmra.mxu0 %v1600
      %v1633 = vpop.f32.mrf.mxu0
      %v1634 = vadd.f32 0.0, %v1633
      %v1635 = vpop.f32.mrf.mxu0
      %v1636 = vadd.f32 0.0, %v1635
      %1637 = vmatmul.bf16.gmra.mxu0 %v1603
      %v1638 = vpop.f32.mrf.mxu0
      %v1639 = vadd.f32 0.0, %v1638
      %v1640 = vpop.f32.mrf.mxu0
      %v1641 = vadd.f32 0.0, %v1640
      %1642 = vmatmul.bf16.gmra.mxu0 %v1606
      %v1643 = vpop.f32.mrf.mxu0
      %v1644 = vpop.f32.mrf.mxu0
      %1645 = vmatmul.bf16.gmra.mxu0 %v1609
      %v1646 = vpop.f32.mrf.mxu0
      %v1647 = vpop.f32.mrf.mxu0
      %v1648 = vadd.f32 0.0, %v1647
      %1649 = vdwg.mxu0
      %v1651 = vrot.slane %v1648, 7
      %v1661 = vrot.slane %v1624, 7
      %v1662 = vrot.slane %v1626, 7
      %v1663 = vsel %vm962, %v1661, %v1662
      %v1664 = vrot.slane %v1629, 7
      %v1665 = vsel %vm962, %v1662, %v1664
      %v1666 = vrot.slane %v1631, 7
      %v1667 = vsel %vm962, %v1664, %v1666
      %v1668 = vrot.slane %v1634, 7
      %v1669 = vsel %vm962, %v1666, %v1668
      %v1670 = vrot.slane %v1636, 7
      %v1671 = vsel %vm962, %v1668, %v1670
      %v1672 = vrot.slane %v1639, 7
      %v1673 = vsel %vm962, %v1670, %v1672
      %v1674 = vrot.slane %v1641, 7
      %v1675 = vsel %vm962, %v1672, %v1674
      %v1684 = vsel %vm962, %v1651, %v1661
      %v1685 = vadd.f32 %v1584, %v1684
      %v1686 = vadd.f32 %v1585, %v1663
      %v1687 = vadd.f32 %v1586, %v1665
      %v1688 = vadd.f32 %v1587, %v1667
      %v1689 = vadd.f32 %v1588, %v1669
      %v1690 = vadd.f32 %v1589, %v1671
      %v1691 = vadd.f32 %v1590, %v1673
      %v1692 = vadd.f32 %v1591, %v1675
      %s1693 = scalar_lea.vmem %s7, 2
      %v1694 = vld [vmem:[%s1693] sm:$0x3]
      %v1696 = vsel %vm892, %v846, 0
      %v1699 = vsel %vm892, %v864, 0
      %v1702 = vsel %vm892, %v865, 0
      %v1705 = vsel %vm892, %v866, 0
      %v1708 = vsel %vm892, %v867, 0
      %v1711 = vsel %vm892, %v876, 0
      %v1714 = vsel %vm911, %v1694, 0
      %1716 = vmatpush.bf16.msra.mxu0 0
      %1717 = vmatpush.bf16.msra.mxu0 0
      %1718 = vmatpush.bf16.msra.mxu0 0
      %1719 = vmatpush.bf16.msra.mxu0 0
      %1720 = vmatpush.bf16.msra.mxu0 0
      %1721 = vmatpush.bf16.msra.mxu0 0
      %1722 = vmatpush.bf16.msra.mxu0 0
      %1723 = vmatpush.bf16.msra.mxu0 %v1714
      %1724 = vmatmul.bf16.gmra.mxu0 %v1696
      %v1725 = vpop.f32.mrf.mxu0
      %v1726 = vadd.f32 0.0, %v1725
      %v1727 = vpop.f32.mrf.mxu0
      %v1728 = vadd.f32 0.0, %v1727
      %1729 = vmatmul.bf16.gmra.mxu0 %v1699
      %v1730 = vpop.f32.mrf.mxu0
      %v1731 = vadd.f32 0.0, %v1730
      %v1732 = vpop.f32.mrf.mxu0
      %v1733 = vadd.f32 0.0, %v1732
      %1734 = vmatmul.bf16.gmra.mxu0 %v1702
      %v1735 = vpop.f32.mrf.mxu0
      %v1736 = vadd.f32 0.0, %v1735
      %v1737 = vpop.f32.mrf.mxu0
      %v1738 = vadd.f32 0.0, %v1737
      %1739 = vmatmul.bf16.gmra.mxu0 %v1705
      %v1740 = vpop.f32.mrf.mxu0
      %v1741 = vadd.f32 0.0, %v1740
      %v1742 = vpop.f32.mrf.mxu0
      %v1743 = vadd.f32 0.0, %v1742
      %1744 = vmatmul.bf16.gmra.mxu0 %v1708
      %v1745 = vpop.f32.mrf.mxu0
      %v1746 = vpop.f32.mrf.mxu0
      %1747 = vmatmul.bf16.gmra.mxu0 %v1711
      %v1748 = vpop.f32.mrf.mxu0
      %v1749 = vpop.f32.mrf.mxu0
      %1750 = vdwg.mxu0
      %v1751 = vadd.f32 %v1685, %v1726
      %v1752 = vadd.f32 %v1686, %v1728
      %v1753 = vadd.f32 %v1687, %v1731
      %v1754 = vadd.f32 %v1688, %v1733
      %v1755 = vadd.f32 %v1689, %v1736
      %v1756 = vadd.f32 %v1690, %v1738
      %v1757 = vadd.f32 %v1691, %v1741
      %v1758 = vadd.f32 %v1692, %v1743
      %s1759 = scalar_lea.vmem %s7, 4
      %v1760 = vld [vmem:[%s1759] sm:$0x3]
      %v1762 = vsel %vm892, %v884, 0
      %v1765 = vsel %vm892, %v885, 0
      %v1768 = vsel %vm892, %v886, 0
      %v1771 = vsel %vm892, %v887, 0
      %v1774 = vsel %vm892, %v888, 0
      %v1777 = vsel %vm892, %v889, 0
      %v1780 = vsel %vm911, %v1760, 0
      %1782 = vmatpush.bf16.msra.mxu0 0
      %1783 = vmatpush.bf16.msra.mxu0 0
      %1784 = vmatpush.bf16.msra.mxu0 0
      %1785 = vmatpush.bf16.msra.mxu0 0
      %1786 = vmatpush.bf16.msra.mxu0 0
      %1787 = vmatpush.bf16.msra.mxu0 0
      %1788 = vmatpush.bf16.msra.mxu0 0
      %1789 = vmatpush.bf16.msra.mxu0 %v1780
      %1790 = vmatmul.bf16.gmra.mxu0 %v1762
      %v1791 = vpop.f32.mrf.mxu0
      %v1792 = vadd.f32 0.0, %v1791
      %v1793 = vpop.f32.mrf.mxu0
      %v1794 = vadd.f32 0.0, %v1793
      %1795 = vmatmul.bf16.gmra.mxu0 %v1765
      %v1796 = vpop.f32.mrf.mxu0
      %v1797 = vadd.f32 0.0, %v1796
      %v1798 = vpop.f32.mrf.mxu0
      %v1799 = vadd.f32 0.0, %v1798
      %1800 = vmatmul.bf16.gmra.mxu0 %v1768
      %v1801 = vpop.f32.mrf.mxu0
      %v1802 = vadd.f32 0.0, %v1801
      %v1803 = vpop.f32.mrf.mxu0
      %v1804 = vadd.f32 0.0, %v1803
      %1805 = vmatmul.bf16.gmra.mxu0 %v1771
      %v1806 = vpop.f32.mrf.mxu0
      %v1807 = vadd.f32 0.0, %v1806
      %v1808 = vpop.f32.mrf.mxu0
      %v1809 = vadd.f32 0.0, %v1808
      %1810 = vmatmul.bf16.gmra.mxu0 %v1774
      %v1811 = vpop.f32.mrf.mxu0
      %v1812 = vadd.f32 0.0, %v1811
      %v1813 = vpop.f32.mrf.mxu0
      %1814 = vmatmul.bf16.gmra.mxu0 %v1777
      %v1815 = vpop.f32.mrf.mxu0
      %v1816 = vpop.f32.mrf.mxu0
      %1817 = vdwg.mxu0
      %v1827 = vrot.slane %v1792, 1
      %v1828 = vrot.slane %v1794, 1
      %v1829 = vsel %vm1129, %v1827, %v1828
      %v1830 = vrot.slane %v1797, 1
      %v1831 = vsel %vm1129, %v1828, %v1830
      %v1832 = vrot.slane %v1799, 1
      %v1833 = vsel %vm1129, %v1830, %v1832
      %v1834 = vrot.slane %v1802, 1
      %v1835 = vsel %vm1129, %v1832, %v1834
      %v1836 = vrot.slane %v1804, 1
      %v1837 = vsel %vm1129, %v1834, %v1836
      %v1838 = vrot.slane %v1807, 1
      %v1839 = vsel %vm1129, %v1836, %v1838
      %v1840 = vrot.slane %v1809, 1
      %v1841 = vsel %vm1129, %v1838, %v1840
      %v1842 = vrot.slane %v1812, 1
      %v1843 = vsel %vm1129, %v1840, %v1842
      %v1852 = vadd.f32 %v1751, %v1829
      %v1853 = vadd.f32 %v1752, %v1831
      %v1854 = vadd.f32 %v1753, %v1833
      %v1855 = vadd.f32 %v1754, %v1835
      %v1856 = vadd.f32 %v1755, %v1837
      %v1857 = vadd.f32 %v1756, %v1839
      %v1858 = vadd.f32 %v1757, %v1841
      %v1859 = vadd.f32 %v1758, %v1843
      %s1860 = scalar_lea.vmem %s7, 6
      %v1861 = vld [vmem:[%s1860] sm:$0x3]
      %v1863 = vsel %vm911, %v1861, 0
      %1865 = vmatpush.bf16.msra.mxu0 0
      %1866 = vmatpush.bf16.msra.mxu0 0
      %1867 = vmatpush.bf16.msra.mxu0 0
      %1868 = vmatpush.bf16.msra.mxu0 0
      %1869 = vmatpush.bf16.msra.mxu0 0
      %1870 = vmatpush.bf16.msra.mxu0 0
      %1871 = vmatpush.bf16.msra.mxu0 0
      %1872 = vmatpush.bf16.msra.mxu0 %v1863
      %1873 = vmatmul.bf16.gmra.mxu0 %v1594
      %v1874 = vpop.f32.mrf.mxu0
      %v1875 = vpop.f32.mrf.mxu0
      %v1876 = vadd.f32 0.0, %v1875
      %1877 = vmatmul.bf16.gmra.mxu0 %v1597
      %v1878 = vpop.f32.mrf.mxu0
      %v1879 = vadd.f32 0.0, %v1878
      %v1880 = vpop.f32.mrf.mxu0
      %v1881 = vadd.f32 0.0, %v1880
      %1882 = vmatmul.bf16.gmra.mxu0 %v1600
      %v1883 = vpop.f32.mrf.mxu0
      %v1884 = vadd.f32 0.0, %v1883
      %v1885 = vpop.f32.mrf.mxu0
      %v1886 = vadd.f32 0.0, %v1885
      %1887 = vmatmul.bf16.gmra.mxu0 %v1603
      %v1888 = vpop.f32.mrf.mxu0
      %v1889 = vadd.f32 0.0, %v1888
      %v1890 = vpop.f32.mrf.mxu0
      %v1891 = vadd.f32 0.0, %v1890
      %1892 = vmatmul.bf16.gmra.mxu0 %v1606
      %v1893 = vpop.f32.mrf.mxu0
      %v1894 = vadd.f32 0.0, %v1893
      %v1895 = vpop.f32.mrf.mxu0
      %v1896 = vadd.f32 0.0, %v1895
      %1897 = vmatmul.bf16.gmra.mxu0 %v1609
      %v1898 = vpop.f32.mrf.mxu0
      %v1899 = vpop.f32.mrf.mxu0
      %1900 = vdwg.mxu0
      %v1910 = vrot.slane %v1876, 7
      %v1911 = vrot.slane %v1879, 7
      %v1912 = vsel %vm962, %v1910, %v1911
      %v1913 = vrot.slane %v1881, 7
      %v1914 = vsel %vm962, %v1911, %v1913
      %v1915 = vrot.slane %v1884, 7
      %v1916 = vsel %vm962, %v1913, %v1915
      %v1917 = vrot.slane %v1886, 7
      %v1918 = vsel %vm962, %v1915, %v1917
      %v1919 = vrot.slane %v1889, 7
      %v1920 = vsel %vm962, %v1917, %v1919
      %v1921 = vrot.slane %v1891, 7
      %v1922 = vsel %vm962, %v1919, %v1921
      %v1923 = vrot.slane %v1894, 7
      %v1924 = vsel %vm962, %v1921, %v1923
      %v1925 = vrot.slane %v1896, 7
      %v1926 = vsel %vm962, %v1923, %v1925
      %v1935 = vadd.f32 %v1852, %v1912
      %v1936 = vadd.f32 %v1853, %v1914
      %v1937 = vadd.f32 %v1854, %v1916
      %v1938 = vadd.f32 %v1855, %v1918
      %v1939 = vadd.f32 %v1856, %v1920
      %v1940 = vadd.f32 %v1857, %v1922
      %v1941 = vadd.f32 %v1858, %v1924
      %v1942 = vadd.f32 %v1859, %v1926
      %s1943 = scalar_lea.vmem %s7, 8
      %v1944 = vld [vmem:[%s1943] sm:$0x3]
      %v1946 = vsel %vm911, %v1944, 0
      %1948 = vmatpush.bf16.msra.mxu0 0
      %1949 = vmatpush.bf16.msra.mxu0 0
      %1950 = vmatpush.bf16.msra.mxu0 0
      %1951 = vmatpush.bf16.msra.mxu0 0
      %1952 = vmatpush.bf16.msra.mxu0 0
      %1953 = vmatpush.bf16.msra.mxu0 0
      %1954 = vmatpush.bf16.msra.mxu0 0
      %1955 = vmatpush.bf16.msra.mxu0 %v1946
      %1956 = vmatmul.bf16.gmra.mxu0 %v1696
      %v1957 = vpop.f32.mrf.mxu0
      %v1958 = vpop.f32.mrf.mxu0
      %1959 = vmatmul.bf16.gmra.mxu0 %v1699
      %v1960 = vpop.f32.mrf.mxu0
      %v1961 = vadd.f32 0.0, %v1960
      %v1962 = vpop.f32.mrf.mxu0
      %v1963 = vadd.f32 0.0, %v1962
      %1964 = vmatmul.bf16.gmra.mxu0 %v1702
      %v1965 = vpop.f32.mrf.mxu0
      %v1966 = vadd.f32 0.0, %v1965
      %v1967 = vpop.f32.mrf.mxu0
      %v1968 = vadd.f32 0.0, %v1967
      %1969 = vmatmul.bf16.gmra.mxu0 %v1705
      %v1970 = vpop.f32.mrf.mxu0
      %v1971 = vadd.f32 0.0, %v1970
      %v1972 = vpop.f32.mrf.mxu0
      %v1973 = vadd.f32 0.0, %v1972
      %1974 = vmatmul.bf16.gmra.mxu0 %v1708
      %v1975 = vpop.f32.mrf.mxu0
      %v1976 = vadd.f32 0.0, %v1975
      %v1977 = vpop.f32.mrf.mxu0
      %v1978 = vadd.f32 0.0, %v1977
      %1979 = vmatmul.bf16.gmra.mxu0 %v1711
      %v1980 = vpop.f32.mrf.mxu0
      %v1981 = vpop.f32.mrf.mxu0
      %1982 = vdwg.mxu0
      %v1983 = vadd.f32 %v1935, %v1961
      %v1984 = vadd.f32 %v1936, %v1963
      %v1985 = vadd.f32 %v1937, %v1966
      %v1986 = vadd.f32 %v1938, %v1968
      %v1987 = vadd.f32 %v1939, %v1971
      %v1988 = vadd.f32 %v1940, %v1973
      %v1989 = vadd.f32 %v1941, %v1976
      %v1990 = vadd.f32 %v1942, %v1978
      %s1991 = scalar_lea.vmem %s7, 10
      %v1992 = vld [vmem:[%s1991] sm:$0x3]
      %v1994 = vsel %vm911, %v1992, 0
      %1996 = vmatpush.bf16.msra.mxu0 0
      %1997 = vmatpush.bf16.msra.mxu0 0
      %1998 = vmatpush.bf16.msra.mxu0 0
      %1999 = vmatpush.bf16.msra.mxu0 0
      %2000 = vmatpush.bf16.msra.mxu0 0
      %2001 = vmatpush.bf16.msra.mxu0 0
      %2002 = vmatpush.bf16.msra.mxu0 0
      %2003 = vmatpush.bf16.msra.mxu0 %v1994
      %2004 = vmatmul.bf16.gmra.mxu0 %v1762
      %v2005 = vpop.f32.mrf.mxu0
      %v2006 = vpop.f32.mrf.mxu0
      %2007 = vmatmul.bf16.gmra.mxu0 %v1765
      %v2008 = vpop.f32.mrf.mxu0
      %v2009 = vadd.f32 0.0, %v2008
      %v2010 = vpop.f32.mrf.mxu0
      %v2011 = vadd.f32 0.0, %v2010
      %2012 = vmatmul.bf16.gmra.mxu0 %v1768
      %v2013 = vpop.f32.mrf.mxu0
      %v2014 = vadd.f32 0.0, %v2013
      %v2015 = vpop.f32.mrf.mxu0
      %v2016 = vadd.f32 0.0, %v2015
      %2017 = vmatmul.bf16.gmra.mxu0 %v1771
      %v2018 = vpop.f32.mrf.mxu0
      %v2019 = vadd.f32 0.0, %v2018
      %v2020 = vpop.f32.mrf.mxu0
      %v2021 = vadd.f32 0.0, %v2020
      %2022 = vmatmul.bf16.gmra.mxu0 %v1774
      %v2023 = vpop.f32.mrf.mxu0
      %v2024 = vadd.f32 0.0, %v2023
      %v2025 = vpop.f32.mrf.mxu0
      %v2026 = vadd.f32 0.0, %v2025
      %2027 = vmatmul.bf16.gmra.mxu0 %v1777
      %v2028 = vpop.f32.mrf.mxu0
      %v2029 = vadd.f32 0.0, %v2028
      %v2030 = vpop.f32.mrf.mxu0
      %2031 = vdwg.mxu0
      %v2041 = vrot.slane %v2009, 1
      %v2042 = vrot.slane %v2011, 1
      %v2043 = vsel %vm1129, %v2041, %v2042
      %v2044 = vrot.slane %v2014, 1
      %v2045 = vsel %vm1129, %v2042, %v2044
      %v2046 = vrot.slane %v2016, 1
      %v2047 = vsel %vm1129, %v2044, %v2046
      %v2048 = vrot.slane %v2019, 1
      %v2049 = vsel %vm1129, %v2046, %v2048
      %v2050 = vrot.slane %v2021, 1
      %v2051 = vsel %vm1129, %v2048, %v2050
      %v2052 = vrot.slane %v2024, 1
      %v2053 = vsel %vm1129, %v2050, %v2052
      %v2054 = vrot.slane %v2026, 1
      %v2055 = vsel %vm1129, %v2052, %v2054
      %v2056 = vrot.slane %v2029, 1
      %v2057 = vsel %vm1129, %v2054, %v2056
      %v2066 = vadd.f32 %v1983, %v2043
      %v2067 = vadd.f32 %v1984, %v2045
      %v2068 = vadd.f32 %v1985, %v2047
      %v2069 = vadd.f32 %v1986, %v2049
      %v2070 = vadd.f32 %v1987, %v2051
      %v2071 = vadd.f32 %v1988, %v2053
      %v2072 = vadd.f32 %v1989, %v2055
      %v2073 = vadd.f32 %v1990, %v2057
      %s2074 = scalar_lea.vmem %s7, 12
      %v2075 = vld [vmem:[%s2074] sm:$0x3]
      %v2077 = vsel %vm911, %v2075, 0
      %2079 = vmatpush.bf16.msra.mxu0 0
      %2080 = vmatpush.bf16.msra.mxu0 0
      %2081 = vmatpush.bf16.msra.mxu0 0
      %2082 = vmatpush.bf16.msra.mxu0 0
      %2083 = vmatpush.bf16.msra.mxu0 0
      %2084 = vmatpush.bf16.msra.mxu0 0
      %2085 = vmatpush.bf16.msra.mxu0 0
      %2086 = vmatpush.bf16.msra.mxu0 %v2077
      %2087 = vmatmul.bf16.gmra.mxu0 %v1594
      %v2088 = vpop.f32.mrf.mxu0
      %v2089 = vpop.f32.mrf.mxu0
      %2090 = vmatmul.bf16.gmra.mxu0 %v1597
      %v2091 = vpop.f32.mrf.mxu0
      %v2092 = vpop.f32.mrf.mxu0
      %v2093 = vadd.f32 0.0, %v2092
      %2094 = vmatmul.bf16.gmra.mxu0 %v1600
      %v2095 = vpop.f32.mrf.mxu0
      %v2096 = vadd.f32 0.0, %v2095
      %v2097 = vpop.f32.mrf.mxu0
      %v2098 = vadd.f32 0.0, %v2097
      %2099 = vmatmul.bf16.gmra.mxu0 %v1603
      %v2100 = vpop.f32.mrf.mxu0
      %v2101 = vadd.f32 0.0, %v2100
      %v2102 = vpop.f32.mrf.mxu0
      %v2103 = vadd.f32 0.0, %v2102
      %2104 = vmatmul.bf16.gmra.mxu0 %v1606
      %v2105 = vpop.f32.mrf.mxu0
      %v2106 = vadd.f32 0.0, %v2105
      %v2107 = vpop.f32.mrf.mxu0
      %v2108 = vadd.f32 0.0, %v2107
      %2109 = vmatmul.bf16.gmra.mxu0 %v1609
      %v2110 = vpop.f32.mrf.mxu0
      %v2111 = vadd.f32 0.0, %v2110
      %v2112 = vpop.f32.mrf.mxu0
      %v2113 = vadd.f32 0.0, %v2112
      %2114 = vdwg.mxu0
      %v2124 = vrot.slane %v2093, 7
      %v2125 = vrot.slane %v2096, 7
      %v2126 = vsel %vm962, %v2124, %v2125
      %v2127 = vrot.slane %v2098, 7
      %v2128 = vsel %vm962, %v2125, %v2127
      %v2129 = vrot.slane %v2101, 7
      %v2130 = vsel %vm962, %v2127, %v2129
      %v2131 = vrot.slane %v2103, 7
      %v2132 = vsel %vm962, %v2129, %v2131
      %v2133 = vrot.slane %v2106, 7
      %v2134 = vsel %vm962, %v2131, %v2133
      %v2135 = vrot.slane %v2108, 7
      %v2136 = vsel %vm962, %v2133, %v2135
      %v2137 = vrot.slane %v2111, 7
      %v2138 = vsel %vm962, %v2135, %v2137
      %v2139 = vrot.slane %v2113, 7
      %v2140 = vsel %vm962, %v2137, %v2139
      %v2149 = vadd.f32 %v2066, %v2126
      %v2150 = vadd.f32 %v2067, %v2128
      %v2151 = vadd.f32 %v2068, %v2130
      %v2152 = vadd.f32 %v2069, %v2132
      %v2153 = vadd.f32 %v2070, %v2134
      %v2154 = vadd.f32 %v2071, %v2136
      %v2155 = vadd.f32 %v2072, %v2138
      %v2156 = vadd.f32 %v2073, %v2140
      %s2157 = scalar_lea.vmem %s7, 14
      %v2158 = vld [vmem:[%s2157] sm:$0x3]
      %v2160 = vsel %vm911, %v2158, 0
      %2162 = vmatpush.bf16.msra.mxu0 0
      %2163 = vmatpush.bf16.msra.mxu0 0
      %2164 = vmatpush.bf16.msra.mxu0 0
      %2165 = vmatpush.bf16.msra.mxu0 0
      %2166 = vmatpush.bf16.msra.mxu0 0
      %2167 = vmatpush.bf16.msra.mxu0 0
      %2168 = vmatpush.bf16.msra.mxu0 0
      %2169 = vmatpush.bf16.msra.mxu0 %v2160
      %2170 = vmatmul.bf16.gmra.mxu0 %v1696
      %v2171 = vpop.f32.mrf.mxu0
      %v2172 = vpop.f32.mrf.mxu0
      %2173 = vmatmul.bf16.gmra.mxu0 %v1699
      %v2174 = vpop.f32.mrf.mxu0
      %v2175 = vpop.f32.mrf.mxu0
      %2176 = vmatmul.bf16.gmra.mxu0 %v1702
      %v2177 = vpop.f32.mrf.mxu0
      %v2178 = vadd.f32 0.0, %v2177
      %v2179 = vpop.f32.mrf.mxu0
      %v2180 = vadd.f32 0.0, %v2179
      %2181 = vmatmul.bf16.gmra.mxu0 %v1705
      %v2182 = vpop.f32.mrf.mxu0
      %v2183 = vadd.f32 0.0, %v2182
      %v2184 = vpop.f32.mrf.mxu0
      %v2185 = vadd.f32 0.0, %v2184
      %2186 = vmatmul.bf16.gmra.mxu0 %v1708
      %v2187 = vpop.f32.mrf.mxu0
      %v2188 = vadd.f32 0.0, %v2187
      %v2189 = vpop.f32.mrf.mxu0
      %v2190 = vadd.f32 0.0, %v2189
      %2191 = vmatmul.bf16.gmra.mxu0 %v1711
      %v2192 = vpop.f32.mrf.mxu0
      %v2193 = vadd.f32 0.0, %v2192
      %v2194 = vpop.f32.mrf.mxu0
      %v2195 = vadd.f32 0.0, %v2194
      %2196 = vdwg.mxu0
      %v2197 = vadd.f32 %v2149, %v2178
      %v2198 = vadd.f32 %v2150, %v2180
      %v2199 = vadd.f32 %v2151, %v2183
      %v2200 = vadd.f32 %v2152, %v2185
      %v2201 = vadd.f32 %v2153, %v2188
      %v2202 = vadd.f32 %v2154, %v2190
      %v2203 = vadd.f32 %v2155, %v2193
      %v2204 = vadd.f32 %v2156, %v2195
      %s2205 = scalar_lea.vmem %s7, 16
      %v2206 = vld [vmem:[%s2205] sm:$0x3]
      %v2208 = vsel %vm911, %v2206, 0
      %2210 = vmatpush.bf16.msra.mxu0 0
      %2211 = vmatpush.bf16.msra.mxu0 0
      %2212 = vmatpush.bf16.msra.mxu0 0
      %2213 = vmatpush.bf16.msra.mxu0 0
      %2214 = vmatpush.bf16.msra.mxu0 0
      %2215 = vmatpush.bf16.msra.mxu0 0
      %2216 = vmatpush.bf16.msra.mxu0 0
      %2217 = vmatpush.bf16.msra.mxu0 %v2208
      %2218 = vmatmul.bf16.gmra.mxu0 %v1762
      %v2219 = vpop.f32.mrf.mxu0
      %v2220 = vadd.f32 0.0, %v2219
      %v2221 = vpop.f32.mrf.mxu0
      %2222 = vmatmul.bf16.gmra.mxu0 %v1765
      %v2223 = vpop.f32.mrf.mxu0
      %v2224 = vpop.f32.mrf.mxu0
      %2225 = vmatmul.bf16.gmra.mxu0 %v1768
      %v2226 = vpop.f32.mrf.mxu0
      %v2227 = vadd.f32 0.0, %v2226
      %v2228 = vpop.f32.mrf.mxu0
      %v2229 = vadd.f32 0.0, %v2228
      %2230 = vmatmul.bf16.gmra.mxu0 %v1771
      %v2231 = vpop.f32.mrf.mxu0
      %v2232 = vadd.f32 0.0, %v2231
      %v2233 = vpop.f32.mrf.mxu0
      %v2234 = vadd.f32 0.0, %v2233
      %2235 = vmatmul.bf16.gmra.mxu0 %v1774
      %v2236 = vpop.f32.mrf.mxu0
      %v2237 = vadd.f32 0.0, %v2236
      %v2238 = vpop.f32.mrf.mxu0
      %v2239 = vadd.f32 0.0, %v2238
      %2240 = vmatmul.bf16.gmra.mxu0 %v1777
      %v2241 = vpop.f32.mrf.mxu0
      %v2242 = vadd.f32 0.0, %v2241
      %v2243 = vpop.f32.mrf.mxu0
      %v2244 = vadd.f32 0.0, %v2243
      %2245 = vdwg.mxu0
      %v2254 = vrot.slane %v2227, 1
      %v2255 = vrot.slane %v2229, 1
      %v2256 = vsel %vm1129, %v2254, %v2255
      %v2257 = vrot.slane %v2232, 1
      %v2258 = vsel %vm1129, %v2255, %v2257
      %v2259 = vrot.slane %v2234, 1
      %v2260 = vsel %vm1129, %v2257, %v2259
      %v2261 = vrot.slane %v2237, 1
      %v2262 = vsel %vm1129, %v2259, %v2261
      %v2263 = vrot.slane %v2239, 1
      %v2264 = vsel %vm1129, %v2261, %v2263
      %v2265 = vrot.slane %v2242, 1
      %v2266 = vsel %vm1129, %v2263, %v2265
      %v2267 = vrot.slane %v2244, 1
      %v2268 = vsel %vm1129, %v2265, %v2267
      %v2278 = vrot.slane %v2220, 1
      %v2280 = vsel %vm1129, %v2267, %v2278
      %v2281 = vadd.f32 %v2197, %v2256
      %v2282 = vadd.f32 %v2198, %v2258
      %v2283 = vadd.f32 %v2199, %v2260
      %v2284 = vadd.f32 %v2200, %v2262
      %v2285 = vadd.f32 %v2201, %v2264
      %v2286 = vadd.f32 %v2202, %v2266
      %v2287 = vadd.f32 %v2203, %v2268
      %v2288 = vadd.f32 %v2204, %v2280
      %v2290 = vperm.slane %v890, 0
      %v2292 = vadd.f32 %v2281, %v2290
      %v2293 = vadd.f32 %v2282, %v2290
      %v2294 = vadd.f32 %v2283, %v2290
      %v2295 = vadd.f32 %v2284, %v2290
      %v2296 = vadd.f32 %v2285, %v2290
      %v2297 = vadd.f32 %v2286, %v2290
      %v2298 = vadd.f32 %v2287, %v2290
      %v2299 = vadd.f32 %v2288, %v2290
      %v2300 = vmax.f32 %v2292, 0.0
      %v2301 = vmax.f32 %v2293, 0.0
      %v2302 = vmax.f32 %v2294, 0.0
      %v2303 = vmax.f32 %v2295, 0.0
      %v2304 = vmax.f32 %v2296, 0.0
      %v2305 = vmax.f32 %v2297, 0.0
      %v2306 = vmax.f32 %v2298, 0.0
      %v2307 = vmax.f32 %v2299, 0.0
      %v2308 = vpack.c.bf16 %v2300, %v2300
      %v2309 = vpack.c.bf16 %v2301, %v2301
      %v2310 = vpack.c.bf16 %v2302, %v2302
      %v2311 = vpack.c.bf16 %v2303, %v2303
      %v2312 = vpack.c.bf16 %v2304, %v2304
      %v2313 = vpack.c.bf16 %v2305, %v2305
      %v2314 = vpack.c.bf16 %v2306, %v2306
      %v2315 = vpack.c.bf16 %v2307, %v2307
      %vm2316 = vcmask 27648
      %2317 = vst.msk [vmem:[%s662] sm:$0xf] %vm2316, %v2308
      %2318 = vst.msk [vmem:[%s662 + $0x4] sm:$0xf] %vm2316, %v2309
      %2319 = vst.msk [vmem:[%s662 + $0x8] sm:$0xf] %vm2316, %v2310
      %2320 = vst.msk [vmem:[%s662 + $0xc] sm:$0xf] %vm2316, %v2311
      %2321 = vst.msk [vmem:[%s662 + $0x10] sm:$0xf] %vm2316, %v2312
      %2322 = vst.msk [vmem:[%s662 + $0x14] sm:$0xf] %vm2316, %v2313
      %2323 = vst.msk [vmem:[%s662 + $0x18] sm:$0xf] %vm2316, %v2314
      %2324 = vst.msk [vmem:[%s662 + $0x1c] sm:$0xf] %vm2316, %v2315
      %s2325 = smul.u32 4, %s25
      %p2326 = scmp.lt.s32.totalorder %s24, 1
      %s2327 = scalar_select %p2326, %s24, 1
      %p2328 = scmp.lt.s32.totalorder %s2325, 15
      %s2329 = scalar_select %p2328, %s2325, 15
      %s2330 = smul.addr %s2329, 2
      %s2331 = smul.addr %s2327, 32
      %s2332 = sadd.s32 %s2330, %s2331
      %s2333 = smul.addr %s2332, 4
      %s2334 = scalar_lea.vmem %s9, %s2333
      // Predicated region
      $region57: #{decoder_block_forward_nchw.4} parent=55 // pred_check
        %p2335 = pneg %p315
      $region58: #{decoder_block_forward_nchw.4} parent=55 // pred_check_branch
        %2337 = sbr.rel (%p2335) target = $region60
      $region59: #{decoder_block_forward_nchw.4} parent=55 // pred_region
        %s2338 = smul.u32 4, %s25
      $region60: #{decoder_block_forward_nchw.4} parent=55 // pred_fallthru
        _
    $region56: #{decoder_block_forward_nchw.4} parent=5 // pred_fallthru
      _
    %p2339 = scmp.le.s32.totalorder 2, %s15
    // Predicated region
    $region61: #{decoder_block_forward_nchw.4} parent=5 // pred_check
      %p2340 = pneg %p2339
    $region62: #{decoder_block_forward_nchw.4} parent=5 // pred_check_branch
      %2342 = sbr.rel (%p2340) target = $region64
    $region63: #{decoder_block_forward_nchw.4} parent=5 // pred_region
      %s2343 = ssub.s32 %s15, 2
      // Predicated region
      $region65: #{decoder_block_forward_nchw.4} parent=63 // pred_check
        %p2344 = pneg %p321
      $region66: #{decoder_block_forward_nchw.4} parent=63 // pred_check_branch
        %2346 = sbr.rel (%p2344) target = $region68
      $region67: #{decoder_block_forward_nchw.4} parent=63 // pred_region
        %s2347 = smul.u32 4, %s27
        %p2348 = scmp.lt.s32.totalorder %s26, 1
        %s2349 = scalar_select %p2348, %s26, 1
        %p2350 = scmp.lt.s32.totalorder %s2347, 15
        %s2351 = scalar_select %p2350, %s2347, 15
        %s2352 = smul.addr %s2351, 2
        %s2353 = smul.addr %s2349, 32
        %s2354 = sadd.s32 %s2352, %s2353
        %s2355 = smul.addr %s2354, 4
        %s2356 = scalar_lea.vmem %s9, %s2355
      $region68: #{decoder_block_forward_nchw.4} parent=63 // pred_fallthru
        _
    $region64: #{decoder_block_forward_nchw.4} parent=5 // pred_fallthru
      _
  $region6: #{decoder_block_forward_nchw.4} parent=0 // loop_footer
    %s19 = sadd.s32 1, %s15
  $region7: #{decoder_block_forward_nchw.4} parent=0 // loop_footer_branch
    %14 = sbr.rel target = $region3
  $region8: #{decoder_block_forward_nchw.4} parent=0 // loop_exit
    _

</llo_original>
